<compile_context>
chip_gen: v7x
topology: tpu7x:2x2x1
jax: 0.10.0
libtpu: 0.0.40
codegen_flags: <defaults>
</compile_context>

<pallas_src>
import functools
import math

import jax
import jax.numpy as jnp
from jax import lax
from jax.experimental import pallas as pl
from jax.experimental.pallas import tpu as pltpu


_VMEM = pl.BlockSpec(memory_space=pltpu.MemorySpace.VMEM)
_BN_EPS = 1e-5
_LANES = 128


# ---------------------------------------------------------------------------
# Fused kernel: GRU input projection + conv1/BN/ReLU + conv2/BN/ReLU + GRU recurrence
# ---------------------------------------------------------------------------

def _fused_kernel(x_de_ref, w1_ref, w2_ref, b2_ref,
                  xraw_ref, wih_ref, bih_ref, whh_ref, bhh_ref,
                  conv_out_ref, gru_out_ref,
                  y1_scr, xg_scr,
                  *, batch, block_rows, lout1, lout2, pairs_per_group):
    """Layouts:
      x_de_ref : (batch*2*block_rows, 128) conv1 im2col rows. Per batch: the 73 even-
                 timestep rows (8-row padded to block_rows=80), then the 73 odd rows
                 (padded).  Cols: 90 patch values, col 90 = 1.0 (bias), rest 0.
      w1_ref   : (128, 128) conv1 weight (90,64) with bias as row 90, zero padded.
      w2_ref   : (3, 128, 128) per-tap conv2 weight (Cin 64 padded to 128).
      b2_ref   : (1, 128) conv2 bias.
      xraw_ref : (T*batch, 128) GRU inputs, row = t*batch + b, 18 real cols zero padded.
      wih_ref  : (128, 3*128) gate-column-padded W_ih^T.   bih_ref/bhh_ref: (1, 3*128).
      whh_ref  : (64, 3*128)  gate-column-padded W_hh^T (K kept at 64, no row padding).
      conv_out_ref : (batch*lout2, 128) conv path output (row = b*lout2 + t).
      gru_out_ref  : (n_pairs*batch, 128) pair-summed GRU output (row = p*batch + b).
      y1_scr   : (batch*2*block_rows, 128) conv1 activation scratch (never leaves chip).
      xg_scr   : (T*batch, 3*128) projected GRU inputs scratch.
    """
    hp = gru_out_ref.shape[1]            # 128 : gate lane padding
    hreal = whh_ref.shape[0]             # 64  : true hidden size / recurrence contraction
    n_pairs = gru_out_ref.shape[0] // batch

    # ---- 1. GRU input projection for ALL timesteps, hoisted out of the recurrence.
    #         Chunked writes keep vreg live ranges bounded.
    bih = bih_ref[...]
    xrows = xg_scr.shape[0]
    for r0 in range(0, xrows, 96):
        rlen = min(96, xrows - r0)
        xg_scr[r0:r0 + rlen, :] = (
            jnp.dot(xraw_ref[r0:r0 + rlen, :], wih_ref[...],
                    preferred_element_type=jnp.float32) + bih)

    # ---- 2. conv1 as blockwise MXU matmuls + streamed train-mode BatchNorm + ReLU.
    #         Pad rows of x_de are all-zero (bias lives in the ones column), so they
    #         contribute 0 to the sums and the batch statistics stay exact.
    n1 = batch * lout1
    s1 = jnp.zeros((1, _LANES), jnp.float32)
    q1 = jnp.zeros((1, _LANES), jnp.float32)
    for c in range(2 * batch):
        blk = jnp.dot(x_de_ref[c * block_rows:(c + 1) * block_rows, :], w1_ref[...],
                      preferred_element_type=jnp.float32)
        y1_scr[c * block_rows:(c + 1) * block_rows, :] = blk
        s1 = s1 + jnp.sum(blk, axis=0, keepdims=True)
        q1 = q1 + jnp.sum(blk * blk, axis=0, keepdims=True)
    m1 = s1 / n1
    inv1 = lax.rsqrt(q1 / n1 - m1 * m1 + _BN_EPS)       # biased var (PyTorch training BN)
    for c in range(2 * batch):
        blk = y1_scr[c * block_rows:(c + 1) * block_rows, :]
        y1_scr[c * block_rows:(c + 1) * block_rows, :] = jnp.maximum((blk - m1) * inv1, 0.0)

    # ---- 3. conv2 (k=3, stride 2) + streamed BN2 + ReLU.
    #         y2[t] = y1[2t]·W0 + y1[2t+1]·W1 + y1[2t+2]·W2 + b2 ; the de-interleaved,
    #         8-aligned even/odd blocks make taps 0/1 aligned views; tap 2 is the aligned
    #         even block shifted by one row (value slice -> XLU sublane shift).
    n2 = batch * lout2
    s2 = jnp.zeros((1, _LANES), jnp.float32)
    q2 = jnp.zeros((1, _LANES), jnp.float32)
    b2 = b2_ref[...]
    for b in range(batch):               # TODO(synk): could be one (B*72,384)@(384,128) matmul
        base = b * 2 * block_rows
        even_blk = y1_scr[base:base + block_rows, :]                  # (80,128) aligned
        odd_blk = y1_scr[base + block_rows:base + 2 * block_rows, :]  # (80,128) aligned
        acc = jnp.dot(even_blk[0:lout2, :], w2_ref[0], preferred_element_type=jnp.float32)
        acc = acc + jnp.dot(odd_blk[0:lout2, :], w2_ref[1], preferred_element_type=jnp.float32)
        acc = acc + jnp.dot(even_blk[1:1 + lout2, :], w2_ref[2],
                            preferred_element_type=jnp.float32)
        acc = acc + b2
        conv_out_ref[b * lout2:(b + 1) * lout2, :] = acc
        s2 = s2 + jnp.sum(acc, axis=0, keepdims=True)
        q2 = q2 + jnp.sum(acc * acc, axis=0, keepdims=True)
    m2 = s2 / n2
    inv2 = lax.rsqrt(q2 / n2 - m2 * m2 + _BN_EPS)
    for b in range(batch):
        blk = conv_out_ref[b * lout2:(b + 1) * lout2, :]
        conv_out_ref[b * lout2:(b + 1) * lout2, :] = jnp.maximum((blk - m2) * inv2, 0.0)

    # ---- 4. GRU recurrence (PyTorch gate order r,z,n; h0 = 0) with fused pair-sum.
    bhh = bhh_ref[...]

    def gru_step(xg_t, h):
        # K=64 recurrence matmul: only the real hidden lanes feed the MXU.
        hg = jnp.dot(h[:, :hreal], whh_ref[...], preferred_element_type=jnp.float32) + bhh
        r = jax.nn.sigmoid(xg_t[:, 0:hp] + hg[:, 0:hp])
        z = jax.nn.sigmoid(xg_t[:, hp:2 * hp] + hg[:, hp:2 * hp])
        n = jnp.tanh(xg_t[:, 2 * hp:3 * hp] + r * hg[:, 2 * hp:3 * hp])
        return (1.0 - z) * n + z * h            # upper 64 lanes provably stay zero

    rows_per_group = pairs_per_group * batch     # multiple of 8 -> aligned stores
    xg_rows_per_group = 2 * rows_per_group       # multiple of 16 -> aligned loads
    n_groups = n_pairs // pairs_per_group

    def group_body(g, h):                        # 8 GRU steps per body (effective unroll)
        xrow = pl.multiple_of(g * xg_rows_per_group, xg_rows_per_group)
        xg_blk = xg_scr[pl.ds(xrow, xg_rows_per_group), :]
        outs = []
        for i in range(pairs_per_group):
            xg_a = xg_blk[(2 * i) * batch:(2 * i + 1) * batch, :]
            xg_b = xg_blk[(2 * i + 1) * batch:(2 * i + 2) * batch, :]
            h1 = gru_step(xg_a, h)               # timestep 2p
            h2 = gru_step(xg_b, h1)              # timestep 2p+1
            outs.append(h1 + h2)                 # data_reconstruction pair-sum
            h = h2
        orow = pl.multiple_of(g * rows_per_group, rows_per_group)
        gru_out_ref[pl.ds(orow, rows_per_group), :] = jnp.concatenate(outs, axis=0)
        return h

    h0 = jnp.zeros((batch, hp), jnp.float32)
    lax.fori_loop(0, n_groups, group_body, h0)


# ---------------------------------------------------------------------------
# Wrapper (parameter packing / padding, light XLA glue)
# ---------------------------------------------------------------------------

def _pad_gate_cols(w, h, hp):
    """(..., 3*h) -> (..., 3*hp): each gate block zero-padded along the lane axis."""
    pads = [(0, 0)] * (w.ndim - 1) + [(0, hp - h)]
    return jnp.concatenate(
        [jnp.pad(w[..., g * h:(g + 1) * h], pads) for g in range(3)], axis=-1)


def gru_block_forward(params, X):
    """X: (B, 18, L) NCL with L = 150 (the only length making the final cat consistent)."""
    B, cin, L = X.shape
    k1 = 5
    lout1 = L - k1 + 1                         # 146
    lout2 = (lout1 - 3) // 2 + 1               # 72
    n_pairs = 72                               # data_reconstruction keeps pairs 0..71
    assert lout2 == n_pairs, "module requires L=150"
    T = 2 * n_pairs                            # 144 timesteps actually needed
    n_even = (lout1 + 1) // 2                  # 73
    block_rows = ((n_even + 7) // 8) * 8       # 80 (8-row aligned even/odd blocks)
    kdim = cin * k1                            # 90
    h = params["gru_b_ih"].shape[0] // 3       # 64
    hp = 128
    cout1 = params["conv1_w"].shape[0]         # 64
    cout2 = params["conv2_w"].shape[0]         # 128

    # conv1 im2col rows, de-interleaved (even timesteps first, then odd) per batch,
    # 8-row aligned blocks, conv1 bias folded in as an all-ones column.
    taps = [X[:, :, k:k + lout1] for k in range(k1)]            # (B, cin, lout1) each
    x_unf = jnp.stack(taps, axis=2).transpose(0, 3, 1, 2).reshape(B, lout1, kdim)

    def prep(blk):                                              # (B, 73, 90) -> (B, 80, 128)
        ones = jnp.ones(blk.shape[:-1] + (1,), blk.dtype)
        blk = jnp.concatenate([blk, ones], axis=-1)             # bias column
        return jnp.pad(blk, ((0, 0), (0, block_rows - blk.shape[1]),
                             (0, _LANES - blk.shape[-1])))

    x_de = jnp.concatenate([prep(x_unf[:, 0::2, :]), prep(x_unf[:, 1::2, :])], axis=1)
    x_de = x_de.reshape(B * 2 * block_rows, _LANES)

    w1 = params["conv1_w"].reshape(cout1, kdim).T                           # (90, 64)
    w1aug = jnp.concatenate([w1, params["conv1_b"].reshape(1, cout1)], axis=0)   # (91, 64)
    w1aug = jnp.pad(w1aug, ((0, _LANES - w1aug.shape[0]), (0, _LANES - cout1)))  # (128, 128)
    w2p = jnp.pad(jnp.transpose(params["conv2_w"], (2, 1, 0)),
                  ((0, 0), (0, _LANES - cout1), (0, 0)))                    # (3, 128, 128)
    b2 = params["conv2_b"].reshape(1, cout2)                                # (1, 128)

    # GRU operands: gate lane padding 64->128 (r/z/n at offsets 0/128/256); K kept at 64.
    wih_p = jnp.pad(_pad_gate_cols(params["gru_w_ih"].T, h, hp),
                    ((0, _LANES - cin), (0, 0)))                            # (128, 384)
    whh_p = _pad_gate_cols(params["gru_w_hh"].T, h, hp)                     # (64, 384)
    bih_p = _pad_gate_cols(params["gru_b_ih"].reshape(1, -1), h, hp)        # (1, 384)
    bhh_p = _pad_gate_cols(params["gru_b_hh"].reshape(1, -1), h, hp)        # (1, 384)

    x_gru = jnp.transpose(X, (2, 0, 1))[:T].reshape(T * B, cin)             # row = t*B + b
    x_gru = jnp.pad(x_gru, ((0, 0), (0, _LANES - cin)))                     # (T*B, 128)

    ppg = math.lcm(8, B) // B                  # pairs per group -> 8-row aligned stores
    assert n_pairs % ppg == 0

    conv_out, gru_out = pl.pallas_call(
        functools.partial(_fused_kernel, batch=B, block_rows=block_rows,
                          lout1=lout1, lout2=lout2, pairs_per_group=ppg),
        out_shape=(jax.ShapeDtypeStruct((B * lout2, _LANES), jnp.float32),
                   jax.ShapeDtypeStruct((n_pairs * B, hp), jnp.float32)),
        in_specs=[_VMEM] * 9,
        out_specs=(_VMEM, _VMEM),
        scratch_shapes=[pltpu.VMEM((B * 2 * block_rows, _LANES), jnp.float32),  # conv1 act
                        pltpu.VMEM((T * B, 3 * hp), jnp.float32)],             # projected xg
    )(x_de, w1aug, w2p, b2, x_gru, wih_p, bih_p, whh_p, bhh_p)

    X1 = conv_out.reshape(B, lout2, cout2).transpose(0, 2, 1)               # (B, 128, 72)
    X2 = gru_out[:, :h].reshape(n_pairs, B, h).transpose(1, 2, 0)           # (B, 64, 72)
    return jnp.concatenate((X1, X2), axis=1)                                # (B, 192, 72)


# ---------------------------------------------------------------------------
# Main
# ---------------------------------------------------------------------------

if __name__ == "__main__":
    B, Cin, L = 2, 18, 150   # L=150 required for the concat in data_reconstruction
    keys = jax.random.split(jax.random.PRNGKey(0), 9)

    def u(k, shape, fan_in):
        s = 1.0 / (fan_in ** 0.5)
        return jax.random.uniform(k, shape, jnp.float32, -s, s)

    params = {
        # PyTorch-default-style uniform init (deterministic, synthetic weights)
        "conv1_w": u(keys[0], (64, 18, 5), 18 * 5),
        "conv1_b": u(keys[1], (64,), 18 * 5),
        "conv2_w": u(keys[2], (128, 64, 3), 64 * 3),
        "conv2_b": u(keys[3], (128,), 64 * 3),
        "gru_w_ih": u(keys[4], (3 * 64, 18), 64),
        "gru_w_hh": u(keys[5], (3 * 64, 64), 64),
        "gru_b_ih": u(keys[6], (3 * 64,), 64),
        "gru_b_hh": u(keys[7], (3 * 64,), 64),
    }

    X = jax.random.normal(keys[8], (B, Cin, L), jnp.float32)

    out = jax.jit(gru_block_forward)(params, X)
    out = jax.block_until_ready(out)
    assert out.shape == (B, 192, 72), out.shape
    assert bool(jnp.isfinite(out).all())
    print("KERNEL_OK")
</pallas_src>

<mosaic_0001>
module attributes {stable_mosaic.version = 11 : i64} {
  func.func @_fused_kernel(%arg0: memref<320x128xf32, #tpu.memory_space<vmem>>, %arg1: memref<128x128xf32, #tpu.memory_space<vmem>>, %arg2: memref<3x128x128xf32, #tpu.memory_space<vmem>>, %arg3: memref<1x128xf32, #tpu.memory_space<vmem>>, %arg4: memref<288x128xf32, #tpu.memory_space<vmem>>, %arg5: memref<128x384xf32, #tpu.memory_space<vmem>>, %arg6: memref<1x384xf32, #tpu.memory_space<vmem>>, %arg7: memref<64x384xf32, #tpu.memory_space<vmem>>, %arg8: memref<1x384xf32, #tpu.memory_space<vmem>>, %arg9: memref<144x128xf32, #tpu.memory_space<vmem>>, %arg10: memref<144x128xf32, #tpu.memory_space<vmem>>, %arg11: memref<320x128xf32, #tpu.memory_space<vmem>>, %arg12: memref<288x384xf32, #tpu.memory_space<vmem>>) attributes {dimension_semantics = [], scalar_prefetch = 0 : i64, scratch_operands = 2 : i64, tpu.core_type = #tpu.core_type<tc>} {
    %c0 = arith.constant 0 : index
    %c0_0 = arith.constant 0 : index
    %0 = vector.load %arg6[%c0, %c0_0] : memref<1x384xf32, #tpu.memory_space<vmem>>, vector<1x384xf32>
    %c0_1 = arith.constant 0 : index
    %c0_2 = arith.constant 0 : index
    %1 = vector.load %arg4[%c0_1, %c0_2] : memref<288x128xf32, #tpu.memory_space<vmem>>, vector<96x128xf32>
    %c0_3 = arith.constant 0 : index
    %c0_4 = arith.constant 0 : index
    %2 = vector.load %arg5[%c0_3, %c0_4] : memref<128x384xf32, #tpu.memory_space<vmem>>, vector<128x384xf32>
    %cst = arith.constant dense<0.000000e+00> : vector<96x384xf32>
    %3 = tpu.matmul %1, %2, %cst {dimension_numbers = #tpu.dot_dimension_numbers<[1], [0], [0], [1], [0, 0, 1, 1], [], []>} : vector<96x128xf32>, vector<128x384xf32>, vector<96x384xf32> -> vector<96x384xf32>
    %4 = vector.broadcast %0 : vector<1x384xf32> to vector<96x384xf32>
    %5 = arith.addf %3, %4 : vector<96x384xf32>
    %c0_5 = arith.constant 0 : index
    %c0_6 = arith.constant 0 : index
    %6 = vector.load %arg12[%c0_5, %c0_6] : memref<288x384xf32, #tpu.memory_space<vmem>>, vector<96x384xf32>
    tpu.vector_store %arg12[%c0_5, %c0_6], %5 {strides = array<i32>} : memref<288x384xf32, #tpu.memory_space<vmem>>, vector<96x384xf32>,
    %c96 = arith.constant 96 : index
    %c0_7 = arith.constant 0 : index
    %7 = vector.load %arg4[%c96, %c0_7] : memref<288x128xf32, #tpu.memory_space<vmem>>, vector<96x128xf32>
    %c0_8 = arith.constant 0 : index
    %c0_9 = arith.constant 0 : index
    %8 = vector.load %arg5[%c0_8, %c0_9] : memref<128x384xf32, #tpu.memory_space<vmem>>, vector<128x384xf32>
    %cst_10 = arith.constant dense<0.000000e+00> : vector<96x384xf32>
    %9 = tpu.matmul %7, %8, %cst_10 {dimension_numbers = #tpu.dot_dimension_numbers<[1], [0], [0], [1], [0, 0, 1, 1], [], []>} : vector<96x128xf32>, vector<128x384xf32>, vector<96x384xf32> -> vector<96x384xf32>
    %10 = vector.broadcast %0 : vector<1x384xf32> to vector<96x384xf32>
    %11 = arith.addf %9, %10 : vector<96x384xf32>
    %c96_11 = arith.constant 96 : index
    %c0_12 = arith.constant 0 : index
    %12 = vector.load %arg12[%c96_11, %c0_12] : memref<288x384xf32, #tpu.memory_space<vmem>>, vector<96x384xf32>
    tpu.vector_store %arg12[%c96_11, %c0_12], %11 {strides = array<i32>} : memref<288x384xf32, #tpu.memory_space<vmem>>, vector<96x384xf32>,
    %c192 = arith.constant 192 : index
    %c0_13 = arith.constant 0 : index
    %13 = vector.load %arg4[%c192, %c0_13] : memref<288x128xf32, #tpu.memory_space<vmem>>, vector<96x128xf32>
    %c0_14 = arith.constant 0 : index
    %c0_15 = arith.constant 0 : index
    %14 = vector.load %arg5[%c0_14, %c0_15] : memref<128x384xf32, #tpu.memory_space<vmem>>, vector<128x384xf32>
    %cst_16 = arith.constant dense<0.000000e+00> : vector<96x384xf32>
    %15 = tpu.matmul %13, %14, %cst_16 {dimension_numbers = #tpu.dot_dimension_numbers<[1], [0], [0], [1], [0, 0, 1, 1], [], []>} : vector<96x128xf32>, vector<128x384xf32>, vector<96x384xf32> -> vector<96x384xf32>
    %16 = vector.broadcast %0 : vector<1x384xf32> to vector<96x384xf32>
    %17 = arith.addf %15, %16 : vector<96x384xf32>
    %c192_17 = arith.constant 192 : index
    %c0_18 = arith.constant 0 : index
    %18 = vector.load %arg12[%c192_17, %c0_18] : memref<288x384xf32, #tpu.memory_space<vmem>>, vector<96x384xf32>
    tpu.vector_store %arg12[%c192_17, %c0_18], %17 {strides = array<i32>} : memref<288x384xf32, #tpu.memory_space<vmem>>, vector<96x384xf32>,
    %cst_19 = arith.constant 0.000000e+00 : f32
    %19 = vector.broadcast %cst_19 : f32 to vector<1x128xf32>
    %cst_20 = arith.constant 0.000000e+00 : f32
    %20 = vector.broadcast %cst_20 : f32 to vector<1x128xf32>
    %c0_21 = arith.constant 0 : index
    %c0_22 = arith.constant 0 : index
    %21 = vector.load %arg0[%c0_21, %c0_22] : memref<320x128xf32, #tpu.memory_space<vmem>>, vector<80x128xf32>
    %c0_23 = arith.constant 0 : index
    %c0_24 = arith.constant 0 : index
    %22 = vector.load %arg1[%c0_23, %c0_24] : memref<128x128xf32, #tpu.memory_space<vmem>>, vector<128x128xf32>
    %cst_25 = arith.constant dense<0.000000e+00> : vector<80x128xf32>
    %23 = tpu.matmul %21, %22, %cst_25 {dimension_numbers = #tpu.dot_dimension_numbers<[1], [0], [0], [1], [0, 0, 1, 1], [], []>} : vector<80x128xf32>, vector<128x128xf32>, vector<80x128xf32> -> vector<80x128xf32>
    %c0_26 = arith.constant 0 : index
    %c0_27 = arith.constant 0 : index
    %24 = vector.load %arg11[%c0_26, %c0_27] : memref<320x128xf32, #tpu.memory_space<vmem>>, vector<80x128xf32>
    tpu.vector_store %arg11[%c0_26, %c0_27], %23 {strides = array<i32>} : memref<320x128xf32, #tpu.memory_space<vmem>>, vector<80x128xf32>,
    %cst_28 = arith.constant dense<0.000000e+00> : vector<128xf32>
    %25 = vector.multi_reduction <add>, %23, %cst_28 [0] : vector<80x128xf32> to vector<128xf32>
    %26 = vector.shape_cast %25 : vector<128xf32> to vector<1x128xf32>
    %27 = arith.addf %19, %26 : vector<1x128xf32>
    %28 = arith.mulf %23, %23 : vector<80x128xf32>
    %cst_29 = arith.constant dense<0.000000e+00> : vector<128xf32>
    %29 = vector.multi_reduction <add>, %28, %cst_29 [0] : vector<80x128xf32> to vector<128xf32>
    %30 = vector.shape_cast %29 : vector<128xf32> to vector<1x128xf32>
    %31 = arith.addf %20, %30 : vector<1x128xf32>
    %c80 = arith.constant 80 : index
    %c0_30 = arith.constant 0 : index
    %32 = vector.load %arg0[%c80, %c0_30] : memref<320x128xf32, #tpu.memory_space<vmem>>, vector<80x128xf32>
    %c0_31 = arith.constant 0 : index
    %c0_32 = arith.constant 0 : index
    %33 = vector.load %arg1[%c0_31, %c0_32] : memref<128x128xf32, #tpu.memory_space<vmem>>, vector<128x128xf32>
    %cst_33 = arith.constant dense<0.000000e+00> : vector<80x128xf32>
    %34 = tpu.matmul %32, %33, %cst_33 {dimension_numbers = #tpu.dot_dimension_numbers<[1], [0], [0], [1], [0, 0, 1, 1], [], []>} : vector<80x128xf32>, vector<128x128xf32>, vector<80x128xf32> -> vector<80x128xf32>
    %c80_34 = arith.constant 80 : index
    %c0_35 = arith.constant 0 : index
    %35 = vector.load %arg11[%c80_34, %c0_35] : memref<320x128xf32, #tpu.memory_space<vmem>>, vector<80x128xf32>
    tpu.vector_store %arg11[%c80_34, %c0_35], %34 {strides = array<i32>} : memref<320x128xf32, #tpu.memory_space<vmem>>, vector<80x128xf32>,
    %cst_36 = arith.constant dense<0.000000e+00> : vector<128xf32>
    %36 = vector.multi_reduction <add>, %34, %cst_36 [0] : vector<80x128xf32> to vector<128xf32>
    %37 = vector.shape_cast %36 : vector<128xf32> to vector<1x128xf32>
    %38 = arith.addf %27, %37 : vector<1x128xf32>
    %39 = arith.mulf %34, %34 : vector<80x128xf32>
    %cst_37 = arith.constant dense<0.000000e+00> : vector<128xf32>
    %40 = vector.multi_reduction <add>, %39, %cst_37 [0] : vector<80x128xf32> to vector<128xf32>
    %41 = vector.shape_cast %40 : vector<128xf32> to vector<1x128xf32>
    %42 = arith.addf %31, %41 : vector<1x128xf32>
    %c160 = arith.constant 160 : index
    %c0_38 = arith.constant 0 : index
    %43 = vector.load %arg0[%c160, %c0_38] : memref<320x128xf32, #tpu.memory_space<vmem>>, vector<80x128xf32>
    %c0_39 = arith.constant 0 : index
    %c0_40 = arith.constant 0 : index
    %44 = vector.load %arg1[%c0_39, %c0_40] : memref<128x128xf32, #tpu.memory_space<vmem>>, vector<128x128xf32>
    %cst_41 = arith.constant dense<0.000000e+00> : vector<80x128xf32>
    %45 = tpu.matmul %43, %44, %cst_41 {dimension_numbers = #tpu.dot_dimension_numbers<[1], [0], [0], [1], [0, 0, 1, 1], [], []>} : vector<80x128xf32>, vector<128x128xf32>, vector<80x128xf32> -> vector<80x128xf32>
    %c160_42 = arith.constant 160 : index
    %c0_43 = arith.constant 0 : index
    %46 = vector.load %arg11[%c160_42, %c0_43] : memref<320x128xf32, #tpu.memory_space<vmem>>, vector<80x128xf32>
    tpu.vector_store %arg11[%c160_42, %c0_43], %45 {strides = array<i32>} : memref<320x128xf32, #tpu.memory_space<vmem>>, vector<80x128xf32>,
    %cst_44 = arith.constant dense<0.000000e+00> : vector<128xf32>
    %47 = vector.multi_reduction <add>, %45, %cst_44 [0] : vector<80x128xf32> to vector<128xf32>
    %48 = vector.shape_cast %47 : vector<128xf32> to vector<1x128xf32>
    %49 = arith.addf %38, %48 : vector<1x128xf32>
    %50 = arith.mulf %45, %45 : vector<80x128xf32>
    %cst_45 = arith.constant dense<0.000000e+00> : vector<128xf32>
    %51 = vector.multi_reduction <add>, %50, %cst_45 [0] : vector<80x128xf32> to vector<128xf32>
    %52 = vector.shape_cast %51 : vector<128xf32> to vector<1x128xf32>
    %53 = arith.addf %42, %52 : vector<1x128xf32>
    %c240 = arith.constant 240 : index
    %c0_46 = arith.constant 0 : index
    %54 = vector.load %arg0[%c240, %c0_46] : memref<320x128xf32, #tpu.memory_space<vmem>>, vector<80x128xf32>
    %c0_47 = arith.constant 0 : index
    %c0_48 = arith.constant 0 : index
    %55 = vector.load %arg1[%c0_47, %c0_48] : memref<128x128xf32, #tpu.memory_space<vmem>>, vector<128x128xf32>
    %cst_49 = arith.constant dense<0.000000e+00> : vector<80x128xf32>
    %56 = tpu.matmul %54, %55, %cst_49 {dimension_numbers = #tpu.dot_dimension_numbers<[1], [0], [0], [1], [0, 0, 1, 1], [], []>} : vector<80x128xf32>, vector<128x128xf32>, vector<80x128xf32> -> vector<80x128xf32>
    %c240_50 = arith.constant 240 : index
    %c0_51 = arith.constant 0 : index
    %57 = vector.load %arg11[%c240_50, %c0_51] : memref<320x128xf32, #tpu.memory_space<vmem>>, vector<80x128xf32>
    tpu.vector_store %arg11[%c240_50, %c0_51], %56 {strides = array<i32>} : memref<320x128xf32, #tpu.memory_space<vmem>>, vector<80x128xf32>,
    %cst_52 = arith.constant dense<0.000000e+00> : vector<128xf32>
    %58 = vector.multi_reduction <add>, %56, %cst_52 [0] : vector<80x128xf32> to vector<128xf32>
    %59 = vector.shape_cast %58 : vector<128xf32> to vector<1x128xf32>
    %60 = arith.addf %49, %59 : vector<1x128xf32>
    %61 = arith.mulf %56, %56 : vector<80x128xf32>
    %cst_53 = arith.constant dense<0.000000e+00> : vector<128xf32>
    %62 = vector.multi_reduction <add>, %61, %cst_53 [0] : vector<80x128xf32> to vector<128xf32>
    %63 = vector.shape_cast %62 : vector<128xf32> to vector<1x128xf32>
    %64 = arith.addf %53, %63 : vector<1x128xf32>
    %cst_54 = arith.constant 2.920000e+02 : f32
    %65 = vector.broadcast %cst_54 : f32 to vector<1x128xf32>
    %66 = arith.divf %60, %65 : vector<1x128xf32>
    %cst_55 = arith.constant 2.920000e+02 : f32
    %67 = vector.broadcast %cst_55 : f32 to vector<1x128xf32>
    %68 = arith.divf %64, %67 : vector<1x128xf32>
    %69 = arith.mulf %66, %66 : vector<1x128xf32>
    %70 = arith.subf %68, %69 : vector<1x128xf32>
    %cst_56 = arith.constant 9.99999974E-6 : f32
    %71 = vector.broadcast %cst_56 : f32 to vector<1x128xf32>
    %72 = arith.addf %70, %71 : vector<1x128xf32>
    %73 = math.rsqrt %72 : vector<1x128xf32>
    %c0_57 = arith.constant 0 : index
    %c0_58 = arith.constant 0 : index
    %74 = vector.load %arg11[%c0_57, %c0_58] : memref<320x128xf32, #tpu.memory_space<vmem>>, vector<80x128xf32>
    %75 = vector.broadcast %66 : vector<1x128xf32> to vector<80x128xf32>
    %76 = arith.subf %74, %75 : vector<80x128xf32>
    %77 = vector.broadcast %73 : vector<1x128xf32> to vector<80x128xf32>
    %78 = arith.mulf %76, %77 : vector<80x128xf32>
    %cst_59 = arith.constant 0.000000e+00 : f32
    %79 = vector.broadcast %cst_59 : f32 to vector<80x128xf32>
    %80 = arith.maximumf %78, %79 : vector<80x128xf32>
    %c0_60 = arith.constant 0 : index
    %c0_61 = arith.constant 0 : index
    %81 = vector.load %arg11[%c0_60, %c0_61] : memref<320x128xf32, #tpu.memory_space<vmem>>, vector<80x128xf32>
    tpu.vector_store %arg11[%c0_60, %c0_61], %80 {strides = array<i32>} : memref<320x128xf32, #tpu.memory_space<vmem>>, vector<80x128xf32>,
    %c80_62 = arith.constant 80 : index
    %c0_63 = arith.constant 0 : index
    %82 = vector.load %arg11[%c80_62, %c0_63] : memref<320x128xf32, #tpu.memory_space<vmem>>, vector<80x128xf32>
    %83 = vector.broadcast %66 : vector<1x128xf32> to vector<80x128xf32>
    %84 = arith.subf %82, %83 : vector<80x128xf32>
    %85 = vector.broadcast %73 : vector<1x128xf32> to vector<80x128xf32>
    %86 = arith.mulf %84, %85 : vector<80x128xf32>
    %cst_64 = arith.constant 0.000000e+00 : f32
    %87 = vector.broadcast %cst_64 : f32 to vector<80x128xf32>
    %88 = arith.maximumf %86, %87 : vector<80x128xf32>
    %c80_65 = arith.constant 80 : index
    %c0_66 = arith.constant 0 : index
    %89 = vector.load %arg11[%c80_65, %c0_66] : memref<320x128xf32, #tpu.memory_space<vmem>>, vector<80x128xf32>
    tpu.vector_store %arg11[%c80_65, %c0_66], %88 {strides = array<i32>} : memref<320x128xf32, #tpu.memory_space<vmem>>, vector<80x128xf32>,
    %c160_67 = arith.constant 160 : index
    %c0_68 = arith.constant 0 : index
    %90 = vector.load %arg11[%c160_67, %c0_68] : memref<320x128xf32, #tpu.memory_space<vmem>>, vector<80x128xf32>
    %91 = vector.broadcast %66 : vector<1x128xf32> to vector<80x128xf32>
    %92 = arith.subf %90, %91 : vector<80x128xf32>
    %93 = vector.broadcast %73 : vector<1x128xf32> to vector<80x128xf32>
    %94 = arith.mulf %92, %93 : vector<80x128xf32>
    %cst_69 = arith.constant 0.000000e+00 : f32
    %95 = vector.broadcast %cst_69 : f32 to vector<80x128xf32>
    %96 = arith.maximumf %94, %95 : vector<80x128xf32>
    %c160_70 = arith.constant 160 : index
    %c0_71 = arith.constant 0 : index
    %97 = vector.load %arg11[%c160_70, %c0_71] : memref<320x128xf32, #tpu.memory_space<vmem>>, vector<80x128xf32>
    tpu.vector_store %arg11[%c160_70, %c0_71], %96 {strides = array<i32>} : memref<320x128xf32, #tpu.memory_space<vmem>>, vector<80x128xf32>,
    %c240_72 = arith.constant 240 : index
    %c0_73 = arith.constant 0 : index
    %98 = vector.load %arg11[%c240_72, %c0_73] : memref<320x128xf32, #tpu.memory_space<vmem>>, vector<80x128xf32>
    %99 = vector.broadcast %66 : vector<1x128xf32> to vector<80x128xf32>
    %100 = arith.subf %98, %99 : vector<80x128xf32>
    %101 = vector.broadcast %73 : vector<1x128xf32> to vector<80x128xf32>
    %102 = arith.mulf %100, %101 : vector<80x128xf32>
    %cst_74 = arith.constant 0.000000e+00 : f32
    %103 = vector.broadcast %cst_74 : f32 to vector<80x128xf32>
    %104 = arith.maximumf %102, %103 : vector<80x128xf32>
    %c240_75 = arith.constant 240 : index
    %c0_76 = arith.constant 0 : index
    %105 = vector.load %arg11[%c240_75, %c0_76] : memref<320x128xf32, #tpu.memory_space<vmem>>, vector<80x128xf32>
    tpu.vector_store %arg11[%c240_75, %c0_76], %104 {strides = array<i32>} : memref<320x128xf32, #tpu.memory_space<vmem>>, vector<80x128xf32>,
    %cst_77 = arith.constant 0.000000e+00 : f32
    %106 = vector.broadcast %cst_77 : f32 to vector<1x128xf32>
    %cst_78 = arith.constant 0.000000e+00 : f32
    %107 = vector.broadcast %cst_78 : f32 to vector<1x128xf32>
    %c0_79 = arith.constant 0 : index
    %c0_80 = arith.constant 0 : index
    %108 = vector.load %arg3[%c0_79, %c0_80] : memref<1x128xf32, #tpu.memory_space<vmem>>, vector<1x128xf32>
    %c0_81 = arith.constant 0 : index
    %c0_82 = arith.constant 0 : index
    %109 = vector.load %arg11[%c0_81, %c0_82] : memref<320x128xf32, #tpu.memory_space<vmem>>, vector<80x128xf32>
    %c80_83 = arith.constant 80 : index
    %c0_84 = arith.constant 0 : index
    %110 = vector.load %arg11[%c80_83, %c0_84] : memref<320x128xf32, #tpu.memory_space<vmem>>, vector<80x128xf32>
    %111 = vector.extract_strided_slice %109 {offsets = [0, 0], sizes = [72, 128], strides = [1, 1]} : vector<80x128xf32> to vector<72x128xf32>
    %c0_85 = arith.constant 0 : index
    %c0_86 = arith.constant 0 : index
    %c0_87 = arith.constant 0 : index
    %112 = vector.load %arg2[%c0_85, %c0_86, %c0_87] : memref<3x128x128xf32, #tpu.memory_space<vmem>>, vector<1x128x128xf32>
    %113 = vector.shape_cast %112 : vector<1x128x128xf32> to vector<128x128xf32>
    %cst_88 = arith.constant dense<0.000000e+00> : vector<72x128xf32>
    %114 = tpu.matmul %111, %113, %cst_88 {dimension_numbers = #tpu.dot_dimension_numbers<[1], [0], [0], [1], [0, 0, 1, 1], [], []>} : vector<72x128xf32>, vector<128x128xf32>, vector<72x128xf32> -> vector<72x128xf32>
    %115 = vector.extract_strided_slice %110 {offsets = [0, 0], sizes = [72, 128], strides = [1, 1]} : vector<80x128xf32> to vector<72x128xf32>
    %c1 = arith.constant 1 : index
    %c0_89 = arith.constant 0 : index
    %c0_90 = arith.constant 0 : index
    %116 = vector.load %arg2[%c1, %c0_89, %c0_90] : memref<3x128x128xf32, #tpu.memory_space<vmem>>, vector<1x128x128xf32>
    %117 = vector.shape_cast %116 : vector<1x128x128xf32> to vector<128x128xf32>
    %cst_91 = arith.constant dense<0.000000e+00> : vector<72x128xf32>
    %118 = tpu.matmul %115, %117, %cst_91 {dimension_numbers = #tpu.dot_dimension_numbers<[1], [0], [0], [1], [0, 0, 1, 1], [], []>} : vector<72x128xf32>, vector<128x128xf32>, vector<72x128xf32> -> vector<72x128xf32>
    %119 = arith.addf %114, %118 : vector<72x128xf32>
    %120 = vector.extract_strided_slice %109 {offsets = [1, 0], sizes = [72, 128], strides = [1, 1]} : vector<80x128xf32> to vector<72x128xf32>
    %c2 = arith.constant 2 : index
    %c0_92 = arith.constant 0 : index
    %c0_93 = arith.constant 0 : index
    %121 = vector.load %arg2[%c2, %c0_92, %c0_93] : memref<3x128x128xf32, #tpu.memory_space<vmem>>, vector<1x128x128xf32>
    %122 = vector.shape_cast %121 : vector<1x128x128xf32> to vector<128x128xf32>
    %cst_94 = arith.constant dense<0.000000e+00> : vector<72x128xf32>
    %123 = tpu.matmul %120, %122, %cst_94 {dimension_numbers = #tpu.dot_dimension_numbers<[1], [0], [0], [1], [0, 0, 1, 1], [], []>} : vector<72x128xf32>, vector<128x128xf32>, vector<72x128xf32> -> vector<72x128xf32>
    %124 = arith.addf %119, %123 : vector<72x128xf32>
    %125 = vector.broadcast %108 : vector<1x128xf32> to vector<72x128xf32>
    %126 = arith.addf %124, %125 : vector<72x128xf32>
    %c0_95 = arith.constant 0 : index
    %c0_96 = arith.constant 0 : index
    %127 = vector.load %arg9[%c0_95, %c0_96] : memref<144x128xf32, #tpu.memory_space<vmem>>, vector<72x128xf32>
    tpu.vector_store %arg9[%c0_95, %c0_96], %126 {strides = array<i32>} : memref<144x128xf32, #tpu.memory_space<vmem>>, vector<72x128xf32>,
    %cst_97 = arith.constant dense<0.000000e+00> : vector<128xf32>
    %128 = vector.multi_reduction <add>, %126, %cst_97 [0] : vector<72x128xf32> to vector<128xf32>
    %129 = vector.shape_cast %128 : vector<128xf32> to vector<1x128xf32>
    %130 = arith.addf %106, %129 : vector<1x128xf32>
    %131 = arith.mulf %126, %126 : vector<72x128xf32>
    %cst_98 = arith.constant dense<0.000000e+00> : vector<128xf32>
    %132 = vector.multi_reduction <add>, %131, %cst_98 [0] : vector<72x128xf32> to vector<128xf32>
    %133 = vector.shape_cast %132 : vector<128xf32> to vector<1x128xf32>
    %134 = arith.addf %107, %133 : vector<1x128xf32>
    %c160_99 = arith.constant 160 : index
    %c0_100 = arith.constant 0 : index
    %135 = vector.load %arg11[%c160_99, %c0_100] : memref<320x128xf32, #tpu.memory_space<vmem>>, vector<80x128xf32>
    %c240_101 = arith.constant 240 : index
    %c0_102 = arith.constant 0 : index
    %136 = vector.load %arg11[%c240_101, %c0_102] : memref<320x128xf32, #tpu.memory_space<vmem>>, vector<80x128xf32>
    %137 = vector.extract_strided_slice %135 {offsets = [0, 0], sizes = [72, 128], strides = [1, 1]} : vector<80x128xf32> to vector<72x128xf32>
    %c0_103 = arith.constant 0 : index
    %c0_104 = arith.constant 0 : index
    %c0_105 = arith.constant 0 : index
    %138 = vector.load %arg2[%c0_103, %c0_104, %c0_105] : memref<3x128x128xf32, #tpu.memory_space<vmem>>, vector<1x128x128xf32>
    %139 = vector.shape_cast %138 : vector<1x128x128xf32> to vector<128x128xf32>
    %cst_106 = arith.constant dense<0.000000e+00> : vector<72x128xf32>
    %140 = tpu.matmul %137, %139, %cst_106 {dimension_numbers = #tpu.dot_dimension_numbers<[1], [0], [0], [1], [0, 0, 1, 1], [], []>} : vector<72x128xf32>, vector<128x128xf32>, vector<72x128xf32> -> vector<72x128xf32>
    %141 = vector.extract_strided_slice %136 {offsets = [0, 0], sizes = [72, 128], strides = [1, 1]} : vector<80x128xf32> to vector<72x128xf32>
    %c1_107 = arith.constant 1 : index
    %c0_108 = arith.constant 0 : index
    %c0_109 = arith.constant 0 : index
    %142 = vector.load %arg2[%c1_107, %c0_108, %c0_109] : memref<3x128x128xf32, #tpu.memory_space<vmem>>, vector<1x128x128xf32>
    %143 = vector.shape_cast %142 : vector<1x128x128xf32> to vector<128x128xf32>
    %cst_110 = arith.constant dense<0.000000e+00> : vector<72x128xf32>
    %144 = tpu.matmul %141, %143, %cst_110 {dimension_numbers = #tpu.dot_dimension_numbers<[1], [0], [0], [1], [0, 0, 1, 1], [], []>} : vector<72x128xf32>, vector<128x128xf32>, vector<72x128xf32> -> vector<72x128xf32>
    %145 = arith.addf %140, %144 : vector<72x128xf32>
    %146 = vector.extract_strided_slice %135 {offsets = [1, 0], sizes = [72, 128], strides = [1, 1]} : vector<80x128xf32> to vector<72x128xf32>
    %c2_111 = arith.constant 2 : index
    %c0_112 = arith.constant 0 : index
    %c0_113 = arith.constant 0 : index
    %147 = vector.load %arg2[%c2_111, %c0_112, %c0_113] : memref<3x128x128xf32, #tpu.memory_space<vmem>>, vector<1x128x128xf32>
    %148 = vector.shape_cast %147 : vector<1x128x128xf32> to vector<128x128xf32>
    %cst_114 = arith.constant dense<0.000000e+00> : vector<72x128xf32>
    %149 = tpu.matmul %146, %148, %cst_114 {dimension_numbers = #tpu.dot_dimension_numbers<[1], [0], [0], [1], [0, 0, 1, 1], [], []>} : vector<72x128xf32>, vector<128x128xf32>, vector<72x128xf32> -> vector<72x128xf32>
    %150 = arith.addf %145, %149 : vector<72x128xf32>
    %151 = vector.broadcast %108 : vector<1x128xf32> to vector<72x128xf32>
    %152 = arith.addf %150, %151 : vector<72x128xf32>
    %c72 = arith.constant 72 : index
    %c0_115 = arith.constant 0 : index
    %153 = vector.load %arg9[%c72, %c0_115] : memref<144x128xf32, #tpu.memory_space<vmem>>, vector<72x128xf32>
    tpu.vector_store %arg9[%c72, %c0_115], %152 {strides = array<i32>} : memref<144x128xf32, #tpu.memory_space<vmem>>, vector<72x128xf32>,
    %cst_116 = arith.constant dense<0.000000e+00> : vector<128xf32>
    %154 = vector.multi_reduction <add>, %152, %cst_116 [0] : vector<72x128xf32> to vector<128xf32>
    %155 = vector.shape_cast %154 : vector<128xf32> to vector<1x128xf32>
    %156 = arith.addf %130, %155 : vector<1x128xf32>
    %157 = arith.mulf %152, %152 : vector<72x128xf32>
    %cst_117 = arith.constant dense<0.000000e+00> : vector<128xf32>
    %158 = vector.multi_reduction <add>, %157, %cst_117 [0] : vector<72x128xf32> to vector<128xf32>
    %159 = vector.shape_cast %158 : vector<128xf32> to vector<1x128xf32>
    %160 = arith.addf %134, %159 : vector<1x128xf32>
    %cst_118 = arith.constant 1.440000e+02 : f32
    %161 = vector.broadcast %cst_118 : f32 to vector<1x128xf32>
    %162 = arith.divf %156, %161 : vector<1x128xf32>
    %cst_119 = arith.constant 1.440000e+02 : f32
    %163 = vector.broadcast %cst_119 : f32 to vector<1x128xf32>
    %164 = arith.divf %160, %163 : vector<1x128xf32>
    %165 = arith.mulf %162, %162 : vector<1x128xf32>
    %166 = arith.subf %164, %165 : vector<1x128xf32>
    %cst_120 = arith.constant 9.99999974E-6 : f32
    %167 = vector.broadcast %cst_120 : f32 to vector<1x128xf32>
    %168 = arith.addf %166, %167 : vector<1x128xf32>
    %169 = math.rsqrt %168 : vector<1x128xf32>
    %c0_121 = arith.constant 0 : index
    %c0_122 = arith.constant 0 : index
    %170 = vector.load %arg9[%c0_121, %c0_122] : memref<144x128xf32, #tpu.memory_space<vmem>>, vector<72x128xf32>
    %171 = vector.broadcast %162 : vector<1x128xf32> to vector<72x128xf32>
    %172 = arith.subf %170, %171 : vector<72x128xf32>
    %173 = vector.broadcast %169 : vector<1x128xf32> to vector<72x128xf32>
    %174 = arith.mulf %172, %173 : vector<72x128xf32>
    %cst_123 = arith.constant 0.000000e+00 : f32
    %175 = vector.broadcast %cst_123 : f32 to vector<72x128xf32>
    %176 = arith.maximumf %174, %175 : vector<72x128xf32>
    %c0_124 = arith.constant 0 : index
    %c0_125 = arith.constant 0 : index
    %177 = vector.load %arg9[%c0_124, %c0_125] : memref<144x128xf32, #tpu.memory_space<vmem>>, vector<72x128xf32>
    tpu.vector_store %arg9[%c0_124, %c0_125], %176 {strides = array<i32>} : memref<144x128xf32, #tpu.memory_space<vmem>>, vector<72x128xf32>,
    %c72_126 = arith.constant 72 : index
    %c0_127 = arith.constant 0 : index
    %178 = vector.load %arg9[%c72_126, %c0_127] : memref<144x128xf32, #tpu.memory_space<vmem>>, vector<72x128xf32>
    %179 = vector.broadcast %162 : vector<1x128xf32> to vector<72x128xf32>
    %180 = arith.subf %178, %179 : vector<72x128xf32>
    %181 = vector.broadcast %169 : vector<1x128xf32> to vector<72x128xf32>
    %182 = arith.mulf %180, %181 : vector<72x128xf32>
    %cst_128 = arith.constant 0.000000e+00 : f32
    %183 = vector.broadcast %cst_128 : f32 to vector<72x128xf32>
    %184 = arith.maximumf %182, %183 : vector<72x128xf32>
    %c72_129 = arith.constant 72 : index
    %c0_130 = arith.constant 0 : index
    %185 = vector.load %arg9[%c72_129, %c0_130] : memref<144x128xf32, #tpu.memory_space<vmem>>, vector<72x128xf32>
    tpu.vector_store %arg9[%c72_129, %c0_130], %184 {strides = array<i32>} : memref<144x128xf32, #tpu.memory_space<vmem>>, vector<72x128xf32>,
    %c0_131 = arith.constant 0 : index
    %c0_132 = arith.constant 0 : index
    %186 = vector.load %arg8[%c0_131, %c0_132] : memref<1x384xf32, #tpu.memory_space<vmem>>, vector<1x384xf32>
    %cst_133 = arith.constant 0.000000e+00 : f32
    %187 = vector.broadcast %cst_133 : f32 to vector<2x128xf32>
    %c0_i32 = arith.constant 0 : i32
    %c18_i32 = arith.constant 18 : i32
    %188 = arith.addi %c0_i32, %c18_i32 : i32
    %c1_i32 = arith.constant 1 : i32
    %189 = scf.for %arg13 = %c0_i32 to %188 step %c1_i32 iter_args(%arg14 = %187) -> (vector<2x128xf32>)  : i32 {
      %c16_i32 = arith.constant 16 : i32
      %190 = arith.muli %arg13, %c16_i32 : i32
      %191 = tpu.assume_multiple %190, 16 : i32
      %192 = arith.index_cast %191 : i32 to index
      %c0_135 = arith.constant 0 : index
      %193 = vector.load %arg12[%192, %c0_135] : memref<288x384xf32, #tpu.memory_space<vmem>>, vector<16x384xf32>
      %194 = vector.extract_strided_slice %193 {offsets = [0, 0], sizes = [2, 384], strides = [1, 1]} : vector<16x384xf32> to vector<2x384xf32>
      %195 = vector.extract_strided_slice %193 {offsets = [2, 0], sizes = [2, 384], strides = [1, 1]} : vector<16x384xf32> to vector<2x384xf32>
      %196 = vector.extract_strided_slice %arg14 {offsets = [0, 0], sizes = [2, 64], strides = [1, 1]} : vector<2x128xf32> to vector<2x64xf32>
      %c0_136 = arith.constant 0 : index
      %c0_137 = arith.constant 0 : index
      %197 = vector.load %arg7[%c0_136, %c0_137] : memref<64x384xf32, #tpu.memory_space<vmem>>, vector<64x384xf32>
      %cst_138 = arith.constant dense<0.000000e+00> : vector<2x384xf32>
      %198 = tpu.matmul %196, %197, %cst_138 {dimension_numbers = #tpu.dot_dimension_numbers<[1], [0], [0], [1], [0, 0, 1, 1], [], []>} : vector<2x64xf32>, vector<64x384xf32>, vector<2x384xf32> -> vector<2x384xf32>
      %199 = vector.broadcast %186 : vector<1x384xf32> to vector<2x384xf32>
      %200 = arith.addf %198, %199 : vector<2x384xf32>
      %201 = vector.extract_strided_slice %194 {offsets = [0, 0], sizes = [2, 128], strides = [1, 1]} : vector<2x384xf32> to vector<2x128xf32>
      %202 = vector.extract_strided_slice %200 {offsets = [0, 0], sizes = [2, 128], strides = [1, 1]} : vector<2x384xf32> to vector<2x128xf32>
      %203 = arith.addf %201, %202 : vector<2x128xf32>
      %204 = arith.negf %203 : vector<2x128xf32>
      %205 = math.exp %204 : vector<2x128xf32>
      %cst_139 = arith.constant 1.000000e+00 : f32
      %206 = vector.broadcast %cst_139 : f32 to vector<2x128xf32>
      %207 = arith.addf %206, %205 : vector<2x128xf32>
      %208 = arith.divf %206, %207 : vector<2x128xf32>
      %209 = vector.extract_strided_slice %194 {offsets = [0, 128], sizes = [2, 128], strides = [1, 1]} : vector<2x384xf32> to vector<2x128xf32>
      %210 = vector.extract_strided_slice %200 {offsets = [0, 128], sizes = [2, 128], strides = [1, 1]} : vector<2x384xf32> to vector<2x128xf32>
      %211 = arith.addf %209, %210 : vector<2x128xf32>
      %212 = arith.negf %211 : vector<2x128xf32>
      %213 = math.exp %212 : vector<2x128xf32>
      %cst_140 = arith.constant 1.000000e+00 : f32
      %214 = vector.broadcast %cst_140 : f32 to vector<2x128xf32>
      %215 = arith.addf %214, %213 : vector<2x128xf32>
      %216 = arith.divf %214, %215 : vector<2x128xf32>
      %217 = vector.extract_strided_slice %194 {offsets = [0, 256], sizes = [2, 128], strides = [1, 1]} : vector<2x384xf32> to vector<2x128xf32>
      %218 = vector.extract_strided_slice %200 {offsets = [0, 256], sizes = [2, 128], strides = [1, 1]} : vector<2x384xf32> to vector<2x128xf32>
      %219 = arith.mulf %208, %218 : vector<2x128xf32>
      %220 = arith.addf %217, %219 : vector<2x128xf32>
      %221 = math.tanh %220 : vector<2x128xf32>
      %cst_141 = arith.constant 1.000000e+00 : f32
      %222 = vector.broadcast %cst_141 : f32 to vector<2x128xf32>
      %223 = arith.subf %222, %216 : vector<2x128xf32>
      %224 = arith.mulf %223, %221 : vector<2x128xf32>
      %225 = arith.mulf %216, %arg14 : vector<2x128xf32>
      %226 = arith.addf %224, %225 : vector<2x128xf32>
      %227 = vector.extract_strided_slice %226 {offsets = [0, 0], sizes = [2, 64], strides = [1, 1]} : vector<2x128xf32> to vector<2x64xf32>
      %c0_142 = arith.constant 0 : index
      %c0_143 = arith.constant 0 : index
      %228 = vector.load %arg7[%c0_142, %c0_143] : memref<64x384xf32, #tpu.memory_space<vmem>>, vector<64x384xf32>
      %cst_144 = arith.constant dense<0.000000e+00> : vector<2x384xf32>
      %229 = tpu.matmul %227, %228, %cst_144 {dimension_numbers = #tpu.dot_dimension_numbers<[1], [0], [0], [1], [0, 0, 1, 1], [], []>} : vector<2x64xf32>, vector<64x384xf32>, vector<2x384xf32> -> vector<2x384xf32>
      %230 = vector.broadcast %186 : vector<1x384xf32> to vector<2x384xf32>
      %231 = arith.addf %229, %230 : vector<2x384xf32>
      %232 = vector.extract_strided_slice %195 {offsets = [0, 0], sizes = [2, 128], strides = [1, 1]} : vector<2x384xf32> to vector<2x128xf32>
      %233 = vector.extract_strided_slice %231 {offsets = [0, 0], sizes = [2, 128], strides = [1, 1]} : vector<2x384xf32> to vector<2x128xf32>
      %234 = arith.addf %232, %233 : vector<2x128xf32>
      %235 = arith.negf %234 : vector<2x128xf32>
      %236 = math.exp %235 : vector<2x128xf32>
      %cst_145 = arith.constant 1.000000e+00 : f32
      %237 = vector.broadcast %cst_145 : f32 to vector<2x128xf32>
      %238 = arith.addf %237, %236 : vector<2x128xf32>
      %239 = arith.divf %237, %238 : vector<2x128xf32>
      %240 = vector.extract_strided_slice %195 {offsets = [0, 128], sizes = [2, 128], strides = [1, 1]} : vector<2x384xf32> to vector<2x128xf32>
      %241 = vector.extract_strided_slice %231 {offsets = [0, 128], sizes = [2, 128], strides = [1, 1]} : vector<2x384xf32> to vector<2x128xf32>
      %242 = arith.addf %240, %241 : vector<2x128xf32>
      %243 = arith.negf %242 : vector<2x128xf32>
      %244 = math.exp %243 : vector<2x128xf32>
      %cst_146 = arith.constant 1.000000e+00 : f32
      %245 = vector.broadcast %cst_146 : f32 to vector<2x128xf32>
      %246 = arith.addf %245, %244 : vector<2x128xf32>
      %247 = arith.divf %245, %246 : vector<2x128xf32>
      %248 = vector.extract_strided_slice %195 {offsets = [0, 256], sizes = [2, 128], strides = [1, 1]} : vector<2x384xf32> to vector<2x128xf32>
      %249 = vector.extract_strided_slice %231 {offsets = [0, 256], sizes = [2, 128], strides = [1, 1]} : vector<2x384xf32> to vector<2x128xf32>
      %250 = arith.mulf %239, %249 : vector<2x128xf32>
      %251 = arith.addf %248, %250 : vector<2x128xf32>
      %252 = math.tanh %251 : vector<2x128xf32>
      %cst_147 = arith.constant 1.000000e+00 : f32
      %253 = vector.broadcast %cst_147 : f32 to vector<2x128xf32>
      %254 = arith.subf %253, %247 : vector<2x128xf32>
      %255 = arith.mulf %254, %252 : vector<2x128xf32>
      %256 = arith.mulf %247, %226 : vector<2x128xf32>
      %257 = arith.addf %255, %256 : vector<2x128xf32>
      %258 = arith.addf %226, %257 : vector<2x128xf32>
      %259 = vector.extract_strided_slice %193 {offsets = [4, 0], sizes = [2, 384], strides = [1, 1]} : vector<16x384xf32> to vector<2x384xf32>
      %260 = vector.extract_strided_slice %193 {offsets = [6, 0], sizes = [2, 384], strides = [1, 1]} : vector<16x384xf32> to vector<2x384xf32>
      %261 = vector.extract_strided_slice %257 {offsets = [0, 0], sizes = [2, 64], strides = [1, 1]} : vector<2x128xf32> to vector<2x64xf32>
      %c0_148 = arith.constant 0 : index
      %c0_149 = arith.constant 0 : index
      %262 = vector.load %arg7[%c0_148, %c0_149] : memref<64x384xf32, #tpu.memory_space<vmem>>, vector<64x384xf32>
      %cst_150 = arith.constant dense<0.000000e+00> : vector<2x384xf32>
      %263 = tpu.matmul %261, %262, %cst_150 {dimension_numbers = #tpu.dot_dimension_numbers<[1], [0], [0], [1], [0, 0, 1, 1], [], []>} : vector<2x64xf32>, vector<64x384xf32>, vector<2x384xf32> -> vector<2x384xf32>
      %264 = vector.broadcast %186 : vector<1x384xf32> to vector<2x384xf32>
      %265 = arith.addf %263, %264 : vector<2x384xf32>
      %266 = vector.extract_strided_slice %259 {offsets = [0, 0], sizes = [2, 128], strides = [1, 1]} : vector<2x384xf32> to vector<2x128xf32>
      %267 = vector.extract_strided_slice %265 {offsets = [0, 0], sizes = [2, 128], strides = [1, 1]} : vector<2x384xf32> to vector<2x128xf32>
      %268 = arith.addf %266, %267 : vector<2x128xf32>
      %269 = arith.negf %268 : vector<2x128xf32>
      %270 = math.exp %269 : vector<2x128xf32>
      %cst_151 = arith.constant 1.000000e+00 : f32
      %271 = vector.broadcast %cst_151 : f32 to vector<2x128xf32>
      %272 = arith.addf %271, %270 : vector<2x128xf32>
      %273 = arith.divf %271, %272 : vector<2x128xf32>
      %274 = vector.extract_strided_slice %259 {offsets = [0, 128], sizes = [2, 128], strides = [1, 1]} : vector<2x384xf32> to vector<2x128xf32>
      %275 = vector.extract_strided_slice %265 {offsets = [0, 128], sizes = [2, 128], strides = [1, 1]} : vector<2x384xf32> to vector<2x128xf32>
      %276 = arith.addf %274, %275 : vector<2x128xf32>
      %277 = arith.negf %276 : vector<2x128xf32>
      %278 = math.exp %277 : vector<2x128xf32>
      %cst_152 = arith.constant 1.000000e+00 : f32
      %279 = vector.broadcast %cst_152 : f32 to vector<2x128xf32>
      %280 = arith.addf %279, %278 : vector<2x128xf32>
      %281 = arith.divf %279, %280 : vector<2x128xf32>
      %282 = vector.extract_strided_slice %259 {offsets = [0, 256], sizes = [2, 128], strides = [1, 1]} : vector<2x384xf32> to vector<2x128xf32>
      %283 = vector.extract_strided_slice %265 {offsets = [0, 256], sizes = [2, 128], strides = [1, 1]} : vector<2x384xf32> to vector<2x128xf32>
      %284 = arith.mulf %273, %283 : vector<2x128xf32>
      %285 = arith.addf %282, %284 : vector<2x128xf32>
      %286 = math.tanh %285 : vector<2x128xf32>
      %cst_153 = arith.constant 1.000000e+00 : f32
      %287 = vector.broadcast %cst_153 : f32 to vector<2x128xf32>
      %288 = arith.subf %287, %281 : vector<2x128xf32>
      %289 = arith.mulf %288, %286 : vector<2x128xf32>
      %290 = arith.mulf %281, %257 : vector<2x128xf32>
      %291 = arith.addf %289, %290 : vector<2x128xf32>
      %292 = vector.extract_strided_slice %291 {offsets = [0, 0], sizes = [2, 64], strides = [1, 1]} : vector<2x128xf32> to vector<2x64xf32>
      %c0_154 = arith.constant 0 : index
      %c0_155 = arith.constant 0 : index
      %293 = vector.load %arg7[%c0_154, %c0_155] : memref<64x384xf32, #tpu.memory_space<vmem>>, vector<64x384xf32>
      %cst_156 = arith.constant dense<0.000000e+00> : vector<2x384xf32>
      %294 = tpu.matmul %292, %293, %cst_156 {dimension_numbers = #tpu.dot_dimension_numbers<[1], [0], [0], [1], [0, 0, 1, 1], [], []>} : vector<2x64xf32>, vector<64x384xf32>, vector<2x384xf32> -> vector<2x384xf32>
      %295 = vector.broadcast %186 : vector<1x384xf32> to vector<2x384xf32>
      %296 = arith.addf %294, %295 : vector<2x384xf32>
      %297 = vector.extract_strided_slice %260 {offsets = [0, 0], sizes = [2, 128], strides = [1, 1]} : vector<2x384xf32> to vector<2x128xf32>
      %298 = vector.extract_strided_slice %296 {offsets = [0, 0], sizes = [2, 128], strides = [1, 1]} : vector<2x384xf32> to vector<2x128xf32>
      %299 = arith.addf %297, %298 : vector<2x128xf32>
      %300 = arith.negf %299 : vector<2x128xf32>
      %301 = math.exp %300 : vector<2x128xf32>
      %cst_157 = arith.constant 1.000000e+00 : f32
      %302 = vector.broadcast %cst_157 : f32 to vector<2x128xf32>
      %303 = arith.addf %302, %301 : vector<2x128xf32>
      %304 = arith.divf %302, %303 : vector<2x128xf32>
      %305 = vector.extract_strided_slice %260 {offsets = [0, 128], sizes = [2, 128], strides = [1, 1]} : vector<2x384xf32> to vector<2x128xf32>
      %306 = vector.extract_strided_slice %296 {offsets = [0, 128], sizes = [2, 128], strides = [1, 1]} : vector<2x384xf32> to vector<2x128xf32>
      %307 = arith.addf %305, %306 : vector<2x128xf32>
      %308 = arith.negf %307 : vector<2x128xf32>
      %309 = math.exp %308 : vector<2x128xf32>
      %cst_158 = arith.constant 1.000000e+00 : f32
      %310 = vector.broadcast %cst_158 : f32 to vector<2x128xf32>
      %311 = arith.addf %310, %309 : vector<2x128xf32>
      %312 = arith.divf %310, %311 : vector<2x128xf32>
      %313 = vector.extract_strided_slice %260 {offsets = [0, 256], sizes = [2, 128], strides = [1, 1]} : vector<2x384xf32> to vector<2x128xf32>
      %314 = vector.extract_strided_slice %296 {offsets = [0, 256], sizes = [2, 128], strides = [1, 1]} : vector<2x384xf32> to vector<2x128xf32>
      %315 = arith.mulf %304, %314 : vector<2x128xf32>
      %316 = arith.addf %313, %315 : vector<2x128xf32>
      %317 = math.tanh %316 : vector<2x128xf32>
      %cst_159 = arith.constant 1.000000e+00 : f32
      %318 = vector.broadcast %cst_159 : f32 to vector<2x128xf32>
      %319 = arith.subf %318, %312 : vector<2x128xf32>
      %320 = arith.mulf %319, %317 : vector<2x128xf32>
      %321 = arith.mulf %312, %291 : vector<2x128xf32>
      %322 = arith.addf %320, %321 : vector<2x128xf32>
      %323 = arith.addf %291, %322 : vector<2x128xf32>
      %324 = vector.extract_strided_slice %193 {offsets = [8, 0], sizes = [2, 384], strides = [1, 1]} : vector<16x384xf32> to vector<2x384xf32>
      %325 = vector.extract_strided_slice %193 {offsets = [10, 0], sizes = [2, 384], strides = [1, 1]} : vector<16x384xf32> to vector<2x384xf32>
      %326 = vector.extract_strided_slice %322 {offsets = [0, 0], sizes = [2, 64], strides = [1, 1]} : vector<2x128xf32> to vector<2x64xf32>
      %c0_160 = arith.constant 0 : index
      %c0_161 = arith.constant 0 : index
      %327 = vector.load %arg7[%c0_160, %c0_161] : memref<64x384xf32, #tpu.memory_space<vmem>>, vector<64x384xf32>
      %cst_162 = arith.constant dense<0.000000e+00> : vector<2x384xf32>
      %328 = tpu.matmul %326, %327, %cst_162 {dimension_numbers = #tpu.dot_dimension_numbers<[1], [0], [0], [1], [0, 0, 1, 1], [], []>} : vector<2x64xf32>, vector<64x384xf32>, vector<2x384xf32> -> vector<2x384xf32>
      %329 = vector.broadcast %186 : vector<1x384xf32> to vector<2x384xf32>
      %330 = arith.addf %328, %329 : vector<2x384xf32>
      %331 = vector.extract_strided_slice %324 {offsets = [0, 0], sizes = [2, 128], strides = [1, 1]} : vector<2x384xf32> to vector<2x128xf32>
      %332 = vector.extract_strided_slice %330 {offsets = [0, 0], sizes = [2, 128], strides = [1, 1]} : vector<2x384xf32> to vector<2x128xf32>
      %333 = arith.addf %331, %332 : vector<2x128xf32>
      %334 = arith.negf %333 : vector<2x128xf32>
      %335 = math.exp %334 : vector<2x128xf32>
      %cst_163 = arith.constant 1.000000e+00 : f32
      %336 = vector.broadcast %cst_163 : f32 to vector<2x128xf32>
      %337 = arith.addf %336, %335 : vector<2x128xf32>
      %338 = arith.divf %336, %337 : vector<2x128xf32>
      %339 = vector.extract_strided_slice %324 {offsets = [0, 128], sizes = [2, 128], strides = [1, 1]} : vector<2x384xf32> to vector<2x128xf32>
      %340 = vector.extract_strided_slice %330 {offsets = [0, 128], sizes = [2, 128], strides = [1, 1]} : vector<2x384xf32> to vector<2x128xf32>
      %341 = arith.addf %339, %340 : vector<2x128xf32>
      %342 = arith.negf %341 : vector<2x128xf32>
      %343 = math.exp %342 : vector<2x128xf32>
      %cst_164 = arith.constant 1.000000e+00 : f32
      %344 = vector.broadcast %cst_164 : f32 to vector<2x128xf32>
      %345 = arith.addf %344, %343 : vector<2x128xf32>
      %346 = arith.divf %344, %345 : vector<2x128xf32>
      %347 = vector.extract_strided_slice %324 {offsets = [0, 256], sizes = [2, 128], strides = [1, 1]} : vector<2x384xf32> to vector<2x128xf32>
      %348 = vector.extract_strided_slice %330 {offsets = [0, 256], sizes = [2, 128], strides = [1, 1]} : vector<2x384xf32> to vector<2x128xf32>
      %349 = arith.mulf %338, %348 : vector<2x128xf32>
      %350 = arith.addf %347, %349 : vector<2x128xf32>
      %351 = math.tanh %350 : vector<2x128xf32>
      %cst_165 = arith.constant 1.000000e+00 : f32
      %352 = vector.broadcast %cst_165 : f32 to vector<2x128xf32>
      %353 = arith.subf %352, %346 : vector<2x128xf32>
      %354 = arith.mulf %353, %351 : vector<2x128xf32>
      %355 = arith.mulf %346, %322 : vector<2x128xf32>
      %356 = arith.addf %354, %355 : vector<2x128xf32>
      %357 = vector.extract_strided_slice %356 {offsets = [0, 0], sizes = [2, 64], strides = [1, 1]} : vector<2x128xf32> to vector<2x64xf32>
      %c0_166 = arith.constant 0 : index
      %c0_167 = arith.constant 0 : index
      %358 = vector.load %arg7[%c0_166, %c0_167] : memref<64x384xf32, #tpu.memory_space<vmem>>, vector<64x384xf32>
      %cst_168 = arith.constant dense<0.000000e+00> : vector<2x384xf32>
      %359 = tpu.matmul %357, %358, %cst_168 {dimension_numbers = #tpu.dot_dimension_numbers<[1], [0], [0], [1], [0, 0, 1, 1], [], []>} : vector<2x64xf32>, vector<64x384xf32>, vector<2x384xf32> -> vector<2x384xf32>
      %360 = vector.broadcast %186 : vector<1x384xf32> to vector<2x384xf32>
      %361 = arith.addf %359, %360 : vector<2x384xf32>
      %362 = vector.extract_strided_slice %325 {offsets = [0, 0], sizes = [2, 128], strides = [1, 1]} : vector<2x384xf32> to vector<2x128xf32>
      %363 = vector.extract_strided_slice %361 {offsets = [0, 0], sizes = [2, 128], strides = [1, 1]} : vector<2x384xf32> to vector<2x128xf32>
      %364 = arith.addf %362, %363 : vector<2x128xf32>
      %365 = arith.negf %364 : vector<2x128xf32>
      %366 = math.exp %365 : vector<2x128xf32>
      %cst_169 = arith.constant 1.000000e+00 : f32
      %367 = vector.broadcast %cst_169 : f32 to vector<2x128xf32>
      %368 = arith.addf %367, %366 : vector<2x128xf32>
      %369 = arith.divf %367, %368 : vector<2x128xf32>
      %370 = vector.extract_strided_slice %325 {offsets = [0, 128], sizes = [2, 128], strides = [1, 1]} : vector<2x384xf32> to vector<2x128xf32>
      %371 = vector.extract_strided_slice %361 {offsets = [0, 128], sizes = [2, 128], strides = [1, 1]} : vector<2x384xf32> to vector<2x128xf32>
      %372 = arith.addf %370, %371 : vector<2x128xf32>
      %373 = arith.negf %372 : vector<2x128xf32>
      %374 = math.exp %373 : vector<2x128xf32>
      %cst_170 = arith.constant 1.000000e+00 : f32
      %375 = vector.broadcast %cst_170 : f32 to vector<2x128xf32>
      %376 = arith.addf %375, %374 : vector<2x128xf32>
      %377 = arith.divf %375, %376 : vector<2x128xf32>
      %378 = vector.extract_strided_slice %325 {offsets = [0, 256], sizes = [2, 128], strides = [1, 1]} : vector<2x384xf32> to vector<2x128xf32>
      %379 = vector.extract_strided_slice %361 {offsets = [0, 256], sizes = [2, 128], strides = [1, 1]} : vector<2x384xf32> to vector<2x128xf32>
      %380 = arith.mulf %369, %379 : vector<2x128xf32>
      %381 = arith.addf %378, %380 : vector<2x128xf32>
      %382 = math.tanh %381 : vector<2x128xf32>
      %cst_171 = arith.constant 1.000000e+00 : f32
      %383 = vector.broadcast %cst_171 : f32 to vector<2x128xf32>
      %384 = arith.subf %383, %377 : vector<2x128xf32>
      %385 = arith.mulf %384, %382 : vector<2x128xf32>
      %386 = arith.mulf %377, %356 : vector<2x128xf32>
      %387 = arith.addf %385, %386 : vector<2x128xf32>
      %388 = arith.addf %356, %387 : vector<2x128xf32>
      %389 = vector.extract_strided_slice %193 {offsets = [12, 0], sizes = [2, 384], strides = [1, 1]} : vector<16x384xf32> to vector<2x384xf32>
      %390 = vector.extract_strided_slice %193 {offsets = [14, 0], sizes = [2, 384], strides = [1, 1]} : vector<16x384xf32> to vector<2x384xf32>
      %391 = vector.extract_strided_slice %387 {offsets = [0, 0], sizes = [2, 64], strides = [1, 1]} : vector<2x128xf32> to vector<2x64xf32>
      %c0_172 = arith.constant 0 : index
      %c0_173 = arith.constant 0 : index
      %392 = vector.load %arg7[%c0_172, %c0_173] : memref<64x384xf32, #tpu.memory_space<vmem>>, vector<64x384xf32>
      %cst_174 = arith.constant dense<0.000000e+00> : vector<2x384xf32>
      %393 = tpu.matmul %391, %392, %cst_174 {dimension_numbers = #tpu.dot_dimension_numbers<[1], [0], [0], [1], [0, 0, 1, 1], [], []>} : vector<2x64xf32>, vector<64x384xf32>, vector<2x384xf32> -> vector<2x384xf32>
      %394 = vector.broadcast %186 : vector<1x384xf32> to vector<2x384xf32>
      %395 = arith.addf %393, %394 : vector<2x384xf32>
      %396 = vector.extract_strided_slice %389 {offsets = [0, 0], sizes = [2, 128], strides = [1, 1]} : vector<2x384xf32> to vector<2x128xf32>
      %397 = vector.extract_strided_slice %395 {offsets = [0, 0], sizes = [2, 128], strides = [1, 1]} : vector<2x384xf32> to vector<2x128xf32>
      %398 = arith.addf %396, %397 : vector<2x128xf32>
      %399 = arith.negf %398 : vector<2x128xf32>
      %400 = math.exp %399 : vector<2x128xf32>
      %cst_175 = arith.constant 1.000000e+00 : f32
      %401 = vector.broadcast %cst_175 : f32 to vector<2x128xf32>
      %402 = arith.addf %401, %400 : vector<2x128xf32>
      %403 = arith.divf %401, %402 : vector<2x128xf32>
      %404 = vector.extract_strided_slice %389 {offsets = [0, 128], sizes = [2, 128], strides = [1, 1]} : vector<2x384xf32> to vector<2x128xf32>
      %405 = vector.extract_strided_slice %395 {offsets = [0, 128], sizes = [2, 128], strides = [1, 1]} : vector<2x384xf32> to vector<2x128xf32>
      %406 = arith.addf %404, %405 : vector<2x128xf32>
      %407 = arith.negf %406 : vector<2x128xf32>
      %408 = math.exp %407 : vector<2x128xf32>
      %cst_176 = arith.constant 1.000000e+00 : f32
      %409 = vector.broadcast %cst_176 : f32 to vector<2x128xf32>
      %410 = arith.addf %409, %408 : vector<2x128xf32>
      %411 = arith.divf %409, %410 : vector<2x128xf32>
      %412 = vector.extract_strided_slice %389 {offsets = [0, 256], sizes = [2, 128], strides = [1, 1]} : vector<2x384xf32> to vector<2x128xf32>
      %413 = vector.extract_strided_slice %395 {offsets = [0, 256], sizes = [2, 128], strides = [1, 1]} : vector<2x384xf32> to vector<2x128xf32>
      %414 = arith.mulf %403, %413 : vector<2x128xf32>
      %415 = arith.addf %412, %414 : vector<2x128xf32>
      %416 = math.tanh %415 : vector<2x128xf32>
      %cst_177 = arith.constant 1.000000e+00 : f32
      %417 = vector.broadcast %cst_177 : f32 to vector<2x128xf32>
      %418 = arith.subf %417, %411 : vector<2x128xf32>
      %419 = arith.mulf %418, %416 : vector<2x128xf32>
      %420 = arith.mulf %411, %387 : vector<2x128xf32>
      %421 = arith.addf %419, %420 : vector<2x128xf32>
      %422 = vector.extract_strided_slice %421 {offsets = [0, 0], sizes = [2, 64], strides = [1, 1]} : vector<2x128xf32> to vector<2x64xf32>
      %c0_178 = arith.constant 0 : index
      %c0_179 = arith.constant 0 : index
      %423 = vector.load %arg7[%c0_178, %c0_179] : memref<64x384xf32, #tpu.memory_space<vmem>>, vector<64x384xf32>
      %cst_180 = arith.constant dense<0.000000e+00> : vector<2x384xf32>
      %424 = tpu.matmul %422, %423, %cst_180 {dimension_numbers = #tpu.dot_dimension_numbers<[1], [0], [0], [1], [0, 0, 1, 1], [], []>} : vector<2x64xf32>, vector<64x384xf32>, vector<2x384xf32> -> vector<2x384xf32>
      %425 = vector.broadcast %186 : vector<1x384xf32> to vector<2x384xf32>
      %426 = arith.addf %424, %425 : vector<2x384xf32>
      %427 = vector.extract_strided_slice %390 {offsets = [0, 0], sizes = [2, 128], strides = [1, 1]} : vector<2x384xf32> to vector<2x128xf32>
      %428 = vector.extract_strided_slice %426 {offsets = [0, 0], sizes = [2, 128], strides = [1, 1]} : vector<2x384xf32> to vector<2x128xf32>
      %429 = arith.addf %427, %428 : vector<2x128xf32>
      %430 = arith.negf %429 : vector<2x128xf32>
      %431 = math.exp %430 : vector<2x128xf32>
      %cst_181 = arith.constant 1.000000e+00 : f32
      %432 = vector.broadcast %cst_181 : f32 to vector<2x128xf32>
      %433 = arith.addf %432, %431 : vector<2x128xf32>
      %434 = arith.divf %432, %433 : vector<2x128xf32>
      %435 = vector.extract_strided_slice %390 {offsets = [0, 128], sizes = [2, 128], strides = [1, 1]} : vector<2x384xf32> to vector<2x128xf32>
      %436 = vector.extract_strided_slice %426 {offsets = [0, 128], sizes = [2, 128], strides = [1, 1]} : vector<2x384xf32> to vector<2x128xf32>
      %437 = arith.addf %435, %436 : vector<2x128xf32>
      %438 = arith.negf %437 : vector<2x128xf32>
      %439 = math.exp %438 : vector<2x128xf32>
      %cst_182 = arith.constant 1.000000e+00 : f32
      %440 = vector.broadcast %cst_182 : f32 to vector<2x128xf32>
      %441 = arith.addf %440, %439 : vector<2x128xf32>
      %442 = arith.divf %440, %441 : vector<2x128xf32>
      %443 = vector.extract_strided_slice %390 {offsets = [0, 256], sizes = [2, 128], strides = [1, 1]} : vector<2x384xf32> to vector<2x128xf32>
      %444 = vector.extract_strided_slice %426 {offsets = [0, 256], sizes = [2, 128], strides = [1, 1]} : vector<2x384xf32> to vector<2x128xf32>
      %445 = arith.mulf %434, %444 : vector<2x128xf32>
      %446 = arith.addf %443, %445 : vector<2x128xf32>
      %447 = math.tanh %446 : vector<2x128xf32>
      %cst_183 = arith.constant 1.000000e+00 : f32
      %448 = vector.broadcast %cst_183 : f32 to vector<2x128xf32>
      %449 = arith.subf %448, %442 : vector<2x128xf32>
      %450 = arith.mulf %449, %447 : vector<2x128xf32>
      %451 = arith.mulf %442, %421 : vector<2x128xf32>
      %452 = arith.addf %450, %451 : vector<2x128xf32>
      %453 = arith.addf %421, %452 : vector<2x128xf32>
      %c8_i32 = arith.constant 8 : i32
      %454 = arith.muli %arg13, %c8_i32 : i32
      %455 = tpu.assume_multiple %454, 8 : i32
      %456 = tpu.concatenate %258, %323, %388, %453 in 0 : vector<2x128xf32>, vector<2x128xf32>, vector<2x128xf32>, vector<2x128xf32> -> vector<8x128xf32>
      %457 = arith.index_cast %455 : i32 to index
      %c0_184 = arith.constant 0 : index
      %458 = vector.load %arg10[%457, %c0_184] : memref<144x128xf32, #tpu.memory_space<vmem>>, vector<8x128xf32>
      tpu.vector_store %arg10[%457, %c0_184], %456 {strides = array<i32>} : memref<144x128xf32, #tpu.memory_space<vmem>>, vector<8x128xf32>,
      scf.yield %452 : vector<2x128xf32>
    }
    %c18_i32_134 = arith.constant 18 : i32
    return
  }
}

</mosaic_0001>

<llo_original>
// kernel: gru_block_forward.1
$region0: #{gru_block_forward.1}
  #allocation0 [shape = 'u32[]', space=smem, size = 0x4, offset = 0x4, fixed_abs, tag = 'smem constant byte address 0x4 - core index']
  #allocation1 [shape = 'u32[144,128]{1,0:T(1,128)}', space=vmem, size = 0x12000, scoped, tag = 'internal scratch']
  #allocation2 [shape = 'f32[320,128]{1,0:T(8,128)}', space=vmem, size = 0x28000, scoped, tag = 'scratch operand']
  #allocation3 [shape = 'f32[288,384]{1,0:T(8,128)}', space=vmem, size = 0x6c000, scoped, tag = 'scratch operand']
  %s0 = inlined_call_operand.vmem [shape: f32[320,128], index: 0, kind: input, shape index: {}]
  %s1 = inlined_call_operand.vmem [shape: f32[128,128], index: 1, kind: input, shape index: {}]
  %s2 = inlined_call_operand.vmem [shape: f32[3,128,128], index: 2, kind: input, shape index: {}]
  %s3 = inlined_call_operand.vmem [shape: f32[1,128], index: 3, kind: input, shape index: {}]
  %s4 = inlined_call_operand.vmem [shape: f32[288,128], index: 4, kind: input, shape index: {}]
  %s5 = inlined_call_operand.vmem [shape: f32[128,384], index: 5, kind: input, shape index: {}]
  %s6 = inlined_call_operand.vmem [shape: f32[1,384], index: 6, kind: input, shape index: {}]
  %s7 = inlined_call_operand.vmem [shape: f32[64,384], index: 7, kind: input, shape index: {}]
  %s8 = inlined_call_operand.vmem [shape: f32[1,384], index: 8, kind: input, shape index: {}]
  %s9 = inlined_call_operand.vmem [shape: f32[144,128], index: 9, kind: output, shape index: {0}]
  %s10 = inlined_call_operand.vmem [shape: f32[144,128], index: 10, kind: output, shape index: {1}]
  %11 = xla_tuple %s9, %s10
  %s12 = sld [smem:[#allocation0]]
  $region61: #{gru_block_forward.1} parent=0
    _
  %s14 = ssub.s32 1, %s12
  %s15 = scalar_select 0, %s14, %s12
  // Predicated region
  $region2: #{gru_block_forward.1} parent=0 // pred_check
    _
  $region3: #{gru_block_forward.1} parent=0 // pred_check_branch
    %17 = sbr.rel (0) target = $region5
  $region4: #{gru_block_forward.1} parent=0 // pred_region
    _
  $region5: #{gru_block_forward.1} parent=0 // pred_fallthru
    _
  // Predicated region
  $region6: #{gru_block_forward.1} parent=0 // pred_check
    _
  $region7: #{gru_block_forward.1} parent=0 // pred_check_branch
    %19 = sbr.rel (0) target = $region9
  $region8: #{gru_block_forward.1} parent=0 // pred_region
    _
  $region9: #{gru_block_forward.1} parent=0 // pred_fallthru
    _
  // Predicated region
  $region10: #{gru_block_forward.1} parent=0 // pred_check
    _
  $region11: #{gru_block_forward.1} parent=0 // pred_check_branch
    %21 = sbr.rel (0) target = $region13
  $region12: #{gru_block_forward.1} parent=0 // pred_region
    _
  $region13: #{gru_block_forward.1} parent=0 // pred_fallthru
    _
  // Predicated region
  $region14: #{gru_block_forward.1} parent=0 // pred_check
    _
  $region15: #{gru_block_forward.1} parent=0 // pred_check_branch
    %23 = sbr.rel (0) target = $region17
  $region16: #{gru_block_forward.1} parent=0 // pred_region
    _
  $region17: #{gru_block_forward.1} parent=0 // pred_fallthru
    _
  // Predicated region
  $region18: #{gru_block_forward.1} parent=0 // pred_check
    _
  $region19: #{gru_block_forward.1} parent=0 // pred_check_branch
    %25 = sbr.rel (0) target = $region21
  $region20: #{gru_block_forward.1} parent=0 // pred_region
    _
  $region21: #{gru_block_forward.1} parent=0 // pred_fallthru
    _
  // Predicated region
  $region22: #{gru_block_forward.1} parent=0 // pred_check
    _
  $region23: #{gru_block_forward.1} parent=0 // pred_check_branch
    %27 = sbr.rel (0) target = $region25
  $region24: #{gru_block_forward.1} parent=0 // pred_region
    _
  $region25: #{gru_block_forward.1} parent=0 // pred_fallthru
    _
  // Predicated region
  $region26: #{gru_block_forward.1} parent=0 // pred_check
    _
  $region27: #{gru_block_forward.1} parent=0 // pred_check_branch
    %29 = sbr.rel (0) target = $region29
  $region28: #{gru_block_forward.1} parent=0 // pred_region
    _
  $region29: #{gru_block_forward.1} parent=0 // pred_fallthru
    _
  // Predicated region
  $region30: #{gru_block_forward.1} parent=0 // pred_check
    _
  $region31: #{gru_block_forward.1} parent=0 // pred_check_branch
    %31 = sbr.rel (0) target = $region33
  $region32: #{gru_block_forward.1} parent=0 // pred_region
    _
  $region33: #{gru_block_forward.1} parent=0 // pred_fallthru
    _
  // Predicated region
  $region34: #{gru_block_forward.1} parent=0 // pred_check
    _
  $region35: #{gru_block_forward.1} parent=0 // pred_check_branch
    %33 = sbr.rel (0) target = $region37
  $region36: #{gru_block_forward.1} parent=0 // pred_region
    _
  $region37: #{gru_block_forward.1} parent=0 // pred_fallthru
    _
  %v34 = vld [vmem:[%s6] sm:$0x7]
  %v35 = vld [vmem:[%s4] sm:$0xff]
  %v36 = vld [vmem:[%s4 + $0x8] sm:$0xff]
  %v37 = vld [vmem:[%s4 + $0x10] sm:$0xff]
  %v38 = vld [vmem:[%s4 + $0x18] sm:$0xff]
  %v39 = vld [vmem:[%s4 + $0x20] sm:$0xff]
  %v40 = vld [vmem:[%s4 + $0x28] sm:$0xff]
  %v41 = vld [vmem:[%s4 + $0x30] sm:$0xff]
  %v42 = vld [vmem:[%s4 + $0x38] sm:$0xff]
  %v43 = vld [vmem:[%s4 + $0x40] sm:$0xff]
  %v44 = vld [vmem:[%s4 + $0x48] sm:$0xff]
  %v45 = vld [vmem:[%s4 + $0x50] sm:$0xff]
  %v46 = vld [vmem:[%s4 + $0x58] sm:$0xff]
  %v47 = vld [vmem:[%s5] sm:$0xff]
  %v48 = vld [vmem:[%s5 + $0x8] sm:$0xff]
  %v49 = vld [vmem:[%s5 + $0x10] sm:$0xff]
  %v50 = vld [vmem:[%s5 + $0x18] sm:$0xff]
  %v51 = vld [vmem:[%s5 + $0x20] sm:$0xff]
  %v52 = vld [vmem:[%s5 + $0x28] sm:$0xff]
  %v53 = vld [vmem:[%s5 + $0x30] sm:$0xff]
  %v54 = vld [vmem:[%s5 + $0x38] sm:$0xff]
  %v55 = vld [vmem:[%s5 + $0x40] sm:$0xff]
  %v56 = vld [vmem:[%s5 + $0x48] sm:$0xff]
  %v57 = vld [vmem:[%s5 + $0x50] sm:$0xff]
  %v58 = vld [vmem:[%s5 + $0x58] sm:$0xff]
  %v59 = vld [vmem:[%s5 + $0x60] sm:$0xff]
  %v60 = vld [vmem:[%s5 + $0x68] sm:$0xff]
  %v61 = vld [vmem:[%s5 + $0x70] sm:$0xff]
  %v62 = vld [vmem:[%s5 + $0x78] sm:$0xff]
  %v63 = vld [vmem:[%s5 + $0x80] sm:$0xff]
  %v64 = vld [vmem:[%s5 + $0x88] sm:$0xff]
  %v65 = vld [vmem:[%s5 + $0x90] sm:$0xff]
  %v66 = vld [vmem:[%s5 + $0x98] sm:$0xff]
  %v67 = vld [vmem:[%s5 + $0xa0] sm:$0xff]
  %v68 = vld [vmem:[%s5 + $0xa8] sm:$0xff]
  %v69 = vld [vmem:[%s5 + $0xb0] sm:$0xff]
  %v70 = vld [vmem:[%s5 + $0xb8] sm:$0xff]
  %v71 = vld [vmem:[%s5 + $0xc0] sm:$0xff]
  %v72 = vld [vmem:[%s5 + $0xc8] sm:$0xff]
  %v73 = vld [vmem:[%s5 + $0xd0] sm:$0xff]
  %v74 = vld [vmem:[%s5 + $0xd8] sm:$0xff]
  %v75 = vld [vmem:[%s5 + $0xe0] sm:$0xff]
  %v76 = vld [vmem:[%s5 + $0xe8] sm:$0xff]
  %v77 = vld [vmem:[%s5 + $0xf0] sm:$0xff]
  %v78 = vld [vmem:[%s5 + $0xf8] sm:$0xff]
  %v79 = vld [vmem:[%s5 + $0x100] sm:$0xff]
  %v80 = vld [vmem:[%s5 + $0x108] sm:$0xff]
  %v81 = vld [vmem:[%s5 + $0x110] sm:$0xff]
  %v82 = vld [vmem:[%s5 + $0x118] sm:$0xff]
  %v83 = vld [vmem:[%s5 + $0x120] sm:$0xff]
  %v84 = vld [vmem:[%s5 + $0x128] sm:$0xff]
  %v85 = vld [vmem:[%s5 + $0x130] sm:$0xff]
  %v86 = vld [vmem:[%s5 + $0x138] sm:$0xff]
  %v87 = vld [vmem:[%s5 + $0x140] sm:$0xff]
  %v88 = vld [vmem:[%s5 + $0x148] sm:$0xff]
  %v89 = vld [vmem:[%s5 + $0x150] sm:$0xff]
  %v90 = vld [vmem:[%s5 + $0x158] sm:$0xff]
  %v91 = vld [vmem:[%s5 + $0x160] sm:$0xff]
  %v92 = vld [vmem:[%s5 + $0x168] sm:$0xff]
  %v93 = vld [vmem:[%s5 + $0x170] sm:$0xff]
  %v94 = vld [vmem:[%s5 + $0x178] sm:$0xff]
  %v96 = vlaneseq
  %v97 = vshrl.u32 %v96, 7
  %v98 = vsub.s32 0, %v97
  %v99 = vrot.slane %v34, %v98
  %v100 = vlaneseq
  %v101 = vshrl.u32 %v100, 7
  %v102 = vsub.s32 1, %v101
  %v103 = vrot.slane %v34, %v102
  %v104 = vlaneseq
  %v105 = vshrl.u32 %v104, 7
  %v106 = vsub.s32 2, %v105
  %v107 = vrot.slane %v34, %v106
  %111 = vmatprep.subr.mxu0 %v48
  %112 = vmatpush1.msra.mxu0 %v47
  %113 = vmatprep.subr.mxu0 %v51
  %114 = vmatpush1.msra.mxu0 %v50
  %115 = vmatprep.subr.mxu0 %v54
  %116 = vmatpush1.msra.mxu0 %v53
  %117 = vmatprep.subr.mxu0 %v57
  %118 = vmatpush1.msra.mxu0 %v56
  %119 = vmatprep.subr.mxu0 %v60
  %120 = vmatpush1.msra.mxu0 %v59
  %121 = vmatprep.subr.mxu0 %v63
  %122 = vmatpush1.msra.mxu0 %v62
  %123 = vmatprep.subr.mxu0 %v66
  %124 = vmatpush1.msra.mxu0 %v65
  %125 = vmatprep.subr.mxu0 %v69
  %126 = vmatpush1.msra.mxu0 %v68
  %127 = vmatprep.subr.mxu0 %v72
  %128 = vmatpush1.msra.mxu0 %v71
  %129 = vmatprep.subr.mxu0 %v75
  %130 = vmatpush1.msra.mxu0 %v74
  %131 = vmatprep.subr.mxu0 %v78
  %132 = vmatpush1.msra.mxu0 %v77
  %133 = vmatprep.subr.mxu0 %v81
  %134 = vmatpush1.msra.mxu0 %v80
  %135 = vmatprep.subr.mxu0 %v84
  %136 = vmatpush1.msra.mxu0 %v83
  %137 = vmatprep.subr.mxu0 %v87
  %138 = vmatpush1.msra.mxu0 %v86
  %139 = vmatprep.subr.mxu0 %v90
  %140 = vmatpush1.msra.mxu0 %v89
  %141 = vmatprep.subr.mxu0 %v93
  %142 = vmatpush1.msra.mxu0 %v92
  %143 = vmatprep.subr.mxu0 0.0
  %144 = vmatpush1.msra.mxu0 0.0
  %145 = vmatprep.subr.mxu0 0.0
  %146 = vmatpush1.msra.mxu0 0.0
  %147 = vmatprep.subr.mxu0 0.0
  %148 = vmatpush1.msra.mxu0 0.0
  %149 = vmatprep.subr.mxu0 0.0
  %150 = vmatpush1.msra.mxu0 0.0
  %151 = vmatprep.subr.mxu0 0.0
  %152 = vmatpush1.msra.mxu0 0.0
  %153 = vmatprep.subr.mxu0 0.0
  %154 = vmatpush1.msra.mxu0 0.0
  %155 = vmatprep.subr.mxu0 0.0
  %156 = vmatpush1.msra.mxu0 0.0
  %157 = vmatprep.subr.mxu0 0.0
  %158 = vmatpush1.msra.mxu0 0.0
  %159 = vmatprep.subr.mxu0 0.0
  %160 = vmatpush1.msra.mxu0 0.0
  %161 = vmatprep.subr.mxu0 0.0
  %162 = vmatpush1.msra.mxu0 0.0
  %163 = vmatprep.subr.mxu0 0.0
  %164 = vmatpush1.msra.mxu0 0.0
  %165 = vmatprep.subr.mxu0 0.0
  %166 = vmatpush1.msra.mxu0 0.0
  %167 = vmatprep.subr.mxu0 0.0
  %168 = vmatpush1.msra.mxu0 0.0
  %169 = vmatprep.subr.mxu0 0.0
  %170 = vmatpush1.msra.mxu0 0.0
  %171 = vmatprep.subr.mxu0 0.0
  %172 = vmatpush1.msra.mxu0 0.0
  %173 = vmatprep.subr.mxu0 0.0
  %174 = vmatpush1.msra.mxu0 0.0
  %175 = vmatprep.mubr.f32.mxu0 0.0
  %176 = vmatmul.mubr.f32.gmra.mrb[0].mxu0 %v35
  %v177 = vpop.f32.mrb[0].mxu0
  %v178 = vadd.f32 %v99, %v177
  %v179 = vpop.f32.mrb[0].mxu0
  %v180 = vadd.f32 %v103, %v179
  %181 = vmatprep.mubr.f32.mxu0 0.0
  %182 = vmatmul.mubr.f32.gmra.mrb[0].mxu0 %v36
  %v183 = vpop.f32.mrb[0].mxu0
  %v184 = vadd.f32 %v99, %v183
  %v185 = vpop.f32.mrb[0].mxu0
  %v186 = vadd.f32 %v103, %v185
  %187 = vmatprep.mubr.f32.mxu0 0.0
  %188 = vmatmul.mubr.f32.gmra.mrb[0].mxu0 %v37
  %v189 = vpop.f32.mrb[0].mxu0
  %v190 = vadd.f32 %v99, %v189
  %v191 = vpop.f32.mrb[0].mxu0
  %v192 = vadd.f32 %v103, %v191
  %193 = vmatprep.mubr.f32.mxu0 0.0
  %194 = vmatmul.mubr.f32.gmra.mrb[0].mxu0 %v38
  %v195 = vpop.f32.mrb[0].mxu0
  %v196 = vadd.f32 %v99, %v195
  %v197 = vpop.f32.mrb[0].mxu0
  %v198 = vadd.f32 %v103, %v197
  %199 = vmatprep.mubr.f32.mxu0 0.0
  %200 = vmatmul.mubr.f32.gmra.mrb[0].mxu0 %v39
  %v201 = vpop.f32.mrb[0].mxu0
  %v202 = vadd.f32 %v99, %v201
  %v203 = vpop.f32.mrb[0].mxu0
  %v204 = vadd.f32 %v103, %v203
  %205 = vmatprep.mubr.f32.mxu0 0.0
  %206 = vmatmul.mubr.f32.gmra.mrb[0].mxu0 %v40
  %v207 = vpop.f32.mrb[0].mxu0
  %v208 = vadd.f32 %v99, %v207
  %v209 = vpop.f32.mrb[0].mxu0
  %v210 = vadd.f32 %v103, %v209
  %211 = vmatprep.mubr.f32.mxu0 0.0
  %212 = vmatmul.mubr.f32.gmra.mrb[0].mxu0 %v41
  %v213 = vpop.f32.mrb[0].mxu0
  %v214 = vadd.f32 %v99, %v213
  %v215 = vpop.f32.mrb[0].mxu0
  %v216 = vadd.f32 %v103, %v215
  %217 = vmatprep.mubr.f32.mxu0 0.0
  %218 = vmatmul.mubr.f32.gmra.mrb[0].mxu0 %v42
  %v219 = vpop.f32.mrb[0].mxu0
  %v220 = vadd.f32 %v99, %v219
  %v221 = vpop.f32.mrb[0].mxu0
  %v222 = vadd.f32 %v103, %v221
  %223 = vmatprep.mubr.f32.mxu0 0.0
  %224 = vmatmul.mubr.f32.gmra.mrb[0].mxu0 %v43
  %v225 = vpop.f32.mrb[0].mxu0
  %v226 = vadd.f32 %v99, %v225
  %v227 = vpop.f32.mrb[0].mxu0
  %v228 = vadd.f32 %v103, %v227
  %229 = vmatprep.mubr.f32.mxu0 0.0
  %230 = vmatmul.mubr.f32.gmra.mrb[0].mxu0 %v44
  %v231 = vpop.f32.mrb[0].mxu0
  %v232 = vadd.f32 %v99, %v231
  %v233 = vpop.f32.mrb[0].mxu0
  %v234 = vadd.f32 %v103, %v233
  %235 = vmatprep.mubr.f32.mxu0 0.0
  %236 = vmatmul.mubr.f32.gmra.mrb[0].mxu0 %v45
  %v237 = vpop.f32.mrb[0].mxu0
  %v238 = vadd.f32 %v99, %v237
  %v239 = vpop.f32.mrb[0].mxu0
  %v240 = vadd.f32 %v103, %v239
  %241 = vmatprep.mubr.f32.mxu0 0.0
  %242 = vmatmul.mubr.f32.gmra.mrb[0].mxu0 %v46
  %v243 = vpop.f32.mrb[0].mxu0
  %v244 = vadd.f32 %v99, %v243
  %v245 = vpop.f32.mrb[0].mxu0
  %v246 = vadd.f32 %v103, %v245
  %247 = vdwg.mxu0
  %248 = vmatprep.subr.mxu0 0.0
  %249 = vmatpush1.msra.mxu0 %v49
  %250 = vmatprep.subr.mxu0 0.0
  %251 = vmatpush1.msra.mxu0 %v52
  %252 = vmatprep.subr.mxu0 0.0
  %253 = vmatpush1.msra.mxu0 %v55
  %254 = vmatprep.subr.mxu0 0.0
  %255 = vmatpush1.msra.mxu0 %v58
  %256 = vmatprep.subr.mxu0 0.0
  %257 = vmatpush1.msra.mxu0 %v61
  %258 = vmatprep.subr.mxu0 0.0
  %259 = vmatpush1.msra.mxu0 %v64
  %260 = vmatprep.subr.mxu0 0.0
  %261 = vmatpush1.msra.mxu0 %v67
  %262 = vmatprep.subr.mxu0 0.0
  %263 = vmatpush1.msra.mxu0 %v70
  %264 = vmatprep.subr.mxu0 0.0
  %265 = vmatpush1.msra.mxu0 %v73
  %266 = vmatprep.subr.mxu0 0.0
  %267 = vmatpush1.msra.mxu0 %v76
  %268 = vmatprep.subr.mxu0 0.0
  %269 = vmatpush1.msra.mxu0 %v79
  %270 = vmatprep.subr.mxu0 0.0
  %271 = vmatpush1.msra.mxu0 %v82
  %272 = vmatprep.subr.mxu0 0.0
  %273 = vmatpush1.msra.mxu0 %v85
  %274 = vmatprep.subr.mxu0 0.0
  %275 = vmatpush1.msra.mxu0 %v88
  %276 = vmatprep.subr.mxu0 0.0
  %277 = vmatpush1.msra.mxu0 %v91
  %278 = vmatprep.subr.mxu0 0.0
  %279 = vmatpush1.msra.mxu0 %v94
  %280 = vmatprep.subr.mxu0 0.0
  %281 = vmatpush1.msra.mxu0 0.0
  %282 = vmatprep.subr.mxu0 0.0
  %283 = vmatpush1.msra.mxu0 0.0
  %284 = vmatprep.subr.mxu0 0.0
  %285 = vmatpush1.msra.mxu0 0.0
  %286 = vmatprep.subr.mxu0 0.0
  %287 = vmatpush1.msra.mxu0 0.0
  %288 = vmatprep.subr.mxu0 0.0
  %289 = vmatpush1.msra.mxu0 0.0
  %290 = vmatprep.subr.mxu0 0.0
  %291 = vmatpush1.msra.mxu0 0.0
  %292 = vmatprep.subr.mxu0 0.0
  %293 = vmatpush1.msra.mxu0 0.0
  %294 = vmatprep.subr.mxu0 0.0
  %295 = vmatpush1.msra.mxu0 0.0
  %296 = vmatprep.subr.mxu0 0.0
  %297 = vmatpush1.msra.mxu0 0.0
  %298 = vmatprep.subr.mxu0 0.0
  %299 = vmatpush1.msra.mxu0 0.0
  %300 = vmatprep.subr.mxu0 0.0
  %301 = vmatpush1.msra.mxu0 0.0
  %302 = vmatprep.subr.mxu0 0.0
  %303 = vmatpush1.msra.mxu0 0.0
  %304 = vmatprep.subr.mxu0 0.0
  %305 = vmatpush1.msra.mxu0 0.0
  %306 = vmatprep.subr.mxu0 0.0
  %307 = vmatpush1.msra.mxu0 0.0
  %308 = vmatprep.subr.mxu0 0.0
  %309 = vmatpush1.msra.mxu0 0.0
  %310 = vmatprep.subr.mxu0 0.0
  %311 = vmatpush1.msra.mxu0 0.0
  %312 = vmatprep.mubr.f32.mxu0 0.0
  %313 = vmatmul.mubr.f32.gmra.mrb[0].mxu0 %v35
  %v314 = vpop.f32.mrb[0].mxu0
  %v315 = vadd.f32 %v107, %v314
  %v316 = vpop.f32.mrb[0].mxu0
  %317 = vmatprep.mubr.f32.mxu0 0.0
  %318 = vmatmul.mubr.f32.gmra.mrb[0].mxu0 %v36
  %v319 = vpop.f32.mrb[0].mxu0
  %v320 = vadd.f32 %v107, %v319
  %v321 = vpop.f32.mrb[0].mxu0
  %322 = vmatprep.mubr.f32.mxu0 0.0
  %323 = vmatmul.mubr.f32.gmra.mrb[0].mxu0 %v37
  %v324 = vpop.f32.mrb[0].mxu0
  %v325 = vadd.f32 %v107, %v324
  %v326 = vpop.f32.mrb[0].mxu0
  %327 = vmatprep.mubr.f32.mxu0 0.0
  %328 = vmatmul.mubr.f32.gmra.mrb[0].mxu0 %v38
  %v329 = vpop.f32.mrb[0].mxu0
  %v330 = vadd.f32 %v107, %v329
  %v331 = vpop.f32.mrb[0].mxu0
  %332 = vmatprep.mubr.f32.mxu0 0.0
  %333 = vmatmul.mubr.f32.gmra.mrb[0].mxu0 %v39
  %v334 = vpop.f32.mrb[0].mxu0
  %v335 = vadd.f32 %v107, %v334
  %v336 = vpop.f32.mrb[0].mxu0
  %337 = vmatprep.mubr.f32.mxu0 0.0
  %338 = vmatmul.mubr.f32.gmra.mrb[0].mxu0 %v40
  %v339 = vpop.f32.mrb[0].mxu0
  %v340 = vadd.f32 %v107, %v339
  %v341 = vpop.f32.mrb[0].mxu0
  %342 = vmatprep.mubr.f32.mxu0 0.0
  %343 = vmatmul.mubr.f32.gmra.mrb[0].mxu0 %v41
  %v344 = vpop.f32.mrb[0].mxu0
  %v345 = vadd.f32 %v107, %v344
  %v346 = vpop.f32.mrb[0].mxu0
  %347 = vmatprep.mubr.f32.mxu0 0.0
  %348 = vmatmul.mubr.f32.gmra.mrb[0].mxu0 %v42
  %v349 = vpop.f32.mrb[0].mxu0
  %v350 = vadd.f32 %v107, %v349
  %v351 = vpop.f32.mrb[0].mxu0
  %352 = vmatprep.mubr.f32.mxu0 0.0
  %353 = vmatmul.mubr.f32.gmra.mrb[0].mxu0 %v43
  %v354 = vpop.f32.mrb[0].mxu0
  %v355 = vadd.f32 %v107, %v354
  %v356 = vpop.f32.mrb[0].mxu0
  %357 = vmatprep.mubr.f32.mxu0 0.0
  %358 = vmatmul.mubr.f32.gmra.mrb[0].mxu0 %v44
  %v359 = vpop.f32.mrb[0].mxu0
  %v360 = vadd.f32 %v107, %v359
  %v361 = vpop.f32.mrb[0].mxu0
  %362 = vmatprep.mubr.f32.mxu0 0.0
  %363 = vmatmul.mubr.f32.gmra.mrb[0].mxu0 %v45
  %v364 = vpop.f32.mrb[0].mxu0
  %v365 = vadd.f32 %v107, %v364
  %v366 = vpop.f32.mrb[0].mxu0
  %367 = vmatprep.mubr.f32.mxu0 0.0
  %368 = vmatmul.mubr.f32.gmra.mrb[0].mxu0 %v46
  %v369 = vpop.f32.mrb[0].mxu0
  %v370 = vadd.f32 %v107, %v369
  %v371 = vpop.f32.mrb[0].mxu0
  %372 = vdwg.mxu0
  %373 = vst [vmem:[#allocation3] sm:$0xff] %v178
  %374 = vst [vmem:[#allocation3 + $0x8] sm:$0xff] %v180
  %375 = vst [vmem:[#allocation3 + $0x10] sm:$0xff] %v315
  %376 = vst [vmem:[#allocation3 + $0x18] sm:$0xff] %v184
  %377 = vst [vmem:[#allocation3 + $0x20] sm:$0xff] %v186
  %378 = vst [vmem:[#allocation3 + $0x28] sm:$0xff] %v320
  %379 = vst [vmem:[#allocation3 + $0x30] sm:$0xff] %v190
  %380 = vst [vmem:[#allocation3 + $0x38] sm:$0xff] %v192
  %381 = vst [vmem:[#allocation3 + $0x40] sm:$0xff] %v325
  %382 = vst [vmem:[#allocation3 + $0x48] sm:$0xff] %v196
  %383 = vst [vmem:[#allocation3 + $0x50] sm:$0xff] %v198
  %384 = vst [vmem:[#allocation3 + $0x58] sm:$0xff] %v330
  %385 = vst [vmem:[#allocation3 + $0x60] sm:$0xff] %v202
  %386 = vst [vmem:[#allocation3 + $0x68] sm:$0xff] %v204
  %387 = vst [vmem:[#allocation3 + $0x70] sm:$0xff] %v335
  %388 = vst [vmem:[#allocation3 + $0x78] sm:$0xff] %v208
  %389 = vst [vmem:[#allocation3 + $0x80] sm:$0xff] %v210
  %390 = vst [vmem:[#allocation3 + $0x88] sm:$0xff] %v340
  %391 = vst [vmem:[#allocation3 + $0x90] sm:$0xff] %v214
  %392 = vst [vmem:[#allocation3 + $0x98] sm:$0xff] %v216
  %393 = vst [vmem:[#allocation3 + $0xa0] sm:$0xff] %v345
  %394 = vst [vmem:[#allocation3 + $0xa8] sm:$0xff] %v220
  %395 = vst [vmem:[#allocation3 + $0xb0] sm:$0xff] %v222
  %396 = vst [vmem:[#allocation3 + $0xb8] sm:$0xff] %v350
  %397 = vst [vmem:[#allocation3 + $0xc0] sm:$0xff] %v226
  %398 = vst [vmem:[#allocation3 + $0xc8] sm:$0xff] %v228
  %399 = vst [vmem:[#allocation3 + $0xd0] sm:$0xff] %v355
  %400 = vst [vmem:[#allocation3 + $0xd8] sm:$0xff] %v232
  %401 = vst [vmem:[#allocation3 + $0xe0] sm:$0xff] %v234
  %402 = vst [vmem:[#allocation3 + $0xe8] sm:$0xff] %v360
  %403 = vst [vmem:[#allocation3 + $0xf0] sm:$0xff] %v238
  %404 = vst [vmem:[#allocation3 + $0xf8] sm:$0xff] %v240
  %405 = vst [vmem:[#allocation3 + $0x100] sm:$0xff] %v365
  %406 = vst [vmem:[#allocation3 + $0x108] sm:$0xff] %v244
  %407 = vst [vmem:[#allocation3 + $0x110] sm:$0xff] %v246
  %408 = vst [vmem:[#allocation3 + $0x118] sm:$0xff] %v370
  %v409 = vld [vmem:[%s4 + $0x60] sm:$0xff]
  %v410 = vld [vmem:[%s4 + $0x68] sm:$0xff]
  %v411 = vld [vmem:[%s4 + $0x70] sm:$0xff]
  %v412 = vld [vmem:[%s4 + $0x78] sm:$0xff]
  %v413 = vld [vmem:[%s4 + $0x80] sm:$0xff]
  %v414 = vld [vmem:[%s4 + $0x88] sm:$0xff]
  %v415 = vld [vmem:[%s4 + $0x90] sm:$0xff]
  %v416 = vld [vmem:[%s4 + $0x98] sm:$0xff]
  %v417 = vld [vmem:[%s4 + $0xa0] sm:$0xff]
  %v418 = vld [vmem:[%s4 + $0xa8] sm:$0xff]
  %v419 = vld [vmem:[%s4 + $0xb0] sm:$0xff]
  %v420 = vld [vmem:[%s4 + $0xb8] sm:$0xff]
  %v421 = vld [vmem:[%s5] sm:$0xff]
  %v422 = vld [vmem:[%s5 + $0x8] sm:$0xff]
  %v423 = vld [vmem:[%s5 + $0x10] sm:$0xff]
  %v424 = vld [vmem:[%s5 + $0x18] sm:$0xff]
  %v425 = vld [vmem:[%s5 + $0x20] sm:$0xff]
  %v426 = vld [vmem:[%s5 + $0x28] sm:$0xff]
  %v427 = vld [vmem:[%s5 + $0x30] sm:$0xff]
  %v428 = vld [vmem:[%s5 + $0x38] sm:$0xff]
  %v429 = vld [vmem:[%s5 + $0x40] sm:$0xff]
  %v430 = vld [vmem:[%s5 + $0x48] sm:$0xff]
  %v431 = vld [vmem:[%s5 + $0x50] sm:$0xff]
  %v432 = vld [vmem:[%s5 + $0x58] sm:$0xff]
  %v433 = vld [vmem:[%s5 + $0x60] sm:$0xff]
  %v434 = vld [vmem:[%s5 + $0x68] sm:$0xff]
  %v435 = vld [vmem:[%s5 + $0x70] sm:$0xff]
  %v436 = vld [vmem:[%s5 + $0x78] sm:$0xff]
  %v437 = vld [vmem:[%s5 + $0x80] sm:$0xff]
  %v438 = vld [vmem:[%s5 + $0x88] sm:$0xff]
  %v439 = vld [vmem:[%s5 + $0x90] sm:$0xff]
  %v440 = vld [vmem:[%s5 + $0x98] sm:$0xff]
  %v441 = vld [vmem:[%s5 + $0xa0] sm:$0xff]
  %v442 = vld [vmem:[%s5 + $0xa8] sm:$0xff]
  %v443 = vld [vmem:[%s5 + $0xb0] sm:$0xff]
  %v444 = vld [vmem:[%s5 + $0xb8] sm:$0xff]
  %v445 = vld [vmem:[%s5 + $0xc0] sm:$0xff]
  %v446 = vld [vmem:[%s5 + $0xc8] sm:$0xff]
  %v447 = vld [vmem:[%s5 + $0xd0] sm:$0xff]
  %v448 = vld [vmem:[%s5 + $0xd8] sm:$0xff]
  %v449 = vld [vmem:[%s5 + $0xe0] sm:$0xff]
  %v450 = vld [vmem:[%s5 + $0xe8] sm:$0xff]
  %v451 = vld [vmem:[%s5 + $0xf0] sm:$0xff]
  %v452 = vld [vmem:[%s5 + $0xf8] sm:$0xff]
  %v453 = vld [vmem:[%s5 + $0x100] sm:$0xff]
  %v454 = vld [vmem:[%s5 + $0x108] sm:$0xff]
  %v455 = vld [vmem:[%s5 + $0x110] sm:$0xff]
  %v456 = vld [vmem:[%s5 + $0x118] sm:$0xff]
  %v457 = vld [vmem:[%s5 + $0x120] sm:$0xff]
  %v458 = vld [vmem:[%s5 + $0x128] sm:$0xff]
  %v459 = vld [vmem:[%s5 + $0x130] sm:$0xff]
  %v460 = vld [vmem:[%s5 + $0x138] sm:$0xff]
  %v461 = vld [vmem:[%s5 + $0x140] sm:$0xff]
  %v462 = vld [vmem:[%s5 + $0x148] sm:$0xff]
  %v463 = vld [vmem:[%s5 + $0x150] sm:$0xff]
  %v464 = vld [vmem:[%s5 + $0x158] sm:$0xff]
  %v465 = vld [vmem:[%s5 + $0x160] sm:$0xff]
  %v466 = vld [vmem:[%s5 + $0x168] sm:$0xff]
  %v467 = vld [vmem:[%s5 + $0x170] sm:$0xff]
  %v468 = vld [vmem:[%s5 + $0x178] sm:$0xff]
  %469 = vmatprep.subr.mxu0 %v422
  %470 = vmatpush1.msra.mxu0 %v421
  %471 = vmatprep.subr.mxu0 %v425
  %472 = vmatpush1.msra.mxu0 %v424
  %473 = vmatprep.subr.mxu0 %v428
  %474 = vmatpush1.msra.mxu0 %v427
  %475 = vmatprep.subr.mxu0 %v431
  %476 = vmatpush1.msra.mxu0 %v430
  %477 = vmatprep.subr.mxu0 %v434
  %478 = vmatpush1.msra.mxu0 %v433
  %479 = vmatprep.subr.mxu0 %v437
  %480 = vmatpush1.msra.mxu0 %v436
  %481 = vmatprep.subr.mxu0 %v440
  %482 = vmatpush1.msra.mxu0 %v439
  %483 = vmatprep.subr.mxu0 %v443
  %484 = vmatpush1.msra.mxu0 %v442
  %485 = vmatprep.subr.mxu0 %v446
  %486 = vmatpush1.msra.mxu0 %v445
  %487 = vmatprep.subr.mxu0 %v449
  %488 = vmatpush1.msra.mxu0 %v448
  %489 = vmatprep.subr.mxu0 %v452
  %490 = vmatpush1.msra.mxu0 %v451
  %491 = vmatprep.subr.mxu0 %v455
  %492 = vmatpush1.msra.mxu0 %v454
  %493 = vmatprep.subr.mxu0 %v458
  %494 = vmatpush1.msra.mxu0 %v457
  %495 = vmatprep.subr.mxu0 %v461
  %496 = vmatpush1.msra.mxu0 %v460
  %497 = vmatprep.subr.mxu0 %v464
  %498 = vmatpush1.msra.mxu0 %v463
  %499 = vmatprep.subr.mxu0 %v467
  %500 = vmatpush1.msra.mxu0 %v466
  %501 = vmatprep.subr.mxu0 0.0
  %502 = vmatpush1.msra.mxu0 0.0
  %503 = vmatprep.subr.mxu0 0.0
  %504 = vmatpush1.msra.mxu0 0.0
  %505 = vmatprep.subr.mxu0 0.0
  %506 = vmatpush1.msra.mxu0 0.0
  %507 = vmatprep.subr.mxu0 0.0
  %508 = vmatpush1.msra.mxu0 0.0
  %509 = vmatprep.subr.mxu0 0.0
  %510 = vmatpush1.msra.mxu0 0.0
  %511 = vmatprep.subr.mxu0 0.0
  %512 = vmatpush1.msra.mxu0 0.0
  %513 = vmatprep.subr.mxu0 0.0
  %514 = vmatpush1.msra.mxu0 0.0
  %515 = vmatprep.subr.mxu0 0.0
  %516 = vmatpush1.msra.mxu0 0.0
  %517 = vmatprep.subr.mxu0 0.0
  %518 = vmatpush1.msra.mxu0 0.0
  %519 = vmatprep.subr.mxu0 0.0
  %520 = vmatpush1.msra.mxu0 0.0
  %521 = vmatprep.subr.mxu0 0.0
  %522 = vmatpush1.msra.mxu0 0.0
  %523 = vmatprep.subr.mxu0 0.0
  %524 = vmatpush1.msra.mxu0 0.0
  %525 = vmatprep.subr.mxu0 0.0
  %526 = vmatpush1.msra.mxu0 0.0
  %527 = vmatprep.subr.mxu0 0.0
  %528 = vmatpush1.msra.mxu0 0.0
  %529 = vmatprep.subr.mxu0 0.0
  %530 = vmatpush1.msra.mxu0 0.0
  %531 = vmatprep.subr.mxu0 0.0
  %532 = vmatpush1.msra.mxu0 0.0
  %533 = vmatprep.mubr.f32.mxu0 0.0
  %534 = vmatmul.mubr.f32.gmra.mrb[0].mxu0 %v409
  %v535 = vpop.f32.mrb[0].mxu0
  %v536 = vadd.f32 %v99, %v535
  %v537 = vpop.f32.mrb[0].mxu0
  %v538 = vadd.f32 %v103, %v537
  %539 = vmatprep.mubr.f32.mxu0 0.0
  %540 = vmatmul.mubr.f32.gmra.mrb[0].mxu0 %v410
  %v541 = vpop.f32.mrb[0].mxu0
  %v542 = vadd.f32 %v99, %v541
  %v543 = vpop.f32.mrb[0].mxu0
  %v544 = vadd.f32 %v103, %v543
  %545 = vmatprep.mubr.f32.mxu0 0.0
  %546 = vmatmul.mubr.f32.gmra.mrb[0].mxu0 %v411
  %v547 = vpop.f32.mrb[0].mxu0
  %v548 = vadd.f32 %v99, %v547
  %v549 = vpop.f32.mrb[0].mxu0
  %v550 = vadd.f32 %v103, %v549
  %551 = vmatprep.mubr.f32.mxu0 0.0
  %552 = vmatmul.mubr.f32.gmra.mrb[0].mxu0 %v412
  %v553 = vpop.f32.mrb[0].mxu0
  %v554 = vadd.f32 %v99, %v553
  %v555 = vpop.f32.mrb[0].mxu0
  %v556 = vadd.f32 %v103, %v555
  %557 = vmatprep.mubr.f32.mxu0 0.0
  %558 = vmatmul.mubr.f32.gmra.mrb[0].mxu0 %v413
  %v559 = vpop.f32.mrb[0].mxu0
  %v560 = vadd.f32 %v99, %v559
  %v561 = vpop.f32.mrb[0].mxu0
  %v562 = vadd.f32 %v103, %v561
  %563 = vmatprep.mubr.f32.mxu0 0.0
  %564 = vmatmul.mubr.f32.gmra.mrb[0].mxu0 %v414
  %v565 = vpop.f32.mrb[0].mxu0
  %v566 = vadd.f32 %v99, %v565
  %v567 = vpop.f32.mrb[0].mxu0
  %v568 = vadd.f32 %v103, %v567
  %569 = vmatprep.mubr.f32.mxu0 0.0
  %570 = vmatmul.mubr.f32.gmra.mrb[0].mxu0 %v415
  %v571 = vpop.f32.mrb[0].mxu0
  %v572 = vadd.f32 %v99, %v571
  %v573 = vpop.f32.mrb[0].mxu0
  %v574 = vadd.f32 %v103, %v573
  %575 = vmatprep.mubr.f32.mxu0 0.0
  %576 = vmatmul.mubr.f32.gmra.mrb[0].mxu0 %v416
  %v577 = vpop.f32.mrb[0].mxu0
  %v578 = vadd.f32 %v99, %v577
  %v579 = vpop.f32.mrb[0].mxu0
  %v580 = vadd.f32 %v103, %v579
  %581 = vmatprep.mubr.f32.mxu0 0.0
  %582 = vmatmul.mubr.f32.gmra.mrb[0].mxu0 %v417
  %v583 = vpop.f32.mrb[0].mxu0
  %v584 = vadd.f32 %v99, %v583
  %v585 = vpop.f32.mrb[0].mxu0
  %v586 = vadd.f32 %v103, %v585
  %587 = vmatprep.mubr.f32.mxu0 0.0
  %588 = vmatmul.mubr.f32.gmra.mrb[0].mxu0 %v418
  %v589 = vpop.f32.mrb[0].mxu0
  %v590 = vadd.f32 %v99, %v589
  %v591 = vpop.f32.mrb[0].mxu0
  %v592 = vadd.f32 %v103, %v591
  %593 = vmatprep.mubr.f32.mxu0 0.0
  %594 = vmatmul.mubr.f32.gmra.mrb[0].mxu0 %v419
  %v595 = vpop.f32.mrb[0].mxu0
  %v596 = vadd.f32 %v99, %v595
  %v597 = vpop.f32.mrb[0].mxu0
  %v598 = vadd.f32 %v103, %v597
  %599 = vmatprep.mubr.f32.mxu0 0.0
  %600 = vmatmul.mubr.f32.gmra.mrb[0].mxu0 %v420
  %v601 = vpop.f32.mrb[0].mxu0
  %v602 = vadd.f32 %v99, %v601
  %v603 = vpop.f32.mrb[0].mxu0
  %v604 = vadd.f32 %v103, %v603
  %605 = vdwg.mxu0
  %606 = vmatprep.subr.mxu0 0.0
  %607 = vmatpush1.msra.mxu0 %v423
  %608 = vmatprep.subr.mxu0 0.0
  %609 = vmatpush1.msra.mxu0 %v426
  %610 = vmatprep.subr.mxu0 0.0
  %611 = vmatpush1.msra.mxu0 %v429
  %612 = vmatprep.subr.mxu0 0.0
  %613 = vmatpush1.msra.mxu0 %v432
  %614 = vmatprep.subr.mxu0 0.0
  %615 = vmatpush1.msra.mxu0 %v435
  %616 = vmatprep.subr.mxu0 0.0
  %617 = vmatpush1.msra.mxu0 %v438
  %618 = vmatprep.subr.mxu0 0.0
  %619 = vmatpush1.msra.mxu0 %v441
  %620 = vmatprep.subr.mxu0 0.0
  %621 = vmatpush1.msra.mxu0 %v444
  %622 = vmatprep.subr.mxu0 0.0
  %623 = vmatpush1.msra.mxu0 %v447
  %624 = vmatprep.subr.mxu0 0.0
  %625 = vmatpush1.msra.mxu0 %v450
  %626 = vmatprep.subr.mxu0 0.0
  %627 = vmatpush1.msra.mxu0 %v453
  %628 = vmatprep.subr.mxu0 0.0
  %629 = vmatpush1.msra.mxu0 %v456
  %630 = vmatprep.subr.mxu0 0.0
  %631 = vmatpush1.msra.mxu0 %v459
  %632 = vmatprep.subr.mxu0 0.0
  %633 = vmatpush1.msra.mxu0 %v462
  %634 = vmatprep.subr.mxu0 0.0
  %635 = vmatpush1.msra.mxu0 %v465
  %636 = vmatprep.subr.mxu0 0.0
  %637 = vmatpush1.msra.mxu0 %v468
  %638 = vmatprep.subr.mxu0 0.0
  %639 = vmatpush1.msra.mxu0 0.0
  %640 = vmatprep.subr.mxu0 0.0
  %641 = vmatpush1.msra.mxu0 0.0
  %642 = vmatprep.subr.mxu0 0.0
  %643 = vmatpush1.msra.mxu0 0.0
  %644 = vmatprep.subr.mxu0 0.0
  %645 = vmatpush1.msra.mxu0 0.0
  %646 = vmatprep.subr.mxu0 0.0
  %647 = vmatpush1.msra.mxu0 0.0
  %648 = vmatprep.subr.mxu0 0.0
  %649 = vmatpush1.msra.mxu0 0.0
  %650 = vmatprep.subr.mxu0 0.0
  %651 = vmatpush1.msra.mxu0 0.0
  %652 = vmatprep.subr.mxu0 0.0
  %653 = vmatpush1.msra.mxu0 0.0
  %654 = vmatprep.subr.mxu0 0.0
  %655 = vmatpush1.msra.mxu0 0.0
  %656 = vmatprep.subr.mxu0 0.0
  %657 = vmatpush1.msra.mxu0 0.0
  %658 = vmatprep.subr.mxu0 0.0
  %659 = vmatpush1.msra.mxu0 0.0
  %660 = vmatprep.subr.mxu0 0.0
  %661 = vmatpush1.msra.mxu0 0.0
  %662 = vmatprep.subr.mxu0 0.0
  %663 = vmatpush1.msra.mxu0 0.0
  %664 = vmatprep.subr.mxu0 0.0
  %665 = vmatpush1.msra.mxu0 0.0
  %666 = vmatprep.subr.mxu0 0.0
  %667 = vmatpush1.msra.mxu0 0.0
  %668 = vmatprep.subr.mxu0 0.0
  %669 = vmatpush1.msra.mxu0 0.0
  %670 = vmatprep.mubr.f32.mxu0 0.0
  %671 = vmatmul.mubr.f32.gmra.mrb[0].mxu0 %v409
  %v672 = vpop.f32.mrb[0].mxu0
  %v673 = vadd.f32 %v107, %v672
  %v674 = vpop.f32.mrb[0].mxu0
  %675 = vmatprep.mubr.f32.mxu0 0.0
  %676 = vmatmul.mubr.f32.gmra.mrb[0].mxu0 %v410
  %v677 = vpop.f32.mrb[0].mxu0
  %v678 = vadd.f32 %v107, %v677
  %v679 = vpop.f32.mrb[0].mxu0
  %680 = vmatprep.mubr.f32.mxu0 0.0
  %681 = vmatmul.mubr.f32.gmra.mrb[0].mxu0 %v411
  %v682 = vpop.f32.mrb[0].mxu0
  %v683 = vadd.f32 %v107, %v682
  %v684 = vpop.f32.mrb[0].mxu0
  %685 = vmatprep.mubr.f32.mxu0 0.0
  %686 = vmatmul.mubr.f32.gmra.mrb[0].mxu0 %v412
  %v687 = vpop.f32.mrb[0].mxu0
  %v688 = vadd.f32 %v107, %v687
  %v689 = vpop.f32.mrb[0].mxu0
  %690 = vmatprep.mubr.f32.mxu0 0.0
  %691 = vmatmul.mubr.f32.gmra.mrb[0].mxu0 %v413
  %v692 = vpop.f32.mrb[0].mxu0
  %v693 = vadd.f32 %v107, %v692
  %v694 = vpop.f32.mrb[0].mxu0
  %695 = vmatprep.mubr.f32.mxu0 0.0
  %696 = vmatmul.mubr.f32.gmra.mrb[0].mxu0 %v414
  %v697 = vpop.f32.mrb[0].mxu0
  %v698 = vadd.f32 %v107, %v697
  %v699 = vpop.f32.mrb[0].mxu0
  %700 = vmatprep.mubr.f32.mxu0 0.0
  %701 = vmatmul.mubr.f32.gmra.mrb[0].mxu0 %v415
  %v702 = vpop.f32.mrb[0].mxu0
  %v703 = vadd.f32 %v107, %v702
  %v704 = vpop.f32.mrb[0].mxu0
  %705 = vmatprep.mubr.f32.mxu0 0.0
  %706 = vmatmul.mubr.f32.gmra.mrb[0].mxu0 %v416
  %v707 = vpop.f32.mrb[0].mxu0
  %v708 = vadd.f32 %v107, %v707
  %v709 = vpop.f32.mrb[0].mxu0
  %710 = vmatprep.mubr.f32.mxu0 0.0
  %711 = vmatmul.mubr.f32.gmra.mrb[0].mxu0 %v417
  %v712 = vpop.f32.mrb[0].mxu0
  %v713 = vadd.f32 %v107, %v712
  %v714 = vpop.f32.mrb[0].mxu0
  %715 = vmatprep.mubr.f32.mxu0 0.0
  %716 = vmatmul.mubr.f32.gmra.mrb[0].mxu0 %v418
  %v717 = vpop.f32.mrb[0].mxu0
  %v718 = vadd.f32 %v107, %v717
  %v719 = vpop.f32.mrb[0].mxu0
  %720 = vmatprep.mubr.f32.mxu0 0.0
  %721 = vmatmul.mubr.f32.gmra.mrb[0].mxu0 %v419
  %v722 = vpop.f32.mrb[0].mxu0
  %v723 = vadd.f32 %v107, %v722
  %v724 = vpop.f32.mrb[0].mxu0
  %725 = vmatprep.mubr.f32.mxu0 0.0
  %726 = vmatmul.mubr.f32.gmra.mrb[0].mxu0 %v420
  %v727 = vpop.f32.mrb[0].mxu0
  %v728 = vadd.f32 %v107, %v727
  %v729 = vpop.f32.mrb[0].mxu0
  %730 = vdwg.mxu0
  %731 = vst [vmem:[#allocation3 + $0x120] sm:$0xff] %v536
  %732 = vst [vmem:[#allocation3 + $0x128] sm:$0xff] %v538
  %733 = vst [vmem:[#allocation3 + $0x130] sm:$0xff] %v673
  %734 = vst [vmem:[#allocation3 + $0x138] sm:$0xff] %v542
  %735 = vst [vmem:[#allocation3 + $0x140] sm:$0xff] %v544
  %736 = vst [vmem:[#allocation3 + $0x148] sm:$0xff] %v678
  %737 = vst [vmem:[#allocation3 + $0x150] sm:$0xff] %v548
  %738 = vst [vmem:[#allocation3 + $0x158] sm:$0xff] %v550
  %739 = vst [vmem:[#allocation3 + $0x160] sm:$0xff] %v683
  %740 = vst [vmem:[#allocation3 + $0x168] sm:$0xff] %v554
  %741 = vst [vmem:[#allocation3 + $0x170] sm:$0xff] %v556
  %742 = vst [vmem:[#allocation3 + $0x178] sm:$0xff] %v688
  %743 = vst [vmem:[#allocation3 + $0x180] sm:$0xff] %v560
  %744 = vst [vmem:[#allocation3 + $0x188] sm:$0xff] %v562
  %745 = vst [vmem:[#allocation3 + $0x190] sm:$0xff] %v693
  %746 = vst [vmem:[#allocation3 + $0x198] sm:$0xff] %v566
  %747 = vst [vmem:[#allocation3 + $0x1a0] sm:$0xff] %v568
  %748 = vst [vmem:[#allocation3 + $0x1a8] sm:$0xff] %v698
  %749 = vst [vmem:[#allocation3 + $0x1b0] sm:$0xff] %v572
  %750 = vst [vmem:[#allocation3 + $0x1b8] sm:$0xff] %v574
  %751 = vst [vmem:[#allocation3 + $0x1c0] sm:$0xff] %v703
  %752 = vst [vmem:[#allocation3 + $0x1c8] sm:$0xff] %v578
  %753 = vst [vmem:[#allocation3 + $0x1d0] sm:$0xff] %v580
  %754 = vst [vmem:[#allocation3 + $0x1d8] sm:$0xff] %v708
  %755 = vst [vmem:[#allocation3 + $0x1e0] sm:$0xff] %v584
  %756 = vst [vmem:[#allocation3 + $0x1e8] sm:$0xff] %v586
  %757 = vst [vmem:[#allocation3 + $0x1f0] sm:$0xff] %v713
  %758 = vst [vmem:[#allocation3 + $0x1f8] sm:$0xff] %v590
  %759 = vst [vmem:[#allocation3 + $0x200] sm:$0xff] %v592
  %760 = vst [vmem:[#allocation3 + $0x208] sm:$0xff] %v718
  %761 = vst [vmem:[#allocation3 + $0x210] sm:$0xff] %v596
  %762 = vst [vmem:[#allocation3 + $0x218] sm:$0xff] %v598
  %763 = vst [vmem:[#allocation3 + $0x220] sm:$0xff] %v723
  %764 = vst [vmem:[#allocation3 + $0x228] sm:$0xff] %v602
  %765 = vst [vmem:[#allocation3 + $0x230] sm:$0xff] %v604
  %766 = vst [vmem:[#allocation3 + $0x238] sm:$0xff] %v728
  %v767 = vld [vmem:[%s4 + $0xc0] sm:$0xff]
  %v768 = vld [vmem:[%s4 + $0xc8] sm:$0xff]
  %v769 = vld [vmem:[%s4 + $0xd0] sm:$0xff]
  %v770 = vld [vmem:[%s4 + $0xd8] sm:$0xff]
  %v771 = vld [vmem:[%s4 + $0xe0] sm:$0xff]
  %v772 = vld [vmem:[%s4 + $0xe8] sm:$0xff]
  %v773 = vld [vmem:[%s4 + $0xf0] sm:$0xff]
  %v774 = vld [vmem:[%s4 + $0xf8] sm:$0xff]
  %v775 = vld [vmem:[%s4 + $0x100] sm:$0xff]
  %v776 = vld [vmem:[%s4 + $0x108] sm:$0xff]
  %v777 = vld [vmem:[%s4 + $0x110] sm:$0xff]
  %v778 = vld [vmem:[%s4 + $0x118] sm:$0xff]
  %v779 = vld [vmem:[%s5] sm:$0xff]
  %v780 = vld [vmem:[%s5 + $0x8] sm:$0xff]
  %v781 = vld [vmem:[%s5 + $0x10] sm:$0xff]
  %v782 = vld [vmem:[%s5 + $0x18] sm:$0xff]
  %v783 = vld [vmem:[%s5 + $0x20] sm:$0xff]
  %v784 = vld [vmem:[%s5 + $0x28] sm:$0xff]
  %v785 = vld [vmem:[%s5 + $0x30] sm:$0xff]
  %v786 = vld [vmem:[%s5 + $0x38] sm:$0xff]
  %v787 = vld [vmem:[%s5 + $0x40] sm:$0xff]
  %v788 = vld [vmem:[%s5 + $0x48] sm:$0xff]
  %v789 = vld [vmem:[%s5 + $0x50] sm:$0xff]
  %v790 = vld [vmem:[%s5 + $0x58] sm:$0xff]
  %v791 = vld [vmem:[%s5 + $0x60] sm:$0xff]
  %v792 = vld [vmem:[%s5 + $0x68] sm:$0xff]
  %v793 = vld [vmem:[%s5 + $0x70] sm:$0xff]
  %v794 = vld [vmem:[%s5 + $0x78] sm:$0xff]
  %v795 = vld [vmem:[%s5 + $0x80] sm:$0xff]
  %v796 = vld [vmem:[%s5 + $0x88] sm:$0xff]
  %v797 = vld [vmem:[%s5 + $0x90] sm:$0xff]
  %v798 = vld [vmem:[%s5 + $0x98] sm:$0xff]
  %v799 = vld [vmem:[%s5 + $0xa0] sm:$0xff]
  %v800 = vld [vmem:[%s5 + $0xa8] sm:$0xff]
  %v801 = vld [vmem:[%s5 + $0xb0] sm:$0xff]
  %v802 = vld [vmem:[%s5 + $0xb8] sm:$0xff]
  %v803 = vld [vmem:[%s5 + $0xc0] sm:$0xff]
  %v804 = vld [vmem:[%s5 + $0xc8] sm:$0xff]
  %v805 = vld [vmem:[%s5 + $0xd0] sm:$0xff]
  %v806 = vld [vmem:[%s5 + $0xd8] sm:$0xff]
  %v807 = vld [vmem:[%s5 + $0xe0] sm:$0xff]
  %v808 = vld [vmem:[%s5 + $0xe8] sm:$0xff]
  %v809 = vld [vmem:[%s5 + $0xf0] sm:$0xff]
  %v810 = vld [vmem:[%s5 + $0xf8] sm:$0xff]
  %v811 = vld [vmem:[%s5 + $0x100] sm:$0xff]
  %v812 = vld [vmem:[%s5 + $0x108] sm:$0xff]
  %v813 = vld [vmem:[%s5 + $0x110] sm:$0xff]
  %v814 = vld [vmem:[%s5 + $0x118] sm:$0xff]
  %v815 = vld [vmem:[%s5 + $0x120] sm:$0xff]
  %v816 = vld [vmem:[%s5 + $0x128] sm:$0xff]
  %v817 = vld [vmem:[%s5 + $0x130] sm:$0xff]
  %v818 = vld [vmem:[%s5 + $0x138] sm:$0xff]
  %v819 = vld [vmem:[%s5 + $0x140] sm:$0xff]
  %v820 = vld [vmem:[%s5 + $0x148] sm:$0xff]
  %v821 = vld [vmem:[%s5 + $0x150] sm:$0xff]
  %v822 = vld [vmem:[%s5 + $0x158] sm:$0xff]
  %v823 = vld [vmem:[%s5 + $0x160] sm:$0xff]
  %v824 = vld [vmem:[%s5 + $0x168] sm:$0xff]
  %v825 = vld [vmem:[%s5 + $0x170] sm:$0xff]
  %v826 = vld [vmem:[%s5 + $0x178] sm:$0xff]
  %827 = vmatprep.subr.mxu0 %v780
  %828 = vmatpush1.msra.mxu0 %v779
  %829 = vmatprep.subr.mxu0 %v783
  %830 = vmatpush1.msra.mxu0 %v782
  %831 = vmatprep.subr.mxu0 %v786
  %832 = vmatpush1.msra.mxu0 %v785
  %833 = vmatprep.subr.mxu0 %v789
  %834 = vmatpush1.msra.mxu0 %v788
  %835 = vmatprep.subr.mxu0 %v792
  %836 = vmatpush1.msra.mxu0 %v791
  %837 = vmatprep.subr.mxu0 %v795
  %838 = vmatpush1.msra.mxu0 %v794
  %839 = vmatprep.subr.mxu0 %v798
  %840 = vmatpush1.msra.mxu0 %v797
  %841 = vmatprep.subr.mxu0 %v801
  %842 = vmatpush1.msra.mxu0 %v800
  %843 = vmatprep.subr.mxu0 %v804
  %844 = vmatpush1.msra.mxu0 %v803
  %845 = vmatprep.subr.mxu0 %v807
  %846 = vmatpush1.msra.mxu0 %v806
  %847 = vmatprep.subr.mxu0 %v810
  %848 = vmatpush1.msra.mxu0 %v809
  %849 = vmatprep.subr.mxu0 %v813
  %850 = vmatpush1.msra.mxu0 %v812
  %851 = vmatprep.subr.mxu0 %v816
  %852 = vmatpush1.msra.mxu0 %v815
  %853 = vmatprep.subr.mxu0 %v819
  %854 = vmatpush1.msra.mxu0 %v818
  %855 = vmatprep.subr.mxu0 %v822
  %856 = vmatpush1.msra.mxu0 %v821
  %857 = vmatprep.subr.mxu0 %v825
  %858 = vmatpush1.msra.mxu0 %v824
  %859 = vmatprep.subr.mxu0 0.0
  %860 = vmatpush1.msra.mxu0 0.0
  %861 = vmatprep.subr.mxu0 0.0
  %862 = vmatpush1.msra.mxu0 0.0
  %863 = vmatprep.subr.mxu0 0.0
  %864 = vmatpush1.msra.mxu0 0.0
  %865 = vmatprep.subr.mxu0 0.0
  %866 = vmatpush1.msra.mxu0 0.0
  %867 = vmatprep.subr.mxu0 0.0
  %868 = vmatpush1.msra.mxu0 0.0
  %869 = vmatprep.subr.mxu0 0.0
  %870 = vmatpush1.msra.mxu0 0.0
  %871 = vmatprep.subr.mxu0 0.0
  %872 = vmatpush1.msra.mxu0 0.0
  %873 = vmatprep.subr.mxu0 0.0
  %874 = vmatpush1.msra.mxu0 0.0
  %875 = vmatprep.subr.mxu0 0.0
  %876 = vmatpush1.msra.mxu0 0.0
  %877 = vmatprep.subr.mxu0 0.0
  %878 = vmatpush1.msra.mxu0 0.0
  %879 = vmatprep.subr.mxu0 0.0
  %880 = vmatpush1.msra.mxu0 0.0
  %881 = vmatprep.subr.mxu0 0.0
  %882 = vmatpush1.msra.mxu0 0.0
  %883 = vmatprep.subr.mxu0 0.0
  %884 = vmatpush1.msra.mxu0 0.0
  %885 = vmatprep.subr.mxu0 0.0
  %886 = vmatpush1.msra.mxu0 0.0
  %887 = vmatprep.subr.mxu0 0.0
  %888 = vmatpush1.msra.mxu0 0.0
  %889 = vmatprep.subr.mxu0 0.0
  %890 = vmatpush1.msra.mxu0 0.0
  %891 = vmatprep.mubr.f32.mxu0 0.0
  %892 = vmatmul.mubr.f32.gmra.mrb[0].mxu0 %v767
  %v893 = vpop.f32.mrb[0].mxu0
  %v894 = vadd.f32 %v99, %v893
  %v895 = vpop.f32.mrb[0].mxu0
  %v896 = vadd.f32 %v103, %v895
  %897 = vmatprep.mubr.f32.mxu0 0.0
  %898 = vmatmul.mubr.f32.gmra.mrb[0].mxu0 %v768
  %v899 = vpop.f32.mrb[0].mxu0
  %v900 = vadd.f32 %v99, %v899
  %v901 = vpop.f32.mrb[0].mxu0
  %v902 = vadd.f32 %v103, %v901
  %903 = vmatprep.mubr.f32.mxu0 0.0
  %904 = vmatmul.mubr.f32.gmra.mrb[0].mxu0 %v769
  %v905 = vpop.f32.mrb[0].mxu0
  %v906 = vadd.f32 %v99, %v905
  %v907 = vpop.f32.mrb[0].mxu0
  %v908 = vadd.f32 %v103, %v907
  %909 = vmatprep.mubr.f32.mxu0 0.0
  %910 = vmatmul.mubr.f32.gmra.mrb[0].mxu0 %v770
  %v911 = vpop.f32.mrb[0].mxu0
  %v912 = vadd.f32 %v99, %v911
  %v913 = vpop.f32.mrb[0].mxu0
  %v914 = vadd.f32 %v103, %v913
  %915 = vmatprep.mubr.f32.mxu0 0.0
  %916 = vmatmul.mubr.f32.gmra.mrb[0].mxu0 %v771
  %v917 = vpop.f32.mrb[0].mxu0
  %v918 = vadd.f32 %v99, %v917
  %v919 = vpop.f32.mrb[0].mxu0
  %v920 = vadd.f32 %v103, %v919
  %921 = vmatprep.mubr.f32.mxu0 0.0
  %922 = vmatmul.mubr.f32.gmra.mrb[0].mxu0 %v772
  %v923 = vpop.f32.mrb[0].mxu0
  %v924 = vadd.f32 %v99, %v923
  %v925 = vpop.f32.mrb[0].mxu0
  %v926 = vadd.f32 %v103, %v925
  %927 = vmatprep.mubr.f32.mxu0 0.0
  %928 = vmatmul.mubr.f32.gmra.mrb[0].mxu0 %v773
  %v929 = vpop.f32.mrb[0].mxu0
  %v930 = vadd.f32 %v99, %v929
  %v931 = vpop.f32.mrb[0].mxu0
  %v932 = vadd.f32 %v103, %v931
  %933 = vmatprep.mubr.f32.mxu0 0.0
  %934 = vmatmul.mubr.f32.gmra.mrb[0].mxu0 %v774
  %v935 = vpop.f32.mrb[0].mxu0
  %v936 = vadd.f32 %v99, %v935
  %v937 = vpop.f32.mrb[0].mxu0
  %v938 = vadd.f32 %v103, %v937
  %939 = vmatprep.mubr.f32.mxu0 0.0
  %940 = vmatmul.mubr.f32.gmra.mrb[0].mxu0 %v775
  %v941 = vpop.f32.mrb[0].mxu0
  %v942 = vadd.f32 %v99, %v941
  %v943 = vpop.f32.mrb[0].mxu0
  %v944 = vadd.f32 %v103, %v943
  %945 = vmatprep.mubr.f32.mxu0 0.0
  %946 = vmatmul.mubr.f32.gmra.mrb[0].mxu0 %v776
  %v947 = vpop.f32.mrb[0].mxu0
  %v948 = vadd.f32 %v99, %v947
  %v949 = vpop.f32.mrb[0].mxu0
  %v950 = vadd.f32 %v103, %v949
  %951 = vmatprep.mubr.f32.mxu0 0.0
  %952 = vmatmul.mubr.f32.gmra.mrb[0].mxu0 %v777
  %v953 = vpop.f32.mrb[0].mxu0
  %v954 = vadd.f32 %v99, %v953
  %v955 = vpop.f32.mrb[0].mxu0
  %v956 = vadd.f32 %v103, %v955
  %957 = vmatprep.mubr.f32.mxu0 0.0
  %958 = vmatmul.mubr.f32.gmra.mrb[0].mxu0 %v778
  %v959 = vpop.f32.mrb[0].mxu0
  %v960 = vadd.f32 %v99, %v959
  %v961 = vpop.f32.mrb[0].mxu0
  %v962 = vadd.f32 %v103, %v961
  %963 = vdwg.mxu0
  %964 = vmatprep.subr.mxu0 0.0
  %965 = vmatpush1.msra.mxu0 %v781
  %966 = vmatprep.subr.mxu0 0.0
  %967 = vmatpush1.msra.mxu0 %v784
  %968 = vmatprep.subr.mxu0 0.0
  %969 = vmatpush1.msra.mxu0 %v787
  %970 = vmatprep.subr.mxu0 0.0
  %971 = vmatpush1.msra.mxu0 %v790
  %972 = vmatprep.subr.mxu0 0.0
  %973 = vmatpush1.msra.mxu0 %v793
  %974 = vmatprep.subr.mxu0 0.0
  %975 = vmatpush1.msra.mxu0 %v796
  %976 = vmatprep.subr.mxu0 0.0
  %977 = vmatpush1.msra.mxu0 %v799
  %978 = vmatprep.subr.mxu0 0.0
  %979 = vmatpush1.msra.mxu0 %v802
  %980 = vmatprep.subr.mxu0 0.0
  %981 = vmatpush1.msra.mxu0 %v805
  %982 = vmatprep.subr.mxu0 0.0
  %983 = vmatpush1.msra.mxu0 %v808
  %984 = vmatprep.subr.mxu0 0.0
  %985 = vmatpush1.msra.mxu0 %v811
  %986 = vmatprep.subr.mxu0 0.0
  %987 = vmatpush1.msra.mxu0 %v814
  %988 = vmatprep.subr.mxu0 0.0
  %989 = vmatpush1.msra.mxu0 %v817
  %990 = vmatprep.subr.mxu0 0.0
  %991 = vmatpush1.msra.mxu0 %v820
  %992 = vmatprep.subr.mxu0 0.0
  %993 = vmatpush1.msra.mxu0 %v823
  %994 = vmatprep.subr.mxu0 0.0
  %995 = vmatpush1.msra.mxu0 %v826
  %996 = vmatprep.subr.mxu0 0.0
  %997 = vmatpush1.msra.mxu0 0.0
  %998 = vmatprep.subr.mxu0 0.0
  %999 = vmatpush1.msra.mxu0 0.0
  %1000 = vmatprep.subr.mxu0 0.0
  %1001 = vmatpush1.msra.mxu0 0.0
  %1002 = vmatprep.subr.mxu0 0.0
  %1003 = vmatpush1.msra.mxu0 0.0
  %1004 = vmatprep.subr.mxu0 0.0
  %1005 = vmatpush1.msra.mxu0 0.0
  %1006 = vmatprep.subr.mxu0 0.0
  %1007 = vmatpush1.msra.mxu0 0.0
  %1008 = vmatprep.subr.mxu0 0.0
  %1009 = vmatpush1.msra.mxu0 0.0
  %1010 = vmatprep.subr.mxu0 0.0
  %1011 = vmatpush1.msra.mxu0 0.0
  %1012 = vmatprep.subr.mxu0 0.0
  %1013 = vmatpush1.msra.mxu0 0.0
  %1014 = vmatprep.subr.mxu0 0.0
  %1015 = vmatpush1.msra.mxu0 0.0
  %1016 = vmatprep.subr.mxu0 0.0
  %1017 = vmatpush1.msra.mxu0 0.0
  %1018 = vmatprep.subr.mxu0 0.0
  %1019 = vmatpush1.msra.mxu0 0.0
  %1020 = vmatprep.subr.mxu0 0.0
  %1021 = vmatpush1.msra.mxu0 0.0
  %1022 = vmatprep.subr.mxu0 0.0
  %1023 = vmatpush1.msra.mxu0 0.0
  %1024 = vmatprep.subr.mxu0 0.0
  %1025 = vmatpush1.msra.mxu0 0.0
  %1026 = vmatprep.subr.mxu0 0.0
  %1027 = vmatpush1.msra.mxu0 0.0
  %1028 = vmatprep.mubr.f32.mxu0 0.0
  %1029 = vmatmul.mubr.f32.gmra.mrb[0].mxu0 %v767
  %v1030 = vpop.f32.mrb[0].mxu0
  %v1031 = vadd.f32 %v107, %v1030
  %v1032 = vpop.f32.mrb[0].mxu0
  %1033 = vmatprep.mubr.f32.mxu0 0.0
  %1034 = vmatmul.mubr.f32.gmra.mrb[0].mxu0 %v768
  %v1035 = vpop.f32.mrb[0].mxu0
  %v1036 = vadd.f32 %v107, %v1035
  %v1037 = vpop.f32.mrb[0].mxu0
  %1038 = vmatprep.mubr.f32.mxu0 0.0
  %1039 = vmatmul.mubr.f32.gmra.mrb[0].mxu0 %v769
  %v1040 = vpop.f32.mrb[0].mxu0
  %v1041 = vadd.f32 %v107, %v1040
  %v1042 = vpop.f32.mrb[0].mxu0
  %1043 = vmatprep.mubr.f32.mxu0 0.0
  %1044 = vmatmul.mubr.f32.gmra.mrb[0].mxu0 %v770
  %v1045 = vpop.f32.mrb[0].mxu0
  %v1046 = vadd.f32 %v107, %v1045
  %v1047 = vpop.f32.mrb[0].mxu0
  %1048 = vmatprep.mubr.f32.mxu0 0.0
  %1049 = vmatmul.mubr.f32.gmra.mrb[0].mxu0 %v771
  %v1050 = vpop.f32.mrb[0].mxu0
  %v1051 = vadd.f32 %v107, %v1050
  %v1052 = vpop.f32.mrb[0].mxu0
  %1053 = vmatprep.mubr.f32.mxu0 0.0
  %1054 = vmatmul.mubr.f32.gmra.mrb[0].mxu0 %v772
  %v1055 = vpop.f32.mrb[0].mxu0
  %v1056 = vadd.f32 %v107, %v1055
  %v1057 = vpop.f32.mrb[0].mxu0
  %1058 = vmatprep.mubr.f32.mxu0 0.0
  %1059 = vmatmul.mubr.f32.gmra.mrb[0].mxu0 %v773
  %v1060 = vpop.f32.mrb[0].mxu0
  %v1061 = vadd.f32 %v107, %v1060
  %v1062 = vpop.f32.mrb[0].mxu0
  %1063 = vmatprep.mubr.f32.mxu0 0.0
  %1064 = vmatmul.mubr.f32.gmra.mrb[0].mxu0 %v774
  %v1065 = vpop.f32.mrb[0].mxu0
  %v1066 = vadd.f32 %v107, %v1065
  %v1067 = vpop.f32.mrb[0].mxu0
  %1068 = vmatprep.mubr.f32.mxu0 0.0
  %1069 = vmatmul.mubr.f32.gmra.mrb[0].mxu0 %v775
  %v1070 = vpop.f32.mrb[0].mxu0
  %v1071 = vadd.f32 %v107, %v1070
  %v1072 = vpop.f32.mrb[0].mxu0
  %1073 = vmatprep.mubr.f32.mxu0 0.0
  %1074 = vmatmul.mubr.f32.gmra.mrb[0].mxu0 %v776
  %v1075 = vpop.f32.mrb[0].mxu0
  %v1076 = vadd.f32 %v107, %v1075
  %v1077 = vpop.f32.mrb[0].mxu0
  %1078 = vmatprep.mubr.f32.mxu0 0.0
  %1079 = vmatmul.mubr.f32.gmra.mrb[0].mxu0 %v777
  %v1080 = vpop.f32.mrb[0].mxu0
  %v1081 = vadd.f32 %v107, %v1080
  %v1082 = vpop.f32.mrb[0].mxu0
  %1083 = vmatprep.mubr.f32.mxu0 0.0
  %1084 = vmatmul.mubr.f32.gmra.mrb[0].mxu0 %v778
  %v1085 = vpop.f32.mrb[0].mxu0
  %v1086 = vadd.f32 %v107, %v1085
  %v1087 = vpop.f32.mrb[0].mxu0
  %1088 = vdwg.mxu0
  %1089 = vst [vmem:[#allocation3 + $0x240] sm:$0xff] %v894
  %1090 = vst [vmem:[#allocation3 + $0x248] sm:$0xff] %v896
  %1091 = vst [vmem:[#allocation3 + $0x250] sm:$0xff] %v1031
  %1092 = vst [vmem:[#allocation3 + $0x258] sm:$0xff] %v900
  %1093 = vst [vmem:[#allocation3 + $0x260] sm:$0xff] %v902
  %1094 = vst [vmem:[#allocation3 + $0x268] sm:$0xff] %v1036
  %1095 = vst [vmem:[#allocation3 + $0x270] sm:$0xff] %v906
  %1096 = vst [vmem:[#allocation3 + $0x278] sm:$0xff] %v908
  %1097 = vst [vmem:[#allocation3 + $0x280] sm:$0xff] %v1041
  %1098 = vst [vmem:[#allocation3 + $0x288] sm:$0xff] %v912
  %1099 = vst [vmem:[#allocation3 + $0x290] sm:$0xff] %v914
  %1100 = vst [vmem:[#allocation3 + $0x298] sm:$0xff] %v1046
  %1101 = vst [vmem:[#allocation3 + $0x2a0] sm:$0xff] %v918
  %1102 = vst [vmem:[#allocation3 + $0x2a8] sm:$0xff] %v920
  %1103 = vst [vmem:[#allocation3 + $0x2b0] sm:$0xff] %v1051
  %1104 = vst [vmem:[#allocation3 + $0x2b8] sm:$0xff] %v924
  %1105 = vst [vmem:[#allocation3 + $0x2c0] sm:$0xff] %v926
  %1106 = vst [vmem:[#allocation3 + $0x2c8] sm:$0xff] %v1056
  %1107 = vst [vmem:[#allocation3 + $0x2d0] sm:$0xff] %v930
  %1108 = vst [vmem:[#allocation3 + $0x2d8] sm:$0xff] %v932
  %1109 = vst [vmem:[#allocation3 + $0x2e0] sm:$0xff] %v1061
  %1110 = vst [vmem:[#allocation3 + $0x2e8] sm:$0xff] %v936
  %1111 = vst [vmem:[#allocation3 + $0x2f0] sm:$0xff] %v938
  %1112 = vst [vmem:[#allocation3 + $0x2f8] sm:$0xff] %v1066
  %1113 = vst [vmem:[#allocation3 + $0x300] sm:$0xff] %v942
  %1114 = vst [vmem:[#allocation3 + $0x308] sm:$0xff] %v944
  %1115 = vst [vmem:[#allocation3 + $0x310] sm:$0xff] %v1071
  %1116 = vst [vmem:[#allocation3 + $0x318] sm:$0xff] %v948
  %1117 = vst [vmem:[#allocation3 + $0x320] sm:$0xff] %v950
  %1118 = vst [vmem:[#allocation3 + $0x328] sm:$0xff] %v1076
  %1119 = vst [vmem:[#allocation3 + $0x330] sm:$0xff] %v954
  %1120 = vst [vmem:[#allocation3 + $0x338] sm:$0xff] %v956
  %1121 = vst [vmem:[#allocation3 + $0x340] sm:$0xff] %v1081
  %1122 = vst [vmem:[#allocation3 + $0x348] sm:$0xff] %v960
  %1123 = vst [vmem:[#allocation3 + $0x350] sm:$0xff] %v962
  %1124 = vst [vmem:[#allocation3 + $0x358] sm:$0xff] %v1086
  %v1125 = vld [vmem:[%s0] sm:$0xff]
  %v1126 = vld [vmem:[%s0 + $0x8] sm:$0xff]
  %v1127 = vld [vmem:[%s0 + $0x10] sm:$0xff]
  %v1128 = vld [vmem:[%s0 + $0x18] sm:$0xff]
  %v1129 = vld [vmem:[%s0 + $0x20] sm:$0xff]
  %v1130 = vld [vmem:[%s0 + $0x28] sm:$0xff]
  %v1131 = vld [vmem:[%s0 + $0x30] sm:$0xff]
  %v1132 = vld [vmem:[%s0 + $0x38] sm:$0xff]
  %v1133 = vld [vmem:[%s0 + $0x40] sm:$0xff]
  %v1134 = vld [vmem:[%s0 + $0x48] sm:$0xff]
  %v1135 = vld [vmem:[%s1] sm:$0xff]
  %v1136 = vld [vmem:[%s1 + $0x8] sm:$0xff]
  %v1137 = vld [vmem:[%s1 + $0x10] sm:$0xff]
  %v1138 = vld [vmem:[%s1 + $0x18] sm:$0xff]
  %v1139 = vld [vmem:[%s1 + $0x20] sm:$0xff]
  %v1140 = vld [vmem:[%s1 + $0x28] sm:$0xff]
  %v1141 = vld [vmem:[%s1 + $0x30] sm:$0xff]
  %v1142 = vld [vmem:[%s1 + $0x38] sm:$0xff]
  %v1143 = vld [vmem:[%s1 + $0x40] sm:$0xff]
  %v1144 = vld [vmem:[%s1 + $0x48] sm:$0xff]
  %v1145 = vld [vmem:[%s1 + $0x50] sm:$0xff]
  %v1146 = vld [vmem:[%s1 + $0x58] sm:$0xff]
  %v1147 = vld [vmem:[%s1 + $0x60] sm:$0xff]
  %v1148 = vld [vmem:[%s1 + $0x68] sm:$0xff]
  %v1149 = vld [vmem:[%s1 + $0x70] sm:$0xff]
  %v1150 = vld [vmem:[%s1 + $0x78] sm:$0xff]
  %1151 = vmatprep.subr.mxu0 0.0
  %1152 = vmatpush1.msra.mxu0 %v1135
  %1153 = vmatprep.subr.mxu0 0.0
  %1154 = vmatpush1.msra.mxu0 %v1136
  %1155 = vmatprep.subr.mxu0 0.0
  %1156 = vmatpush1.msra.mxu0 %v1137
  %1157 = vmatprep.subr.mxu0 0.0
  %1158 = vmatpush1.msra.mxu0 %v1138
  %1159 = vmatprep.subr.mxu0 0.0
  %1160 = vmatpush1.msra.mxu0 %v1139
  %1161 = vmatprep.subr.mxu0 0.0
  %1162 = vmatpush1.msra.mxu0 %v1140
  %1163 = vmatprep.subr.mxu0 0.0
  %1164 = vmatpush1.msra.mxu0 %v1141
  %1165 = vmatprep.subr.mxu0 0.0
  %1166 = vmatpush1.msra.mxu0 %v1142
  %1167 = vmatprep.subr.mxu0 0.0
  %1168 = vmatpush1.msra.mxu0 %v1143
  %1169 = vmatprep.subr.mxu0 0.0
  %1170 = vmatpush1.msra.mxu0 %v1144
  %1171 = vmatprep.subr.mxu0 0.0
  %1172 = vmatpush1.msra.mxu0 %v1145
  %1173 = vmatprep.subr.mxu0 0.0
  %1174 = vmatpush1.msra.mxu0 %v1146
  %1175 = vmatprep.subr.mxu0 0.0
  %1176 = vmatpush1.msra.mxu0 %v1147
  %1177 = vmatprep.subr.mxu0 0.0
  %1178 = vmatpush1.msra.mxu0 %v1148
  %1179 = vmatprep.subr.mxu0 0.0
  %1180 = vmatpush1.msra.mxu0 %v1149
  %1181 = vmatprep.subr.mxu0 0.0
  %1182 = vmatpush1.msra.mxu0 %v1150
  %1183 = vmatprep.subr.mxu0 0.0
  %1184 = vmatpush1.msra.mxu0 0.0
  %1185 = vmatprep.subr.mxu0 0.0
  %1186 = vmatpush1.msra.mxu0 0.0
  %1187 = vmatprep.subr.mxu0 0.0
  %1188 = vmatpush1.msra.mxu0 0.0
  %1189 = vmatprep.subr.mxu0 0.0
  %1190 = vmatpush1.msra.mxu0 0.0
  %1191 = vmatprep.subr.mxu0 0.0
  %1192 = vmatpush1.msra.mxu0 0.0
  %1193 = vmatprep.subr.mxu0 0.0
  %1194 = vmatpush1.msra.mxu0 0.0
  %1195 = vmatprep.subr.mxu0 0.0
  %1196 = vmatpush1.msra.mxu0 0.0
  %1197 = vmatprep.subr.mxu0 0.0
  %1198 = vmatpush1.msra.mxu0 0.0
  %1199 = vmatprep.subr.mxu0 0.0
  %1200 = vmatpush1.msra.mxu0 0.0
  %1201 = vmatprep.subr.mxu0 0.0
  %1202 = vmatpush1.msra.mxu0 0.0
  %1203 = vmatprep.subr.mxu0 0.0
  %1204 = vmatpush1.msra.mxu0 0.0
  %1205 = vmatprep.subr.mxu0 0.0
  %1206 = vmatpush1.msra.mxu0 0.0
  %1207 = vmatprep.subr.mxu0 0.0
  %1208 = vmatpush1.msra.mxu0 0.0
  %1209 = vmatprep.subr.mxu0 0.0
  %1210 = vmatpush1.msra.mxu0 0.0
  %1211 = vmatprep.subr.mxu0 0.0
  %1212 = vmatpush1.msra.mxu0 0.0
  %1213 = vmatprep.subr.mxu0 0.0
  %1214 = vmatpush1.msra.mxu0 0.0
  %1215 = vmatprep.mubr.f32.mxu0 0.0
  %1216 = vmatmul.mubr.f32.gmra.mrb[0].mxu0 %v1125
  %v1217 = vpop.f32.mrb[0].mxu0
  %v1218 = vadd.f32 0.0, %v1217
  %v1219 = vpop.f32.mrb[0].mxu0
  %1220 = vmatprep.mubr.f32.mxu0 0.0
  %1221 = vmatmul.mubr.f32.gmra.mrb[0].mxu0 %v1126
  %v1222 = vpop.f32.mrb[0].mxu0
  %v1223 = vadd.f32 0.0, %v1222
  %v1224 = vpop.f32.mrb[0].mxu0
  %1225 = vmatprep.mubr.f32.mxu0 0.0
  %1226 = vmatmul.mubr.f32.gmra.mrb[0].mxu0 %v1127
  %v1227 = vpop.f32.mrb[0].mxu0
  %v1228 = vadd.f32 0.0, %v1227
  %v1229 = vpop.f32.mrb[0].mxu0
  %1230 = vmatprep.mubr.f32.mxu0 0.0
  %1231 = vmatmul.mubr.f32.gmra.mrb[0].mxu0 %v1128
  %v1232 = vpop.f32.mrb[0].mxu0
  %v1233 = vadd.f32 0.0, %v1232
  %v1234 = vpop.f32.mrb[0].mxu0
  %1235 = vmatprep.mubr.f32.mxu0 0.0
  %1236 = vmatmul.mubr.f32.gmra.mrb[0].mxu0 %v1129
  %v1237 = vpop.f32.mrb[0].mxu0
  %v1238 = vadd.f32 0.0, %v1237
  %v1239 = vpop.f32.mrb[0].mxu0
  %1240 = vmatprep.mubr.f32.mxu0 0.0
  %1241 = vmatmul.mubr.f32.gmra.mrb[0].mxu0 %v1130
  %v1242 = vpop.f32.mrb[0].mxu0
  %v1243 = vadd.f32 0.0, %v1242
  %v1244 = vpop.f32.mrb[0].mxu0
  %1245 = vmatprep.mubr.f32.mxu0 0.0
  %1246 = vmatmul.mubr.f32.gmra.mrb[0].mxu0 %v1131
  %v1247 = vpop.f32.mrb[0].mxu0
  %v1248 = vadd.f32 0.0, %v1247
  %v1249 = vpop.f32.mrb[0].mxu0
  %1250 = vmatprep.mubr.f32.mxu0 0.0
  %1251 = vmatmul.mubr.f32.gmra.mrb[0].mxu0 %v1132
  %v1252 = vpop.f32.mrb[0].mxu0
  %v1253 = vadd.f32 0.0, %v1252
  %v1254 = vpop.f32.mrb[0].mxu0
  %1255 = vmatprep.mubr.f32.mxu0 0.0
  %1256 = vmatmul.mubr.f32.gmra.mrb[0].mxu0 %v1133
  %v1257 = vpop.f32.mrb[0].mxu0
  %v1258 = vadd.f32 0.0, %v1257
  %v1259 = vpop.f32.mrb[0].mxu0
  %1260 = vmatprep.mubr.f32.mxu0 0.0
  %1261 = vmatmul.mubr.f32.gmra.mrb[0].mxu0 %v1134
  %v1262 = vpop.f32.mrb[0].mxu0
  %v1263 = vadd.f32 0.0, %v1262
  %v1264 = vpop.f32.mrb[0].mxu0
  %1265 = vdwg.mxu0
  %1266 = vst [vmem:[#allocation2] sm:$0xff] %v1218
  %1267 = vst [vmem:[#allocation2 + $0x8] sm:$0xff] %v1223
  %1268 = vst [vmem:[#allocation2 + $0x10] sm:$0xff] %v1228
  %1269 = vst [vmem:[#allocation2 + $0x18] sm:$0xff] %v1233
  %1270 = vst [vmem:[#allocation2 + $0x20] sm:$0xff] %v1238
  %1271 = vst [vmem:[#allocation2 + $0x28] sm:$0xff] %v1243
  %1272 = vst [vmem:[#allocation2 + $0x30] sm:$0xff] %v1248
  %1273 = vst [vmem:[#allocation2 + $0x38] sm:$0xff] %v1253
  %1274 = vst [vmem:[#allocation2 + $0x40] sm:$0xff] %v1258
  %1275 = vst [vmem:[#allocation2 + $0x48] sm:$0xff] %v1263
  %v1276 = vadd.f32 %v1218, %v1223
  %v1277 = vadd.f32 %v1276, %v1228
  %v1278 = vadd.f32 %v1277, %v1233
  %v1279 = vadd.f32 %v1278, %v1238
  %v1280 = vadd.f32 %v1279, %v1243
  %v1281 = vadd.f32 %v1280, %v1248
  %v1282 = vadd.f32 %v1281, %v1253
  %v1283 = vadd.f32 %v1282, %v1258
  %v1284 = vadd.f32 %v1283, %v1263
  %v1285 = vrot.slane %v1284, 4
  %v1286 = vadd.f32 %v1284, %v1285
  %v1287 = vrot.slane %v1286, 2
  %v1288 = vadd.f32 %v1286, %v1287
  %v1289 = vrot.slane %v1288, 1
  %v1290 = vadd.f32 %v1288, %v1289
  %v1291 = vadd.f32 %v1290, 0.0
  %v1292 = vmul.f32 %v1218, %v1218
  %v1293 = vmul.f32 %v1223, %v1223
  %v1294 = vmul.f32 %v1228, %v1228
  %v1295 = vmul.f32 %v1233, %v1233
  %v1296 = vmul.f32 %v1238, %v1238
  %v1297 = vmul.f32 %v1243, %v1243
  %v1298 = vmul.f32 %v1248, %v1248
  %v1299 = vmul.f32 %v1253, %v1253
  %v1300 = vmul.f32 %v1258, %v1258
  %v1301 = vmul.f32 %v1263, %v1263
  %v1302 = vadd.f32 %v1292, %v1293
  %v1303 = vadd.f32 %v1302, %v1294
  %v1304 = vadd.f32 %v1303, %v1295
  %v1305 = vadd.f32 %v1304, %v1296
  %v1306 = vadd.f32 %v1305, %v1297
  %v1307 = vadd.f32 %v1306, %v1298
  %v1308 = vadd.f32 %v1307, %v1299
  %v1309 = vadd.f32 %v1308, %v1300
  %v1310 = vadd.f32 %v1309, %v1301
  %v1311 = vrot.slane %v1310, 4
  %v1312 = vadd.f32 %v1310, %v1311
  %v1313 = vrot.slane %v1312, 2
  %v1314 = vadd.f32 %v1312, %v1313
  %v1315 = vrot.slane %v1314, 1
  %v1316 = vadd.f32 %v1314, %v1315
  %v1317 = vadd.f32 %v1316, 0.0
  %v1318 = vld [vmem:[%s0 + $0x50] sm:$0xff]
  %v1319 = vld [vmem:[%s0 + $0x58] sm:$0xff]
  %v1320 = vld [vmem:[%s0 + $0x60] sm:$0xff]
  %v1321 = vld [vmem:[%s0 + $0x68] sm:$0xff]
  %v1322 = vld [vmem:[%s0 + $0x70] sm:$0xff]
  %v1323 = vld [vmem:[%s0 + $0x78] sm:$0xff]
  %v1324 = vld [vmem:[%s0 + $0x80] sm:$0xff]
  %v1325 = vld [vmem:[%s0 + $0x88] sm:$0xff]
  %v1326 = vld [vmem:[%s0 + $0x90] sm:$0xff]
  %v1327 = vld [vmem:[%s0 + $0x98] sm:$0xff]
  %v1328 = vld [vmem:[%s1] sm:$0xff]
  %v1329 = vld [vmem:[%s1 + $0x8] sm:$0xff]
  %v1330 = vld [vmem:[%s1 + $0x10] sm:$0xff]
  %v1331 = vld [vmem:[%s1 + $0x18] sm:$0xff]
  %v1332 = vld [vmem:[%s1 + $0x20] sm:$0xff]
  %v1333 = vld [vmem:[%s1 + $0x28] sm:$0xff]
  %v1334 = vld [vmem:[%s1 + $0x30] sm:$0xff]
  %v1335 = vld [vmem:[%s1 + $0x38] sm:$0xff]
  %v1336 = vld [vmem:[%s1 + $0x40] sm:$0xff]
  %v1337 = vld [vmem:[%s1 + $0x48] sm:$0xff]
  %v1338 = vld [vmem:[%s1 + $0x50] sm:$0xff]
  %v1339 = vld [vmem:[%s1 + $0x58] sm:$0xff]
  %v1340 = vld [vmem:[%s1 + $0x60] sm:$0xff]
  %v1341 = vld [vmem:[%s1 + $0x68] sm:$0xff]
  %v1342 = vld [vmem:[%s1 + $0x70] sm:$0xff]
  %v1343 = vld [vmem:[%s1 + $0x78] sm:$0xff]
  %1344 = vmatprep.subr.mxu0 0.0
  %1345 = vmatpush1.msra.mxu0 %v1328
  %1346 = vmatprep.subr.mxu0 0.0
  %1347 = vmatpush1.msra.mxu0 %v1329
  %1348 = vmatprep.subr.mxu0 0.0
  %1349 = vmatpush1.msra.mxu0 %v1330
  %1350 = vmatprep.subr.mxu0 0.0
  %1351 = vmatpush1.msra.mxu0 %v1331
  %1352 = vmatprep.subr.mxu0 0.0
  %1353 = vmatpush1.msra.mxu0 %v1332
  %1354 = vmatprep.subr.mxu0 0.0
  %1355 = vmatpush1.msra.mxu0 %v1333
  %1356 = vmatprep.subr.mxu0 0.0
  %1357 = vmatpush1.msra.mxu0 %v1334
  %1358 = vmatprep.subr.mxu0 0.0
  %1359 = vmatpush1.msra.mxu0 %v1335
  %1360 = vmatprep.subr.mxu0 0.0
  %1361 = vmatpush1.msra.mxu0 %v1336
  %1362 = vmatprep.subr.mxu0 0.0
  %1363 = vmatpush1.msra.mxu0 %v1337
  %1364 = vmatprep.subr.mxu0 0.0
  %1365 = vmatpush1.msra.mxu0 %v1338
  %1366 = vmatprep.subr.mxu0 0.0
  %1367 = vmatpush1.msra.mxu0 %v1339
  %1368 = vmatprep.subr.mxu0 0.0
  %1369 = vmatpush1.msra.mxu0 %v1340
  %1370 = vmatprep.subr.mxu0 0.0
  %1371 = vmatpush1.msra.mxu0 %v1341
  %1372 = vmatprep.subr.mxu0 0.0
  %1373 = vmatpush1.msra.mxu0 %v1342
  %1374 = vmatprep.subr.mxu0 0.0
  %1375 = vmatpush1.msra.mxu0 %v1343
  %1376 = vmatprep.subr.mxu0 0.0
  %1377 = vmatpush1.msra.mxu0 0.0
  %1378 = vmatprep.subr.mxu0 0.0
  %1379 = vmatpush1.msra.mxu0 0.0
  %1380 = vmatprep.subr.mxu0 0.0
  %1381 = vmatpush1.msra.mxu0 0.0
  %1382 = vmatprep.subr.mxu0 0.0
  %1383 = vmatpush1.msra.mxu0 0.0
  %1384 = vmatprep.subr.mxu0 0.0
  %1385 = vmatpush1.msra.mxu0 0.0
  %1386 = vmatprep.subr.mxu0 0.0
  %1387 = vmatpush1.msra.mxu0 0.0
  %1388 = vmatprep.subr.mxu0 0.0
  %1389 = vmatpush1.msra.mxu0 0.0
  %1390 = vmatprep.subr.mxu0 0.0
  %1391 = vmatpush1.msra.mxu0 0.0
  %1392 = vmatprep.subr.mxu0 0.0
  %1393 = vmatpush1.msra.mxu0 0.0
  %1394 = vmatprep.subr.mxu0 0.0
  %1395 = vmatpush1.msra.mxu0 0.0
  %1396 = vmatprep.subr.mxu0 0.0
  %1397 = vmatpush1.msra.mxu0 0.0
  %1398 = vmatprep.subr.mxu0 0.0
  %1399 = vmatpush1.msra.mxu0 0.0
  %1400 = vmatprep.subr.mxu0 0.0
  %1401 = vmatpush1.msra.mxu0 0.0
  %1402 = vmatprep.subr.mxu0 0.0
  %1403 = vmatpush1.msra.mxu0 0.0
  %1404 = vmatprep.subr.mxu0 0.0
  %1405 = vmatpush1.msra.mxu0 0.0
  %1406 = vmatprep.subr.mxu0 0.0
  %1407 = vmatpush1.msra.mxu0 0.0
  %1408 = vmatprep.mubr.f32.mxu0 0.0
  %1409 = vmatmul.mubr.f32.gmra.mrb[0].mxu0 %v1318
  %v1410 = vpop.f32.mrb[0].mxu0
  %v1411 = vadd.f32 0.0, %v1410
  %v1412 = vpop.f32.mrb[0].mxu0
  %1413 = vmatprep.mubr.f32.mxu0 0.0
  %1414 = vmatmul.mubr.f32.gmra.mrb[0].mxu0 %v1319
  %v1415 = vpop.f32.mrb[0].mxu0
  %v1416 = vadd.f32 0.0, %v1415
  %v1417 = vpop.f32.mrb[0].mxu0
  %1418 = vmatprep.mubr.f32.mxu0 0.0
  %1419 = vmatmul.mubr.f32.gmra.mrb[0].mxu0 %v1320
  %v1420 = vpop.f32.mrb[0].mxu0
  %v1421 = vadd.f32 0.0, %v1420
  %v1422 = vpop.f32.mrb[0].mxu0
  %1423 = vmatprep.mubr.f32.mxu0 0.0
  %1424 = vmatmul.mubr.f32.gmra.mrb[0].mxu0 %v1321
  %v1425 = vpop.f32.mrb[0].mxu0
  %v1426 = vadd.f32 0.0, %v1425
  %v1427 = vpop.f32.mrb[0].mxu0
  %1428 = vmatprep.mubr.f32.mxu0 0.0
  %1429 = vmatmul.mubr.f32.gmra.mrb[0].mxu0 %v1322
  %v1430 = vpop.f32.mrb[0].mxu0
  %v1431 = vadd.f32 0.0, %v1430
  %v1432 = vpop.f32.mrb[0].mxu0
  %1433 = vmatprep.mubr.f32.mxu0 0.0
  %1434 = vmatmul.mubr.f32.gmra.mrb[0].mxu0 %v1323
  %v1435 = vpop.f32.mrb[0].mxu0
  %v1436 = vadd.f32 0.0, %v1435
  %v1437 = vpop.f32.mrb[0].mxu0
  %1438 = vmatprep.mubr.f32.mxu0 0.0
  %1439 = vmatmul.mubr.f32.gmra.mrb[0].mxu0 %v1324
  %v1440 = vpop.f32.mrb[0].mxu0
  %v1441 = vadd.f32 0.0, %v1440
  %v1442 = vpop.f32.mrb[0].mxu0
  %1443 = vmatprep.mubr.f32.mxu0 0.0
  %1444 = vmatmul.mubr.f32.gmra.mrb[0].mxu0 %v1325
  %v1445 = vpop.f32.mrb[0].mxu0
  %v1446 = vadd.f32 0.0, %v1445
  %v1447 = vpop.f32.mrb[0].mxu0
  %1448 = vmatprep.mubr.f32.mxu0 0.0
  %1449 = vmatmul.mubr.f32.gmra.mrb[0].mxu0 %v1326
  %v1450 = vpop.f32.mrb[0].mxu0
  %v1451 = vadd.f32 0.0, %v1450
  %v1452 = vpop.f32.mrb[0].mxu0
  %1453 = vmatprep.mubr.f32.mxu0 0.0
  %1454 = vmatmul.mubr.f32.gmra.mrb[0].mxu0 %v1327
  %v1455 = vpop.f32.mrb[0].mxu0
  %v1456 = vadd.f32 0.0, %v1455
  %v1457 = vpop.f32.mrb[0].mxu0
  %1458 = vdwg.mxu0
  %1459 = vst [vmem:[#allocation2 + $0x50] sm:$0xff] %v1411
  %1460 = vst [vmem:[#allocation2 + $0x58] sm:$0xff] %v1416
  %1461 = vst [vmem:[#allocation2 + $0x60] sm:$0xff] %v1421
  %1462 = vst [vmem:[#allocation2 + $0x68] sm:$0xff] %v1426
  %1463 = vst [vmem:[#allocation2 + $0x70] sm:$0xff] %v1431
  %1464 = vst [vmem:[#allocation2 + $0x78] sm:$0xff] %v1436
  %1465 = vst [vmem:[#allocation2 + $0x80] sm:$0xff] %v1441
  %1466 = vst [vmem:[#allocation2 + $0x88] sm:$0xff] %v1446
  %1467 = vst [vmem:[#allocation2 + $0x90] sm:$0xff] %v1451
  %1468 = vst [vmem:[#allocation2 + $0x98] sm:$0xff] %v1456
  %v1469 = vadd.f32 %v1411, %v1416
  %v1470 = vadd.f32 %v1469, %v1421
  %v1471 = vadd.f32 %v1470, %v1426
  %v1472 = vadd.f32 %v1471, %v1431
  %v1473 = vadd.f32 %v1472, %v1436
  %v1474 = vadd.f32 %v1473, %v1441
  %v1475 = vadd.f32 %v1474, %v1446
  %v1476 = vadd.f32 %v1475, %v1451
  %v1477 = vadd.f32 %v1476, %v1456
  %v1478 = vrot.slane %v1477, 4
  %v1479 = vadd.f32 %v1477, %v1478
  %v1480 = vrot.slane %v1479, 2
  %v1481 = vadd.f32 %v1479, %v1480
  %v1482 = vrot.slane %v1481, 1
  %v1483 = vadd.f32 %v1481, %v1482
  %v1484 = vadd.f32 %v1291, %v1483
  %v1485 = vmul.f32 %v1411, %v1411
  %v1486 = vmul.f32 %v1416, %v1416
  %v1487 = vmul.f32 %v1421, %v1421
  %v1488 = vmul.f32 %v1426, %v1426
  %v1489 = vmul.f32 %v1431, %v1431
  %v1490 = vmul.f32 %v1436, %v1436
  %v1491 = vmul.f32 %v1441, %v1441
  %v1492 = vmul.f32 %v1446, %v1446
  %v1493 = vmul.f32 %v1451, %v1451
  %v1494 = vmul.f32 %v1456, %v1456
  %v1495 = vadd.f32 %v1485, %v1486
  %v1496 = vadd.f32 %v1495, %v1487
  %v1497 = vadd.f32 %v1496, %v1488
  %v1498 = vadd.f32 %v1497, %v1489
  %v1499 = vadd.f32 %v1498, %v1490
  %v1500 = vadd.f32 %v1499, %v1491
  %v1501 = vadd.f32 %v1500, %v1492
  %v1502 = vadd.f32 %v1501, %v1493
  %v1503 = vadd.f32 %v1502, %v1494
  %v1504 = vrot.slane %v1503, 4
  %v1505 = vadd.f32 %v1503, %v1504
  %v1506 = vrot.slane %v1505, 2
  %v1507 = vadd.f32 %v1505, %v1506
  %v1508 = vrot.slane %v1507, 1
  %v1509 = vadd.f32 %v1507, %v1508
  %v1510 = vadd.f32 %v1317, %v1509
  %v1511 = vld [vmem:[%s0 + $0xa0] sm:$0xff]
  %v1512 = vld [vmem:[%s0 + $0xa8] sm:$0xff]
  %v1513 = vld [vmem:[%s0 + $0xb0] sm:$0xff]
  %v1514 = vld [vmem:[%s0 + $0xb8] sm:$0xff]
  %v1515 = vld [vmem:[%s0 + $0xc0] sm:$0xff]
  %v1516 = vld [vmem:[%s0 + $0xc8] sm:$0xff]
  %v1517 = vld [vmem:[%s0 + $0xd0] sm:$0xff]
  %v1518 = vld [vmem:[%s0 + $0xd8] sm:$0xff]
  %v1519 = vld [vmem:[%s0 + $0xe0] sm:$0xff]
  %v1520 = vld [vmem:[%s0 + $0xe8] sm:$0xff]
  %v1521 = vld [vmem:[%s1] sm:$0xff]
  %v1522 = vld [vmem:[%s1 + $0x8] sm:$0xff]
  %v1523 = vld [vmem:[%s1 + $0x10] sm:$0xff]
  %v1524 = vld [vmem:[%s1 + $0x18] sm:$0xff]
  %v1525 = vld [vmem:[%s1 + $0x20] sm:$0xff]
  %v1526 = vld [vmem:[%s1 + $0x28] sm:$0xff]
  %v1527 = vld [vmem:[%s1 + $0x30] sm:$0xff]
  %v1528 = vld [vmem:[%s1 + $0x38] sm:$0xff]
  %v1529 = vld [vmem:[%s1 + $0x40] sm:$0xff]
  %v1530 = vld [vmem:[%s1 + $0x48] sm:$0xff]
  %v1531 = vld [vmem:[%s1 + $0x50] sm:$0xff]
  %v1532 = vld [vmem:[%s1 + $0x58] sm:$0xff]
  %v1533 = vld [vmem:[%s1 + $0x60] sm:$0xff]
  %v1534 = vld [vmem:[%s1 + $0x68] sm:$0xff]
  %v1535 = vld [vmem:[%s1 + $0x70] sm:$0xff]
  %v1536 = vld [vmem:[%s1 + $0x78] sm:$0xff]
  %1537 = vmatprep.subr.mxu0 0.0
  %1538 = vmatpush1.msra.mxu0 %v1521
  %1539 = vmatprep.subr.mxu0 0.0
  %1540 = vmatpush1.msra.mxu0 %v1522
  %1541 = vmatprep.subr.mxu0 0.0
  %1542 = vmatpush1.msra.mxu0 %v1523
  %1543 = vmatprep.subr.mxu0 0.0
  %1544 = vmatpush1.msra.mxu0 %v1524
  %1545 = vmatprep.subr.mxu0 0.0
  %1546 = vmatpush1.msra.mxu0 %v1525
  %1547 = vmatprep.subr.mxu0 0.0
  %1548 = vmatpush1.msra.mxu0 %v1526
  %1549 = vmatprep.subr.mxu0 0.0
  %1550 = vmatpush1.msra.mxu0 %v1527
  %1551 = vmatprep.subr.mxu0 0.0
  %1552 = vmatpush1.msra.mxu0 %v1528
  %1553 = vmatprep.subr.mxu0 0.0
  %1554 = vmatpush1.msra.mxu0 %v1529
  %1555 = vmatprep.subr.mxu0 0.0
  %1556 = vmatpush1.msra.mxu0 %v1530
  %1557 = vmatprep.subr.mxu0 0.0
  %1558 = vmatpush1.msra.mxu0 %v1531
  %1559 = vmatprep.subr.mxu0 0.0
  %1560 = vmatpush1.msra.mxu0 %v1532
  %1561 = vmatprep.subr.mxu0 0.0
  %1562 = vmatpush1.msra.mxu0 %v1533
  %1563 = vmatprep.subr.mxu0 0.0
  %1564 = vmatpush1.msra.mxu0 %v1534
  %1565 = vmatprep.subr.mxu0 0.0
  %1566 = vmatpush1.msra.mxu0 %v1535
  %1567 = vmatprep.subr.mxu0 0.0
  %1568 = vmatpush1.msra.mxu0 %v1536
  %1569 = vmatprep.subr.mxu0 0.0
  %1570 = vmatpush1.msra.mxu0 0.0
  %1571 = vmatprep.subr.mxu0 0.0
  %1572 = vmatpush1.msra.mxu0 0.0
  %1573 = vmatprep.subr.mxu0 0.0
  %1574 = vmatpush1.msra.mxu0 0.0
  %1575 = vmatprep.subr.mxu0 0.0
  %1576 = vmatpush1.msra.mxu0 0.0
  %1577 = vmatprep.subr.mxu0 0.0
  %1578 = vmatpush1.msra.mxu0 0.0
  %1579 = vmatprep.subr.mxu0 0.0
  %1580 = vmatpush1.msra.mxu0 0.0
  %1581 = vmatprep.subr.mxu0 0.0
  %1582 = vmatpush1.msra.mxu0 0.0
  %1583 = vmatprep.subr.mxu0 0.0
  %1584 = vmatpush1.msra.mxu0 0.0
  %1585 = vmatprep.subr.mxu0 0.0
  %1586 = vmatpush1.msra.mxu0 0.0
  %1587 = vmatprep.subr.mxu0 0.0
  %1588 = vmatpush1.msra.mxu0 0.0
  %1589 = vmatprep.subr.mxu0 0.0
  %1590 = vmatpush1.msra.mxu0 0.0
  %1591 = vmatprep.subr.mxu0 0.0
  %1592 = vmatpush1.msra.mxu0 0.0
  %1593 = vmatprep.subr.mxu0 0.0
  %1594 = vmatpush1.msra.mxu0 0.0
  %1595 = vmatprep.subr.mxu0 0.0
  %1596 = vmatpush1.msra.mxu0 0.0
  %1597 = vmatprep.subr.mxu0 0.0
  %1598 = vmatpush1.msra.mxu0 0.0
  %1599 = vmatprep.subr.mxu0 0.0
  %1600 = vmatpush1.msra.mxu0 0.0
  %1601 = vmatprep.mubr.f32.mxu0 0.0
  %1602 = vmatmul.mubr.f32.gmra.mrb[0].mxu0 %v1511
  %v1603 = vpop.f32.mrb[0].mxu0
  %v1604 = vadd.f32 0.0, %v1603
  %v1605 = vpop.f32.mrb[0].mxu0
  %1606 = vmatprep.mubr.f32.mxu0 0.0
  %1607 = vmatmul.mubr.f32.gmra.mrb[0].mxu0 %v1512
  %v1608 = vpop.f32.mrb[0].mxu0
  %v1609 = vadd.f32 0.0, %v1608
  %v1610 = vpop.f32.mrb[0].mxu0
  %1611 = vmatprep.mubr.f32.mxu0 0.0
  %1612 = vmatmul.mubr.f32.gmra.mrb[0].mxu0 %v1513
  %v1613 = vpop.f32.mrb[0].mxu0
  %v1614 = vadd.f32 0.0, %v1613
  %v1615 = vpop.f32.mrb[0].mxu0
  %1616 = vmatprep.mubr.f32.mxu0 0.0
  %1617 = vmatmul.mubr.f32.gmra.mrb[0].mxu0 %v1514
  %v1618 = vpop.f32.mrb[0].mxu0
  %v1619 = vadd.f32 0.0, %v1618
  %v1620 = vpop.f32.mrb[0].mxu0
  %1621 = vmatprep.mubr.f32.mxu0 0.0
  %1622 = vmatmul.mubr.f32.gmra.mrb[0].mxu0 %v1515
  %v1623 = vpop.f32.mrb[0].mxu0
  %v1624 = vadd.f32 0.0, %v1623
  %v1625 = vpop.f32.mrb[0].mxu0
  %1626 = vmatprep.mubr.f32.mxu0 0.0
  %1627 = vmatmul.mubr.f32.gmra.mrb[0].mxu0 %v1516
  %v1628 = vpop.f32.mrb[0].mxu0
  %v1629 = vadd.f32 0.0, %v1628
  %v1630 = vpop.f32.mrb[0].mxu0
  %1631 = vmatprep.mubr.f32.mxu0 0.0
  %1632 = vmatmul.mubr.f32.gmra.mrb[0].mxu0 %v1517
  %v1633 = vpop.f32.mrb[0].mxu0
  %v1634 = vadd.f32 0.0, %v1633
  %v1635 = vpop.f32.mrb[0].mxu0
  %1636 = vmatprep.mubr.f32.mxu0 0.0
  %1637 = vmatmul.mubr.f32.gmra.mrb[0].mxu0 %v1518
  %v1638 = vpop.f32.mrb[0].mxu0
  %v1639 = vadd.f32 0.0, %v1638
  %v1640 = vpop.f32.mrb[0].mxu0
  %1641 = vmatprep.mubr.f32.mxu0 0.0
  %1642 = vmatmul.mubr.f32.gmra.mrb[0].mxu0 %v1519
  %v1643 = vpop.f32.mrb[0].mxu0
  %v1644 = vadd.f32 0.0, %v1643
  %v1645 = vpop.f32.mrb[0].mxu0
  %1646 = vmatprep.mubr.f32.mxu0 0.0
  %1647 = vmatmul.mubr.f32.gmra.mrb[0].mxu0 %v1520
  %v1648 = vpop.f32.mrb[0].mxu0
  %v1649 = vadd.f32 0.0, %v1648
  %v1650 = vpop.f32.mrb[0].mxu0
  %1651 = vdwg.mxu0
  %1652 = vst [vmem:[#allocation2 + $0xa0] sm:$0xff] %v1604
  %1653 = vst [vmem:[#allocation2 + $0xa8] sm:$0xff] %v1609
  %1654 = vst [vmem:[#allocation2 + $0xb0] sm:$0xff] %v1614
  %1655 = vst [vmem:[#allocation2 + $0xb8] sm:$0xff] %v1619
  %1656 = vst [vmem:[#allocation2 + $0xc0] sm:$0xff] %v1624
  %1657 = vst [vmem:[#allocation2 + $0xc8] sm:$0xff] %v1629
  %1658 = vst [vmem:[#allocation2 + $0xd0] sm:$0xff] %v1634
  %1659 = vst [vmem:[#allocation2 + $0xd8] sm:$0xff] %v1639
  %1660 = vst [vmem:[#allocation2 + $0xe0] sm:$0xff] %v1644
  %1661 = vst [vmem:[#allocation2 + $0xe8] sm:$0xff] %v1649
  %v1662 = vadd.f32 %v1604, %v1609
  %v1663 = vadd.f32 %v1662, %v1614
  %v1664 = vadd.f32 %v1663, %v1619
  %v1665 = vadd.f32 %v1664, %v1624
  %v1666 = vadd.f32 %v1665, %v1629
  %v1667 = vadd.f32 %v1666, %v1634
  %v1668 = vadd.f32 %v1667, %v1639
  %v1669 = vadd.f32 %v1668, %v1644
  %v1670 = vadd.f32 %v1669, %v1649
  %v1671 = vrot.slane %v1670, 4
  %v1672 = vadd.f32 %v1670, %v1671
  %v1673 = vrot.slane %v1672, 2
  %v1674 = vadd.f32 %v1672, %v1673
  %v1675 = vrot.slane %v1674, 1
  %v1676 = vadd.f32 %v1674, %v1675
  %v1677 = vadd.f32 %v1484, %v1676
  %v1678 = vmul.f32 %v1604, %v1604
  %v1679 = vmul.f32 %v1609, %v1609
  %v1680 = vmul.f32 %v1614, %v1614
  %v1681 = vmul.f32 %v1619, %v1619
  %v1682 = vmul.f32 %v1624, %v1624
  %v1683 = vmul.f32 %v1629, %v1629
  %v1684 = vmul.f32 %v1634, %v1634
  %v1685 = vmul.f32 %v1639, %v1639
  %v1686 = vmul.f32 %v1644, %v1644
  %v1687 = vmul.f32 %v1649, %v1649
  %v1688 = vadd.f32 %v1678, %v1679
  %v1689 = vadd.f32 %v1688, %v1680
  %v1690 = vadd.f32 %v1689, %v1681
  %v1691 = vadd.f32 %v1690, %v1682
  %v1692 = vadd.f32 %v1691, %v1683
  %v1693 = vadd.f32 %v1692, %v1684
  %v1694 = vadd.f32 %v1693, %v1685
  %v1695 = vadd.f32 %v1694, %v1686
  %v1696 = vadd.f32 %v1695, %v1687
  %v1697 = vrot.slane %v1696, 4
  %v1698 = vadd.f32 %v1696, %v1697
  %v1699 = vrot.slane %v1698, 2
  %v1700 = vadd.f32 %v1698, %v1699
  %v1701 = vrot.slane %v1700, 1
  %v1702 = vadd.f32 %v1700, %v1701
  %v1703 = vadd.f32 %v1510, %v1702
  %v1704 = vld [vmem:[%s0 + $0xf0] sm:$0xff]
  %v1705 = vld [vmem:[%s0 + $0xf8] sm:$0xff]
  %v1706 = vld [vmem:[%s0 + $0x100] sm:$0xff]
  %v1707 = vld [vmem:[%s0 + $0x108] sm:$0xff]
  %v1708 = vld [vmem:[%s0 + $0x110] sm:$0xff]
  %v1709 = vld [vmem:[%s0 + $0x118] sm:$0xff]
  %v1710 = vld [vmem:[%s0 + $0x120] sm:$0xff]
  %v1711 = vld [vmem:[%s0 + $0x128] sm:$0xff]
  %v1712 = vld [vmem:[%s0 + $0x130] sm:$0xff]
  %v1713 = vld [vmem:[%s0 + $0x138] sm:$0xff]
  %v1714 = vld [vmem:[%s1] sm:$0xff]
  %v1715 = vld [vmem:[%s1 + $0x8] sm:$0xff]
  %v1716 = vld [vmem:[%s1 + $0x10] sm:$0xff]
  %v1717 = vld [vmem:[%s1 + $0x18] sm:$0xff]
  %v1718 = vld [vmem:[%s1 + $0x20] sm:$0xff]
  %v1719 = vld [vmem:[%s1 + $0x28] sm:$0xff]
  %v1720 = vld [vmem:[%s1 + $0x30] sm:$0xff]
  %v1721 = vld [vmem:[%s1 + $0x38] sm:$0xff]
  %v1722 = vld [vmem:[%s1 + $0x40] sm:$0xff]
  %v1723 = vld [vmem:[%s1 + $0x48] sm:$0xff]
  %v1724 = vld [vmem:[%s1 + $0x50] sm:$0xff]
  %v1725 = vld [vmem:[%s1 + $0x58] sm:$0xff]
  %v1726 = vld [vmem:[%s1 + $0x60] sm:$0xff]
  %v1727 = vld [vmem:[%s1 + $0x68] sm:$0xff]
  %v1728 = vld [vmem:[%s1 + $0x70] sm:$0xff]
  %v1729 = vld [vmem:[%s1 + $0x78] sm:$0xff]
  %1730 = vmatprep.subr.mxu0 0.0
  %1731 = vmatpush1.msra.mxu0 %v1714
  %1732 = vmatprep.subr.mxu0 0.0
  %1733 = vmatpush1.msra.mxu0 %v1715
  %1734 = vmatprep.subr.mxu0 0.0
  %1735 = vmatpush1.msra.mxu0 %v1716
  %1736 = vmatprep.subr.mxu0 0.0
  %1737 = vmatpush1.msra.mxu0 %v1717
  %1738 = vmatprep.subr.mxu0 0.0
  %1739 = vmatpush1.msra.mxu0 %v1718
  %1740 = vmatprep.subr.mxu0 0.0
  %1741 = vmatpush1.msra.mxu0 %v1719
  %1742 = vmatprep.subr.mxu0 0.0
  %1743 = vmatpush1.msra.mxu0 %v1720
  %1744 = vmatprep.subr.mxu0 0.0
  %1745 = vmatpush1.msra.mxu0 %v1721
  %1746 = vmatprep.subr.mxu0 0.0
  %1747 = vmatpush1.msra.mxu0 %v1722
  %1748 = vmatprep.subr.mxu0 0.0
  %1749 = vmatpush1.msra.mxu0 %v1723
  %1750 = vmatprep.subr.mxu0 0.0
  %1751 = vmatpush1.msra.mxu0 %v1724
  %1752 = vmatprep.subr.mxu0 0.0
  %1753 = vmatpush1.msra.mxu0 %v1725
  %1754 = vmatprep.subr.mxu0 0.0
  %1755 = vmatpush1.msra.mxu0 %v1726
  %1756 = vmatprep.subr.mxu0 0.0
  %1757 = vmatpush1.msra.mxu0 %v1727
  %1758 = vmatprep.subr.mxu0 0.0
  %1759 = vmatpush1.msra.mxu0 %v1728
  %1760 = vmatprep.subr.mxu0 0.0
  %1761 = vmatpush1.msra.mxu0 %v1729
  %1762 = vmatprep.subr.mxu0 0.0
  %1763 = vmatpush1.msra.mxu0 0.0
  %1764 = vmatprep.subr.mxu0 0.0
  %1765 = vmatpush1.msra.mxu0 0.0
  %1766 = vmatprep.subr.mxu0 0.0
  %1767 = vmatpush1.msra.mxu0 0.0
  %1768 = vmatprep.subr.mxu0 0.0
  %1769 = vmatpush1.msra.mxu0 0.0
  %1770 = vmatprep.subr.mxu0 0.0
  %1771 = vmatpush1.msra.mxu0 0.0
  %1772 = vmatprep.subr.mxu0 0.0
  %1773 = vmatpush1.msra.mxu0 0.0
  %1774 = vmatprep.subr.mxu0 0.0
  %1775 = vmatpush1.msra.mxu0 0.0
  %1776 = vmatprep.subr.mxu0 0.0
  %1777 = vmatpush1.msra.mxu0 0.0
  %1778 = vmatprep.subr.mxu0 0.0
  %1779 = vmatpush1.msra.mxu0 0.0
  %1780 = vmatprep.subr.mxu0 0.0
  %1781 = vmatpush1.msra.mxu0 0.0
  %1782 = vmatprep.subr.mxu0 0.0
  %1783 = vmatpush1.msra.mxu0 0.0
  %1784 = vmatprep.subr.mxu0 0.0
  %1785 = vmatpush1.msra.mxu0 0.0
  %1786 = vmatprep.subr.mxu0 0.0
  %1787 = vmatpush1.msra.mxu0 0.0
  %1788 = vmatprep.subr.mxu0 0.0
  %1789 = vmatpush1.msra.mxu0 0.0
  %1790 = vmatprep.subr.mxu0 0.0
  %1791 = vmatpush1.msra.mxu0 0.0
  %1792 = vmatprep.subr.mxu0 0.0
  %1793 = vmatpush1.msra.mxu0 0.0
  %1794 = vmatprep.mubr.f32.mxu0 0.0
  %1795 = vmatmul.mubr.f32.gmra.mrb[0].mxu0 %v1704
  %v1796 = vpop.f32.mrb[0].mxu0
  %v1797 = vadd.f32 0.0, %v1796
  %v1798 = vpop.f32.mrb[0].mxu0
  %1799 = vmatprep.mubr.f32.mxu0 0.0
  %1800 = vmatmul.mubr.f32.gmra.mrb[0].mxu0 %v1705
  %v1801 = vpop.f32.mrb[0].mxu0
  %v1802 = vadd.f32 0.0, %v1801
  %v1803 = vpop.f32.mrb[0].mxu0
  %1804 = vmatprep.mubr.f32.mxu0 0.0
  %1805 = vmatmul.mubr.f32.gmra.mrb[0].mxu0 %v1706
  %v1806 = vpop.f32.mrb[0].mxu0
  %v1807 = vadd.f32 0.0, %v1806
  %v1808 = vpop.f32.mrb[0].mxu0
  %1809 = vmatprep.mubr.f32.mxu0 0.0
  %1810 = vmatmul.mubr.f32.gmra.mrb[0].mxu0 %v1707
  %v1811 = vpop.f32.mrb[0].mxu0
  %v1812 = vadd.f32 0.0, %v1811
  %v1813 = vpop.f32.mrb[0].mxu0
  %1814 = vmatprep.mubr.f32.mxu0 0.0
  %1815 = vmatmul.mubr.f32.gmra.mrb[0].mxu0 %v1708
  %v1816 = vpop.f32.mrb[0].mxu0
  %v1817 = vadd.f32 0.0, %v1816
  %v1818 = vpop.f32.mrb[0].mxu0
  %1819 = vmatprep.mubr.f32.mxu0 0.0
  %1820 = vmatmul.mubr.f32.gmra.mrb[0].mxu0 %v1709
  %v1821 = vpop.f32.mrb[0].mxu0
  %v1822 = vadd.f32 0.0, %v1821
  %v1823 = vpop.f32.mrb[0].mxu0
  %1824 = vmatprep.mubr.f32.mxu0 0.0
  %1825 = vmatmul.mubr.f32.gmra.mrb[0].mxu0 %v1710
  %v1826 = vpop.f32.mrb[0].mxu0
  %v1827 = vadd.f32 0.0, %v1826
  %v1828 = vpop.f32.mrb[0].mxu0
  %1829 = vmatprep.mubr.f32.mxu0 0.0
  %1830 = vmatmul.mubr.f32.gmra.mrb[0].mxu0 %v1711
  %v1831 = vpop.f32.mrb[0].mxu0
  %v1832 = vadd.f32 0.0, %v1831
  %v1833 = vpop.f32.mrb[0].mxu0
  %1834 = vmatprep.mubr.f32.mxu0 0.0
  %1835 = vmatmul.mubr.f32.gmra.mrb[0].mxu0 %v1712
  %v1836 = vpop.f32.mrb[0].mxu0
  %v1837 = vadd.f32 0.0, %v1836
  %v1838 = vpop.f32.mrb[0].mxu0
  %1839 = vmatprep.mubr.f32.mxu0 0.0
  %1840 = vmatmul.mubr.f32.gmra.mrb[0].mxu0 %v1713
  %v1841 = vpop.f32.mrb[0].mxu0
  %v1842 = vadd.f32 0.0, %v1841
  %v1843 = vpop.f32.mrb[0].mxu0
  %1844 = vdwg.mxu0
  %1845 = vst [vmem:[#allocation2 + $0xf0] sm:$0xff] %v1797
  %1846 = vst [vmem:[#allocation2 + $0xf8] sm:$0xff] %v1802
  %1847 = vst [vmem:[#allocation2 + $0x100] sm:$0xff] %v1807
  %1848 = vst [vmem:[#allocation2 + $0x108] sm:$0xff] %v1812
  %1849 = vst [vmem:[#allocation2 + $0x110] sm:$0xff] %v1817
  %1850 = vst [vmem:[#allocation2 + $0x118] sm:$0xff] %v1822
  %1851 = vst [vmem:[#allocation2 + $0x120] sm:$0xff] %v1827
  %1852 = vst [vmem:[#allocation2 + $0x128] sm:$0xff] %v1832
  %1853 = vst [vmem:[#allocation2 + $0x130] sm:$0xff] %v1837
  %1854 = vst [vmem:[#allocation2 + $0x138] sm:$0xff] %v1842
  %v1855 = vadd.f32 %v1797, %v1802
  %v1856 = vadd.f32 %v1855, %v1807
  %v1857 = vadd.f32 %v1856, %v1812
  %v1858 = vadd.f32 %v1857, %v1817
  %v1859 = vadd.f32 %v1858, %v1822
  %v1860 = vadd.f32 %v1859, %v1827
  %v1861 = vadd.f32 %v1860, %v1832
  %v1862 = vadd.f32 %v1861, %v1837
  %v1863 = vadd.f32 %v1862, %v1842
  %v1864 = vrot.slane %v1863, 4
  %v1865 = vadd.f32 %v1863, %v1864
  %v1866 = vrot.slane %v1865, 2
  %v1867 = vadd.f32 %v1865, %v1866
  %v1868 = vrot.slane %v1867, 1
  %v1869 = vadd.f32 %v1867, %v1868
  %v1870 = vadd.f32 %v1677, %v1869
  %v1871 = vmul.f32 %v1797, %v1797
  %v1872 = vmul.f32 %v1802, %v1802
  %v1873 = vmul.f32 %v1807, %v1807
  %v1874 = vmul.f32 %v1812, %v1812
  %v1875 = vmul.f32 %v1817, %v1817
  %v1876 = vmul.f32 %v1822, %v1822
  %v1877 = vmul.f32 %v1827, %v1827
  %v1878 = vmul.f32 %v1832, %v1832
  %v1879 = vmul.f32 %v1837, %v1837
  %v1880 = vmul.f32 %v1842, %v1842
  %v1881 = vadd.f32 %v1871, %v1872
  %v1882 = vadd.f32 %v1881, %v1873
  %v1883 = vadd.f32 %v1882, %v1874
  %v1884 = vadd.f32 %v1883, %v1875
  %v1885 = vadd.f32 %v1884, %v1876
  %v1886 = vadd.f32 %v1885, %v1877
  %v1887 = vadd.f32 %v1886, %v1878
  %v1888 = vadd.f32 %v1887, %v1879
  %v1889 = vadd.f32 %v1888, %v1880
  %v1890 = vrot.slane %v1889, 4
  %v1891 = vadd.f32 %v1889, %v1890
  %v1892 = vrot.slane %v1891, 2
  %v1893 = vadd.f32 %v1891, %v1892
  %v1894 = vrot.slane %v1893, 1
  %v1895 = vadd.f32 %v1893, %v1894
  %v1896 = vadd.f32 %v1703, %v1895
  %v1897 = vrcp.pop 292.0
  %v1898 = vmul.f32 %v1870, %v1897
  %v1899 = vmul.f32 %v1896, %v1897
  %v1900 = vmul.f32 %v1898, %v1898
  %v1901 = vsub.f32 %v1899, %v1900
  %v1902 = vadd.f32 %v1901, 1e-05
  %v1903 = vrsqrt.pop %v1902
  %v1904 = vld [vmem:[#allocation2] sm:$0xff]
  %v1905 = vld [vmem:[#allocation2 + $0x8] sm:$0xff]
  %v1906 = vld [vmem:[#allocation2 + $0x10] sm:$0xff]
  %v1907 = vld [vmem:[#allocation2 + $0x18] sm:$0xff]
  %v1908 = vld [vmem:[#allocation2 + $0x20] sm:$0xff]
  %v1909 = vld [vmem:[#allocation2 + $0x28] sm:$0xff]
  %v1910 = vld [vmem:[#allocation2 + $0x30] sm:$0xff]
  %v1911 = vld [vmem:[#allocation2 + $0x38] sm:$0xff]
  %v1912 = vld [vmem:[#allocation2 + $0x40] sm:$0xff]
  %v1913 = vld [vmem:[#allocation2 + $0x48] sm:$0xff]
  %v1914 = vsub.f32 %v1904, %v1898
  %v1915 = vsub.f32 %v1905, %v1898
  %v1916 = vsub.f32 %v1906, %v1898
  %v1917 = vsub.f32 %v1907, %v1898
  %v1918 = vsub.f32 %v1908, %v1898
  %v1919 = vsub.f32 %v1909, %v1898
  %v1920 = vsub.f32 %v1910, %v1898
  %v1921 = vsub.f32 %v1911, %v1898
  %v1922 = vsub.f32 %v1912, %v1898
  %v1923 = vsub.f32 %v1913, %v1898
  %v1924 = vmul.f32 %v1914, %v1903
  %v1925 = vmul.f32 %v1915, %v1903
  %v1926 = vmul.f32 %v1916, %v1903
  %v1927 = vmul.f32 %v1917, %v1903
  %v1928 = vmul.f32 %v1918, %v1903
  %v1929 = vmul.f32 %v1919, %v1903
  %v1930 = vmul.f32 %v1920, %v1903
  %v1931 = vmul.f32 %v1921, %v1903
  %v1932 = vmul.f32 %v1922, %v1903
  %v1933 = vmul.f32 %v1923, %v1903
  %v1934 = vmax.f32 %v1924, 0.0
  %v1935 = vmax.f32 %v1925, 0.0
  %v1936 = vmax.f32 %v1926, 0.0
  %v1937 = vmax.f32 %v1927, 0.0
  %v1938 = vmax.f32 %v1928, 0.0
  %v1939 = vmax.f32 %v1929, 0.0
  %v1940 = vmax.f32 %v1930, 0.0
  %v1941 = vmax.f32 %v1931, 0.0
  %v1942 = vmax.f32 %v1932, 0.0
  %v1943 = vmax.f32 %v1933, 0.0
  %1944 = vst [vmem:[#allocation2] sm:$0xff] %v1934
  %1945 = vst [vmem:[#allocation2 + $0x8] sm:$0xff] %v1935
  %1946 = vst [vmem:[#allocation2 + $0x10] sm:$0xff] %v1936
  %1947 = vst [vmem:[#allocation2 + $0x18] sm:$0xff] %v1937
  %1948 = vst [vmem:[#allocation2 + $0x20] sm:$0xff] %v1938
  %1949 = vst [vmem:[#allocation2 + $0x28] sm:$0xff] %v1939
  %1950 = vst [vmem:[#allocation2 + $0x30] sm:$0xff] %v1940
  %1951 = vst [vmem:[#allocation2 + $0x38] sm:$0xff] %v1941
  %1952 = vst [vmem:[#allocation2 + $0x40] sm:$0xff] %v1942
  %1953 = vst [vmem:[#allocation2 + $0x48] sm:$0xff] %v1943
  %v1954 = vld [vmem:[#allocation2 + $0x50] sm:$0xff]
  %v1955 = vld [vmem:[#allocation2 + $0x58] sm:$0xff]
  %v1956 = vld [vmem:[#allocation2 + $0x60] sm:$0xff]
  %v1957 = vld [vmem:[#allocation2 + $0x68] sm:$0xff]
  %v1958 = vld [vmem:[#allocation2 + $0x70] sm:$0xff]
  %v1959 = vld [vmem:[#allocation2 + $0x78] sm:$0xff]
  %v1960 = vld [vmem:[#allocation2 + $0x80] sm:$0xff]
  %v1961 = vld [vmem:[#allocation2 + $0x88] sm:$0xff]
  %v1962 = vld [vmem:[#allocation2 + $0x90] sm:$0xff]
  %v1963 = vld [vmem:[#allocation2 + $0x98] sm:$0xff]
  %v1964 = vsub.f32 %v1954, %v1898
  %v1965 = vsub.f32 %v1955, %v1898
  %v1966 = vsub.f32 %v1956, %v1898
  %v1967 = vsub.f32 %v1957, %v1898
  %v1968 = vsub.f32 %v1958, %v1898
  %v1969 = vsub.f32 %v1959, %v1898
  %v1970 = vsub.f32 %v1960, %v1898
  %v1971 = vsub.f32 %v1961, %v1898
  %v1972 = vsub.f32 %v1962, %v1898
  %v1973 = vsub.f32 %v1963, %v1898
  %v1974 = vmul.f32 %v1964, %v1903
  %v1975 = vmul.f32 %v1965, %v1903
  %v1976 = vmul.f32 %v1966, %v1903
  %v1977 = vmul.f32 %v1967, %v1903
  %v1978 = vmul.f32 %v1968, %v1903
  %v1979 = vmul.f32 %v1969, %v1903
  %v1980 = vmul.f32 %v1970, %v1903
  %v1981 = vmul.f32 %v1971, %v1903
  %v1982 = vmul.f32 %v1972, %v1903
  %v1983 = vmul.f32 %v1973, %v1903
  %v1984 = vmax.f32 %v1974, 0.0
  %v1985 = vmax.f32 %v1975, 0.0
  %v1986 = vmax.f32 %v1976, 0.0
  %v1987 = vmax.f32 %v1977, 0.0
  %v1988 = vmax.f32 %v1978, 0.0
  %v1989 = vmax.f32 %v1979, 0.0
  %v1990 = vmax.f32 %v1980, 0.0
  %v1991 = vmax.f32 %v1981, 0.0
  %v1992 = vmax.f32 %v1982, 0.0
  %v1993 = vmax.f32 %v1983, 0.0
  %1994 = vst [vmem:[#allocation2 + $0x50] sm:$0xff] %v1984
  %1995 = vst [vmem:[#allocation2 + $0x58] sm:$0xff] %v1985
  %1996 = vst [vmem:[#allocation2 + $0x60] sm:$0xff] %v1986
  %1997 = vst [vmem:[#allocation2 + $0x68] sm:$0xff] %v1987
  %1998 = vst [vmem:[#allocation2 + $0x70] sm:$0xff] %v1988
  %1999 = vst [vmem:[#allocation2 + $0x78] sm:$0xff] %v1989
  %2000 = vst [vmem:[#allocation2 + $0x80] sm:$0xff] %v1990
  %2001 = vst [vmem:[#allocation2 + $0x88] sm:$0xff] %v1991
  %2002 = vst [vmem:[#allocation2 + $0x90] sm:$0xff] %v1992
  %2003 = vst [vmem:[#allocation2 + $0x98] sm:$0xff] %v1993
  %v2004 = vld [vmem:[#allocation2 + $0xa0] sm:$0xff]
  %v2005 = vld [vmem:[#allocation2 + $0xa8] sm:$0xff]
  %v2006 = vld [vmem:[#allocation2 + $0xb0] sm:$0xff]
  %v2007 = vld [vmem:[#allocation2 + $0xb8] sm:$0xff]
  %v2008 = vld [vmem:[#allocation2 + $0xc0] sm:$0xff]
  %v2009 = vld [vmem:[#allocation2 + $0xc8] sm:$0xff]
  %v2010 = vld [vmem:[#allocation2 + $0xd0] sm:$0xff]
  %v2011 = vld [vmem:[#allocation2 + $0xd8] sm:$0xff]
  %v2012 = vld [vmem:[#allocation2 + $0xe0] sm:$0xff]
  %v2013 = vld [vmem:[#allocation2 + $0xe8] sm:$0xff]
  %v2014 = vsub.f32 %v2004, %v1898
  %v2015 = vsub.f32 %v2005, %v1898
  %v2016 = vsub.f32 %v2006, %v1898
  %v2017 = vsub.f32 %v2007, %v1898
  %v2018 = vsub.f32 %v2008, %v1898
  %v2019 = vsub.f32 %v2009, %v1898
  %v2020 = vsub.f32 %v2010, %v1898
  %v2021 = vsub.f32 %v2011, %v1898
  %v2022 = vsub.f32 %v2012, %v1898
  %v2023 = vsub.f32 %v2013, %v1898
  %v2024 = vmul.f32 %v2014, %v1903
  %v2025 = vmul.f32 %v2015, %v1903
  %v2026 = vmul.f32 %v2016, %v1903
  %v2027 = vmul.f32 %v2017, %v1903
  %v2028 = vmul.f32 %v2018, %v1903
  %v2029 = vmul.f32 %v2019, %v1903
  %v2030 = vmul.f32 %v2020, %v1903
  %v2031 = vmul.f32 %v2021, %v1903
  %v2032 = vmul.f32 %v2022, %v1903
  %v2033 = vmul.f32 %v2023, %v1903
  %v2034 = vmax.f32 %v2024, 0.0
  %v2035 = vmax.f32 %v2025, 0.0
  %v2036 = vmax.f32 %v2026, 0.0
  %v2037 = vmax.f32 %v2027, 0.0
  %v2038 = vmax.f32 %v2028, 0.0
  %v2039 = vmax.f32 %v2029, 0.0
  %v2040 = vmax.f32 %v2030, 0.0
  %v2041 = vmax.f32 %v2031, 0.0
  %v2042 = vmax.f32 %v2032, 0.0
  %v2043 = vmax.f32 %v2033, 0.0
  %2044 = vst [vmem:[#allocation2 + $0xa0] sm:$0xff] %v2034
  %2045 = vst [vmem:[#allocation2 + $0xa8] sm:$0xff] %v2035
  %2046 = vst [vmem:[#allocation2 + $0xb0] sm:$0xff] %v2036
  %2047 = vst [vmem:[#allocation2 + $0xb8] sm:$0xff] %v2037
  %2048 = vst [vmem:[#allocation2 + $0xc0] sm:$0xff] %v2038
  %2049 = vst [vmem:[#allocation2 + $0xc8] sm:$0xff] %v2039
  %2050 = vst [vmem:[#allocation2 + $0xd0] sm:$0xff] %v2040
  %2051 = vst [vmem:[#allocation2 + $0xd8] sm:$0xff] %v2041
  %2052 = vst [vmem:[#allocation2 + $0xe0] sm:$0xff] %v2042
  %2053 = vst [vmem:[#allocation2 + $0xe8] sm:$0xff] %v2043
  %v2054 = vld [vmem:[#allocation2 + $0xf0] sm:$0xff]
  %v2055 = vld [vmem:[#allocation2 + $0xf8] sm:$0xff]
  %v2056 = vld [vmem:[#allocation2 + $0x100] sm:$0xff]
  %v2057 = vld [vmem:[#allocation2 + $0x108] sm:$0xff]
  %v2058 = vld [vmem:[#allocation2 + $0x110] sm:$0xff]
  %v2059 = vld [vmem:[#allocation2 + $0x118] sm:$0xff]
  %v2060 = vld [vmem:[#allocation2 + $0x120] sm:$0xff]
  %v2061 = vld [vmem:[#allocation2 + $0x128] sm:$0xff]
  %v2062 = vld [vmem:[#allocation2 + $0x130] sm:$0xff]
  %v2063 = vld [vmem:[#allocation2 + $0x138] sm:$0xff]
  %v2064 = vsub.f32 %v2054, %v1898
  %v2065 = vsub.f32 %v2055, %v1898
  %v2066 = vsub.f32 %v2056, %v1898
  %v2067 = vsub.f32 %v2057, %v1898
  %v2068 = vsub.f32 %v2058, %v1898
  %v2069 = vsub.f32 %v2059, %v1898
  %v2070 = vsub.f32 %v2060, %v1898
  %v2071 = vsub.f32 %v2061, %v1898
  %v2072 = vsub.f32 %v2062, %v1898
  %v2073 = vsub.f32 %v2063, %v1898
  %v2074 = vmul.f32 %v2064, %v1903
  %v2075 = vmul.f32 %v2065, %v1903
  %v2076 = vmul.f32 %v2066, %v1903
  %v2077 = vmul.f32 %v2067, %v1903
  %v2078 = vmul.f32 %v2068, %v1903
  %v2079 = vmul.f32 %v2069, %v1903
  %v2080 = vmul.f32 %v2070, %v1903
  %v2081 = vmul.f32 %v2071, %v1903
  %v2082 = vmul.f32 %v2072, %v1903
  %v2083 = vmul.f32 %v2073, %v1903
  %v2084 = vmax.f32 %v2074, 0.0
  %v2085 = vmax.f32 %v2075, 0.0
  %v2086 = vmax.f32 %v2076, 0.0
  %v2087 = vmax.f32 %v2077, 0.0
  %v2088 = vmax.f32 %v2078, 0.0
  %v2089 = vmax.f32 %v2079, 0.0
  %v2090 = vmax.f32 %v2080, 0.0
  %v2091 = vmax.f32 %v2081, 0.0
  %v2092 = vmax.f32 %v2082, 0.0
  %v2093 = vmax.f32 %v2083, 0.0
  %2094 = vst [vmem:[#allocation2 + $0xf0] sm:$0xff] %v2084
  %2095 = vst [vmem:[#allocation2 + $0xf8] sm:$0xff] %v2085
  %2096 = vst [vmem:[#allocation2 + $0x100] sm:$0xff] %v2086
  %2097 = vst [vmem:[#allocation2 + $0x108] sm:$0xff] %v2087
  %2098 = vst [vmem:[#allocation2 + $0x110] sm:$0xff] %v2088
  %2099 = vst [vmem:[#allocation2 + $0x118] sm:$0xff] %v2089
  %2100 = vst [vmem:[#allocation2 + $0x120] sm:$0xff] %v2090
  %2101 = vst [vmem:[#allocation2 + $0x128] sm:$0xff] %v2091
  %2102 = vst [vmem:[#allocation2 + $0x130] sm:$0xff] %v2092
  %2103 = vst [vmem:[#allocation2 + $0x138] sm:$0xff] %v2093
  %v2104 = vld [vmem:[%s3] sm:$0x1]
  %v2105 = vld [vmem:[#allocation2] sm:$0xff]
  %v2106 = vld [vmem:[#allocation2 + $0x8] sm:$0xff]
  %v2107 = vld [vmem:[#allocation2 + $0x10] sm:$0xff]
  %v2108 = vld [vmem:[#allocation2 + $0x18] sm:$0xff]
  %v2109 = vld [vmem:[#allocation2 + $0x20] sm:$0xff]
  %v2110 = vld [vmem:[#allocation2 + $0x28] sm:$0xff]
  %v2111 = vld [vmem:[#allocation2 + $0x30] sm:$0xff]
  %v2112 = vld [vmem:[#allocation2 + $0x38] sm:$0xff]
  %v2113 = vld [vmem:[#allocation2 + $0x40] sm:$0xff]
  %v2114 = vld [vmem:[#allocation2 + $0x48] sm:$0xff]
  %v2115 = vld [vmem:[#allocation2 + $0x50] sm:$0xff]
  %v2116 = vld [vmem:[#allocation2 + $0x58] sm:$0xff]
  %v2117 = vld [vmem:[#allocation2 + $0x60] sm:$0xff]
  %v2118 = vld [vmem:[#allocation2 + $0x68] sm:$0xff]
  %v2119 = vld [vmem:[#allocation2 + $0x70] sm:$0xff]
  %v2120 = vld [vmem:[#allocation2 + $0x78] sm:$0xff]
  %v2121 = vld [vmem:[#allocation2 + $0x80] sm:$0xff]
  %v2122 = vld [vmem:[#allocation2 + $0x88] sm:$0xff]
  %v2123 = vld [vmem:[#allocation2 + $0x90] sm:$0xff]
  %v2124 = vld [vmem:[%s2] sm:$0xff]
  %v2125 = vld [vmem:[%s2 + $0x8] sm:$0xff]
  %v2126 = vld [vmem:[%s2 + $0x10] sm:$0xff]
  %v2127 = vld [vmem:[%s2 + $0x18] sm:$0xff]
  %v2128 = vld [vmem:[%s2 + $0x20] sm:$0xff]
  %v2129 = vld [vmem:[%s2 + $0x28] sm:$0xff]
  %v2130 = vld [vmem:[%s2 + $0x30] sm:$0xff]
  %v2131 = vld [vmem:[%s2 + $0x38] sm:$0xff]
  %v2132 = vld [vmem:[%s2 + $0x40] sm:$0xff]
  %v2133 = vld [vmem:[%s2 + $0x48] sm:$0xff]
  %v2134 = vld [vmem:[%s2 + $0x50] sm:$0xff]
  %v2135 = vld [vmem:[%s2 + $0x58] sm:$0xff]
  %v2136 = vld [vmem:[%s2 + $0x60] sm:$0xff]
  %v2137 = vld [vmem:[%s2 + $0x68] sm:$0xff]
  %v2138 = vld [vmem:[%s2 + $0x70] sm:$0xff]
  %v2139 = vld [vmem:[%s2 + $0x78] sm:$0xff]
  %s2140 = scalar_lea.vmem %s2, 128
  %v2141 = vld [vmem:[%s2140] sm:$0xff]
  %v2142 = vld [vmem:[%s2140 + $0x8] sm:$0xff]
  %v2143 = vld [vmem:[%s2140 + $0x10] sm:$0xff]
  %v2144 = vld [vmem:[%s2140 + $0x18] sm:$0xff]
  %v2145 = vld [vmem:[%s2140 + $0x20] sm:$0xff]
  %v2146 = vld [vmem:[%s2140 + $0x28] sm:$0xff]
  %v2147 = vld [vmem:[%s2140 + $0x30] sm:$0xff]
  %v2148 = vld [vmem:[%s2140 + $0x38] sm:$0xff]
  %v2149 = vld [vmem:[%s2140 + $0x40] sm:$0xff]
  %v2150 = vld [vmem:[%s2140 + $0x48] sm:$0xff]
  %v2151 = vld [vmem:[%s2140 + $0x50] sm:$0xff]
  %v2152 = vld [vmem:[%s2140 + $0x58] sm:$0xff]
  %v2153 = vld [vmem:[%s2140 + $0x60] sm:$0xff]
  %v2154 = vld [vmem:[%s2140 + $0x68] sm:$0xff]
  %v2155 = vld [vmem:[%s2140 + $0x70] sm:$0xff]
  %v2156 = vld [vmem:[%s2140 + $0x78] sm:$0xff]
  %2157 = vmatprep.subr.mxu0 0.0
  %2158 = vmatpush1.msra.mxu0 %v2141
  %2159 = vmatprep.subr.mxu0 0.0
  %2160 = vmatpush1.msra.mxu0 %v2142
  %2161 = vmatprep.subr.mxu0 0.0
  %2162 = vmatpush1.msra.mxu0 %v2143
  %2163 = vmatprep.subr.mxu0 0.0
  %2164 = vmatpush1.msra.mxu0 %v2144
  %2165 = vmatprep.subr.mxu0 0.0
  %2166 = vmatpush1.msra.mxu0 %v2145
  %2167 = vmatprep.subr.mxu0 0.0
  %2168 = vmatpush1.msra.mxu0 %v2146
  %2169 = vmatprep.subr.mxu0 0.0
  %2170 = vmatpush1.msra.mxu0 %v2147
  %2171 = vmatprep.subr.mxu0 0.0
  %2172 = vmatpush1.msra.mxu0 %v2148
  %2173 = vmatprep.subr.mxu0 0.0
  %2174 = vmatpush1.msra.mxu0 %v2149
  %2175 = vmatprep.subr.mxu0 0.0
  %2176 = vmatpush1.msra.mxu0 %v2150
  %2177 = vmatprep.subr.mxu0 0.0
  %2178 = vmatpush1.msra.mxu0 %v2151
  %2179 = vmatprep.subr.mxu0 0.0
  %2180 = vmatpush1.msra.mxu0 %v2152
  %2181 = vmatprep.subr.mxu0 0.0
  %2182 = vmatpush1.msra.mxu0 %v2153
  %2183 = vmatprep.subr.mxu0 0.0
  %2184 = vmatpush1.msra.mxu0 %v2154
  %2185 = vmatprep.subr.mxu0 0.0
  %2186 = vmatpush1.msra.mxu0 %v2155
  %2187 = vmatprep.subr.mxu0 0.0
  %2188 = vmatpush1.msra.mxu0 %v2156
  %2189 = vmatprep.subr.mxu0 0.0
  %2190 = vmatpush1.msra.mxu0 0.0
  %2191 = vmatprep.subr.mxu0 0.0
  %2192 = vmatpush1.msra.mxu0 0.0
  %2193 = vmatprep.subr.mxu0 0.0
  %2194 = vmatpush1.msra.mxu0 0.0
  %2195 = vmatprep.subr.mxu0 0.0
  %2196 = vmatpush1.msra.mxu0 0.0
  %2197 = vmatprep.subr.mxu0 0.0
  %2198 = vmatpush1.msra.mxu0 0.0
  %2199 = vmatprep.subr.mxu0 0.0
  %2200 = vmatpush1.msra.mxu0 0.0
  %2201 = vmatprep.subr.mxu0 0.0
  %2202 = vmatpush1.msra.mxu0 0.0
  %2203 = vmatprep.subr.mxu0 0.0
  %2204 = vmatpush1.msra.mxu0 0.0
  %2205 = vmatprep.subr.mxu0 0.0
  %2206 = vmatpush1.msra.mxu0 0.0
  %2207 = vmatprep.subr.mxu0 0.0
  %2208 = vmatpush1.msra.mxu0 0.0
  %2209 = vmatprep.subr.mxu0 0.0
  %2210 = vmatpush1.msra.mxu0 0.0
  %2211 = vmatprep.subr.mxu0 0.0
  %2212 = vmatpush1.msra.mxu0 0.0
  %2213 = vmatprep.subr.mxu0 0.0
  %2214 = vmatpush1.msra.mxu0 0.0
  %2215 = vmatprep.subr.mxu0 0.0
  %2216 = vmatpush1.msra.mxu0 0.0
  %2217 = vmatprep.subr.mxu0 0.0
  %2218 = vmatpush1.msra.mxu0 0.0
  %2219 = vmatprep.subr.mxu0 0.0
  %2220 = vmatpush1.msra.mxu0 0.0
  %2221 = vmatprep.mubr.f32.mxu0 0.0
  %2222 = vmatmul.mubr.f32.gmra.mrb[0].mxu0 %v2115
  %v2223 = vpop.f32.mrb[0].mxu0
  %v2224 = vadd.f32 0.0, %v2223
  %v2225 = vpop.f32.mrb[0].mxu0
  %2226 = vmatprep.mubr.f32.mxu0 0.0
  %2227 = vmatmul.mubr.f32.gmra.mrb[0].mxu0 %v2116
  %v2228 = vpop.f32.mrb[0].mxu0
  %v2229 = vadd.f32 0.0, %v2228
  %v2230 = vpop.f32.mrb[0].mxu0
  %2231 = vmatprep.mubr.f32.mxu0 0.0
  %2232 = vmatmul.mubr.f32.gmra.mrb[0].mxu0 %v2117
  %v2233 = vpop.f32.mrb[0].mxu0
  %v2234 = vadd.f32 0.0, %v2233
  %v2235 = vpop.f32.mrb[0].mxu0
  %2236 = vmatprep.mubr.f32.mxu0 0.0
  %2237 = vmatmul.mubr.f32.gmra.mrb[0].mxu0 %v2118
  %v2238 = vpop.f32.mrb[0].mxu0
  %v2239 = vadd.f32 0.0, %v2238
  %v2240 = vpop.f32.mrb[0].mxu0
  %2241 = vmatprep.mubr.f32.mxu0 0.0
  %2242 = vmatmul.mubr.f32.gmra.mrb[0].mxu0 %v2119
  %v2243 = vpop.f32.mrb[0].mxu0
  %v2244 = vadd.f32 0.0, %v2243
  %v2245 = vpop.f32.mrb[0].mxu0
  %2246 = vmatprep.mubr.f32.mxu0 0.0
  %2247 = vmatmul.mubr.f32.gmra.mrb[0].mxu0 %v2120
  %v2248 = vpop.f32.mrb[0].mxu0
  %v2249 = vadd.f32 0.0, %v2248
  %v2250 = vpop.f32.mrb[0].mxu0
  %2251 = vmatprep.mubr.f32.mxu0 0.0
  %2252 = vmatmul.mubr.f32.gmra.mrb[0].mxu0 %v2121
  %v2253 = vpop.f32.mrb[0].mxu0
  %v2254 = vadd.f32 0.0, %v2253
  %v2255 = vpop.f32.mrb[0].mxu0
  %2256 = vmatprep.mubr.f32.mxu0 0.0
  %2257 = vmatmul.mubr.f32.gmra.mrb[0].mxu0 %v2122
  %v2258 = vpop.f32.mrb[0].mxu0
  %v2259 = vadd.f32 0.0, %v2258
  %v2260 = vpop.f32.mrb[0].mxu0
  %2261 = vmatprep.mubr.f32.mxu0 0.0
  %2262 = vmatmul.mubr.f32.gmra.mrb[0].mxu0 %v2123
  %v2263 = vpop.f32.mrb[0].mxu0
  %v2264 = vadd.f32 0.0, %v2263
  %v2265 = vpop.f32.mrb[0].mxu0
  %2266 = vdwg.mxu0
  %2267 = vmatprep.subr.mxu0 0.0
  %2268 = vmatpush1.msra.mxu0 %v2124
  %2269 = vmatprep.subr.mxu0 0.0
  %2270 = vmatpush1.msra.mxu0 %v2125
  %2271 = vmatprep.subr.mxu0 0.0
  %2272 = vmatpush1.msra.mxu0 %v2126
  %2273 = vmatprep.subr.mxu0 0.0
  %2274 = vmatpush1.msra.mxu0 %v2127
  %2275 = vmatprep.subr.mxu0 0.0
  %2276 = vmatpush1.msra.mxu0 %v2128
  %2277 = vmatprep.subr.mxu0 0.0
  %2278 = vmatpush1.msra.mxu0 %v2129
  %2279 = vmatprep.subr.mxu0 0.0
  %2280 = vmatpush1.msra.mxu0 %v2130
  %2281 = vmatprep.subr.mxu0 0.0
  %2282 = vmatpush1.msra.mxu0 %v2131
  %2283 = vmatprep.subr.mxu0 0.0
  %2284 = vmatpush1.msra.mxu0 %v2132
  %2285 = vmatprep.subr.mxu0 0.0
  %2286 = vmatpush1.msra.mxu0 %v2133
  %2287 = vmatprep.subr.mxu0 0.0
  %2288 = vmatpush1.msra.mxu0 %v2134
  %2289 = vmatprep.subr.mxu0 0.0
  %2290 = vmatpush1.msra.mxu0 %v2135
  %2291 = vmatprep.subr.mxu0 0.0
  %2292 = vmatpush1.msra.mxu0 %v2136
  %2293 = vmatprep.subr.mxu0 0.0
  %2294 = vmatpush1.msra.mxu0 %v2137
  %2295 = vmatprep.subr.mxu0 0.0
  %2296 = vmatpush1.msra.mxu0 %v2138
  %2297 = vmatprep.subr.mxu0 0.0
  %2298 = vmatpush1.msra.mxu0 %v2139
  %2299 = vmatprep.subr.mxu0 0.0
  %2300 = vmatpush1.msra.mxu0 0.0
  %2301 = vmatprep.subr.mxu0 0.0
  %2302 = vmatpush1.msra.mxu0 0.0
  %2303 = vmatprep.subr.mxu0 0.0
  %2304 = vmatpush1.msra.mxu0 0.0
  %2305 = vmatprep.subr.mxu0 0.0
  %2306 = vmatpush1.msra.mxu0 0.0
  %2307 = vmatprep.subr.mxu0 0.0
  %2308 = vmatpush1.msra.mxu0 0.0
  %2309 = vmatprep.subr.mxu0 0.0
  %2310 = vmatpush1.msra.mxu0 0.0
  %2311 = vmatprep.subr.mxu0 0.0
  %2312 = vmatpush1.msra.mxu0 0.0
  %2313 = vmatprep.subr.mxu0 0.0
  %2314 = vmatpush1.msra.mxu0 0.0
  %2315 = vmatprep.subr.mxu0 0.0
  %2316 = vmatpush1.msra.mxu0 0.0
  %2317 = vmatprep.subr.mxu0 0.0
  %2318 = vmatpush1.msra.mxu0 0.0
  %2319 = vmatprep.subr.mxu0 0.0
  %2320 = vmatpush1.msra.mxu0 0.0
  %2321 = vmatprep.subr.mxu0 0.0
  %2322 = vmatpush1.msra.mxu0 0.0
  %2323 = vmatprep.subr.mxu0 0.0
  %2324 = vmatpush1.msra.mxu0 0.0
  %2325 = vmatprep.subr.mxu0 0.0
  %2326 = vmatpush1.msra.mxu0 0.0
  %2327 = vmatprep.subr.mxu0 0.0
  %2328 = vmatpush1.msra.mxu0 0.0
  %2329 = vmatprep.subr.mxu0 0.0
  %2330 = vmatpush1.msra.mxu0 0.0
  %2331 = vmatprep.mubr.f32.mxu0 0.0
  %2332 = vmatmul.mubr.f32.gmra.mrb[0].mxu0 %v2105
  %v2333 = vpop.f32.mrb[0].mxu0
  %v2334 = vadd.f32 %v2224, %v2333
  %v2335 = vpop.f32.mrb[0].mxu0
  %2336 = vmatprep.mubr.f32.mxu0 0.0
  %2337 = vmatmul.mubr.f32.gmra.mrb[0].mxu0 %v2106
  %v2338 = vpop.f32.mrb[0].mxu0
  %v2339 = vadd.f32 %v2229, %v2338
  %v2340 = vpop.f32.mrb[0].mxu0
  %2341 = vmatprep.mubr.f32.mxu0 0.0
  %2342 = vmatmul.mubr.f32.gmra.mrb[0].mxu0 %v2107
  %v2343 = vpop.f32.mrb[0].mxu0
  %v2344 = vadd.f32 %v2234, %v2343
  %v2345 = vpop.f32.mrb[0].mxu0
  %2346 = vmatprep.mubr.f32.mxu0 0.0
  %2347 = vmatmul.mubr.f32.gmra.mrb[0].mxu0 %v2108
  %v2348 = vpop.f32.mrb[0].mxu0
  %v2349 = vadd.f32 %v2239, %v2348
  %v2350 = vpop.f32.mrb[0].mxu0
  %2351 = vmatprep.mubr.f32.mxu0 0.0
  %2352 = vmatmul.mubr.f32.gmra.mrb[0].mxu0 %v2109
  %v2353 = vpop.f32.mrb[0].mxu0
  %v2354 = vadd.f32 %v2244, %v2353
  %v2355 = vpop.f32.mrb[0].mxu0
  %2356 = vmatprep.mubr.f32.mxu0 0.0
  %2357 = vmatmul.mubr.f32.gmra.mrb[0].mxu0 %v2110
  %v2358 = vpop.f32.mrb[0].mxu0
  %v2359 = vadd.f32 %v2249, %v2358
  %v2360 = vpop.f32.mrb[0].mxu0
  %2361 = vmatprep.mubr.f32.mxu0 0.0
  %2362 = vmatmul.mubr.f32.gmra.mrb[0].mxu0 %v2111
  %v2363 = vpop.f32.mrb[0].mxu0
  %v2364 = vadd.f32 %v2254, %v2363
  %v2365 = vpop.f32.mrb[0].mxu0
  %2366 = vmatprep.mubr.f32.mxu0 0.0
  %2367 = vmatmul.mubr.f32.gmra.mrb[0].mxu0 %v2112
  %v2368 = vpop.f32.mrb[0].mxu0
  %v2369 = vadd.f32 %v2259, %v2368
  %v2370 = vpop.f32.mrb[0].mxu0
  %2371 = vmatprep.mubr.f32.mxu0 0.0
  %2372 = vmatmul.mubr.f32.gmra.mrb[0].mxu0 %v2113
  %v2373 = vpop.f32.mrb[0].mxu0
  %v2374 = vadd.f32 %v2264, %v2373
  %v2375 = vpop.f32.mrb[0].mxu0
  %2376 = vdwg.mxu0
  %s2377 = scalar_lea.vmem %s2, 256
  %v2378 = vld [vmem:[%s2377] sm:$0xff]
  %v2379 = vld [vmem:[%s2377 + $0x8] sm:$0xff]
  %v2380 = vld [vmem:[%s2377 + $0x10] sm:$0xff]
  %v2381 = vld [vmem:[%s2377 + $0x18] sm:$0xff]
  %v2382 = vld [vmem:[%s2377 + $0x20] sm:$0xff]
  %v2383 = vld [vmem:[%s2377 + $0x28] sm:$0xff]
  %v2384 = vld [vmem:[%s2377 + $0x30] sm:$0xff]
  %v2385 = vld [vmem:[%s2377 + $0x38] sm:$0xff]
  %v2386 = vld [vmem:[%s2377 + $0x40] sm:$0xff]
  %v2387 = vld [vmem:[%s2377 + $0x48] sm:$0xff]
  %v2388 = vld [vmem:[%s2377 + $0x50] sm:$0xff]
  %v2389 = vld [vmem:[%s2377 + $0x58] sm:$0xff]
  %v2390 = vld [vmem:[%s2377 + $0x60] sm:$0xff]
  %v2391 = vld [vmem:[%s2377 + $0x68] sm:$0xff]
  %v2392 = vld [vmem:[%s2377 + $0x70] sm:$0xff]
  %v2393 = vld [vmem:[%s2377 + $0x78] sm:$0xff]
  %vm2404 = vcmask 1046528
  %v2405 = vrot.slane %v2105, 1
  %v2406 = vrot.slane %v2106, 1
  %v2407 = vsel %vm2404, %v2405, %v2406
  %v2408 = vrot.slane %v2107, 1
  %v2409 = vsel %vm2404, %v2406, %v2408
  %v2410 = vrot.slane %v2108, 1
  %v2411 = vsel %vm2404, %v2408, %v2410
  %v2412 = vrot.slane %v2109, 1
  %v2413 = vsel %vm2404, %v2410, %v2412
  %v2414 = vrot.slane %v2110, 1
  %v2415 = vsel %vm2404, %v2412, %v2414
  %v2416 = vrot.slane %v2111, 1
  %v2417 = vsel %vm2404, %v2414, %v2416
  %v2418 = vrot.slane %v2112, 1
  %v2419 = vsel %vm2404, %v2416, %v2418
  %v2420 = vrot.slane %v2113, 1
  %v2421 = vsel %vm2404, %v2418, %v2420
  %v2422 = vrot.slane %v2114, 1
  %v2423 = vsel %vm2404, %v2420, %v2422
  %2433 = vmatprep.subr.mxu0 0.0
  %2434 = vmatpush1.msra.mxu0 %v2378
  %2435 = vmatprep.subr.mxu0 0.0
  %2436 = vmatpush1.msra.mxu0 %v2379
  %2437 = vmatprep.subr.mxu0 0.0
  %2438 = vmatpush1.msra.mxu0 %v2380
  %2439 = vmatprep.subr.mxu0 0.0
  %2440 = vmatpush1.msra.mxu0 %v2381
  %2441 = vmatprep.subr.mxu0 0.0
  %2442 = vmatpush1.msra.mxu0 %v2382
  %2443 = vmatprep.subr.mxu0 0.0
  %2444 = vmatpush1.msra.mxu0 %v2383
  %2445 = vmatprep.subr.mxu0 0.0
  %2446 = vmatpush1.msra.mxu0 %v2384
  %2447 = vmatprep.subr.mxu0 0.0
  %2448 = vmatpush1.msra.mxu0 %v2385
  %2449 = vmatprep.subr.mxu0 0.0
  %2450 = vmatpush1.msra.mxu0 %v2386
  %2451 = vmatprep.subr.mxu0 0.0
  %2452 = vmatpush1.msra.mxu0 %v2387
  %2453 = vmatprep.subr.mxu0 0.0
  %2454 = vmatpush1.msra.mxu0 %v2388
  %2455 = vmatprep.subr.mxu0 0.0
  %2456 = vmatpush1.msra.mxu0 %v2389
  %2457 = vmatprep.subr.mxu0 0.0
  %2458 = vmatpush1.msra.mxu0 %v2390
  %2459 = vmatprep.subr.mxu0 0.0
  %2460 = vmatpush1.msra.mxu0 %v2391
  %2461 = vmatprep.subr.mxu0 0.0
  %2462 = vmatpush1.msra.mxu0 %v2392
  %2463 = vmatprep.subr.mxu0 0.0
  %2464 = vmatpush1.msra.mxu0 %v2393
  %2465 = vmatprep.subr.mxu0 0.0
  %2466 = vmatpush1.msra.mxu0 0.0
  %2467 = vmatprep.subr.mxu0 0.0
  %2468 = vmatpush1.msra.mxu0 0.0
  %2469 = vmatprep.subr.mxu0 0.0
  %2470 = vmatpush1.msra.mxu0 0.0
  %2471 = vmatprep.subr.mxu0 0.0
  %2472 = vmatpush1.msra.mxu0 0.0
  %2473 = vmatprep.subr.mxu0 0.0
  %2474 = vmatpush1.msra.mxu0 0.0
  %2475 = vmatprep.subr.mxu0 0.0
  %2476 = vmatpush1.msra.mxu0 0.0
  %2477 = vmatprep.subr.mxu0 0.0
  %2478 = vmatpush1.msra.mxu0 0.0
  %2479 = vmatprep.subr.mxu0 0.0
  %2480 = vmatpush1.msra.mxu0 0.0
  %2481 = vmatprep.subr.mxu0 0.0
  %2482 = vmatpush1.msra.mxu0 0.0
  %2483 = vmatprep.subr.mxu0 0.0
  %2484 = vmatpush1.msra.mxu0 0.0
  %2485 = vmatprep.subr.mxu0 0.0
  %2486 = vmatpush1.msra.mxu0 0.0
  %2487 = vmatprep.subr.mxu0 0.0
  %2488 = vmatpush1.msra.mxu0 0.0
  %2489 = vmatprep.subr.mxu0 0.0
  %2490 = vmatpush1.msra.mxu0 0.0
  %2491 = vmatprep.subr.mxu0 0.0
  %2492 = vmatpush1.msra.mxu0 0.0
  %2493 = vmatprep.subr.mxu0 0.0
  %2494 = vmatpush1.msra.mxu0 0.0
  %2495 = vmatprep.subr.mxu0 0.0
  %2496 = vmatpush1.msra.mxu0 0.0
  %2497 = vmatprep.mubr.f32.mxu0 0.0
  %2498 = vmatmul.mubr.f32.gmra.mrb[0].mxu0 %v2407
  %v2499 = vpop.f32.mrb[0].mxu0
  %v2500 = vadd.f32 0.0, %v2499
  %v2501 = vpop.f32.mrb[0].mxu0
  %2502 = vmatprep.mubr.f32.mxu0 0.0
  %2503 = vmatmul.mubr.f32.gmra.mrb[0].mxu0 %v2409
  %v2504 = vpop.f32.mrb[0].mxu0
  %v2505 = vadd.f32 0.0, %v2504
  %v2506 = vpop.f32.mrb[0].mxu0
  %2507 = vmatprep.mubr.f32.mxu0 0.0
  %2508 = vmatmul.mubr.f32.gmra.mrb[0].mxu0 %v2411
  %v2509 = vpop.f32.mrb[0].mxu0
  %v2510 = vadd.f32 0.0, %v2509
  %v2511 = vpop.f32.mrb[0].mxu0
  %2512 = vmatprep.mubr.f32.mxu0 0.0
  %2513 = vmatmul.mubr.f32.gmra.mrb[0].mxu0 %v2413
  %v2514 = vpop.f32.mrb[0].mxu0
  %v2515 = vadd.f32 0.0, %v2514
  %v2516 = vpop.f32.mrb[0].mxu0
  %2517 = vmatprep.mubr.f32.mxu0 0.0
  %2518 = vmatmul.mubr.f32.gmra.mrb[0].mxu0 %v2415
  %v2519 = vpop.f32.mrb[0].mxu0
  %v2520 = vadd.f32 0.0, %v2519
  %v2521 = vpop.f32.mrb[0].mxu0
  %2522 = vmatprep.mubr.f32.mxu0 0.0
  %2523 = vmatmul.mubr.f32.gmra.mrb[0].mxu0 %v2417
  %v2524 = vpop.f32.mrb[0].mxu0
  %v2525 = vadd.f32 0.0, %v2524
  %v2526 = vpop.f32.mrb[0].mxu0
  %2527 = vmatprep.mubr.f32.mxu0 0.0
  %2528 = vmatmul.mubr.f32.gmra.mrb[0].mxu0 %v2419
  %v2529 = vpop.f32.mrb[0].mxu0
  %v2530 = vadd.f32 0.0, %v2529
  %v2531 = vpop.f32.mrb[0].mxu0
  %2532 = vmatprep.mubr.f32.mxu0 0.0
  %2533 = vmatmul.mubr.f32.gmra.mrb[0].mxu0 %v2421
  %v2534 = vpop.f32.mrb[0].mxu0
  %v2535 = vadd.f32 0.0, %v2534
  %v2536 = vpop.f32.mrb[0].mxu0
  %2537 = vmatprep.mubr.f32.mxu0 0.0
  %2538 = vmatmul.mubr.f32.gmra.mrb[0].mxu0 %v2423
  %v2539 = vpop.f32.mrb[0].mxu0
  %v2540 = vadd.f32 0.0, %v2539
  %v2541 = vpop.f32.mrb[0].mxu0
  %2542 = vdwg.mxu0
  %v2543 = vadd.f32 %v2334, %v2500
  %v2544 = vadd.f32 %v2339, %v2505
  %v2545 = vadd.f32 %v2344, %v2510
  %v2546 = vadd.f32 %v2349, %v2515
  %v2547 = vadd.f32 %v2354, %v2520
  %v2548 = vadd.f32 %v2359, %v2525
  %v2549 = vadd.f32 %v2364, %v2530
  %v2550 = vadd.f32 %v2369, %v2535
  %v2551 = vadd.f32 %v2374, %v2540
  %v2553 = vlaneseq
  %v2554 = vshrl.u32 %v2553, 7
  %v2555 = vsub.s32 0, %v2554
  %v2556 = vrot.slane %v2104, %v2555
  %v2558 = vadd.f32 %v2543, %v2556
  %v2559 = vadd.f32 %v2544, %v2556
  %v2560 = vadd.f32 %v2545, %v2556
  %v2561 = vadd.f32 %v2546, %v2556
  %v2562 = vadd.f32 %v2547, %v2556
  %v2563 = vadd.f32 %v2548, %v2556
  %v2564 = vadd.f32 %v2549, %v2556
  %v2565 = vadd.f32 %v2550, %v2556
  %v2566 = vadd.f32 %v2551, %v2556
  %2567 = vst [vmem:[%s9] sm:$0xff] %v2558
  %2568 = vst [vmem:[%s9 + $0x8] sm:$0xff] %v2559
  %2569 = vst [vmem:[%s9 + $0x10] sm:$0xff] %v2560
  %2570 = vst [vmem:[%s9 + $0x18] sm:$0xff] %v2561
  %2571 = vst [vmem:[%s9 + $0x20] sm:$0xff] %v2562
  %2572 = vst [vmem:[%s9 + $0x28] sm:$0xff] %v2563
  %2573 = vst [vmem:[%s9 + $0x30] sm:$0xff] %v2564
  %2574 = vst [vmem:[%s9 + $0x38] sm:$0xff] %v2565
  %2575 = vst [vmem:[%s9 + $0x40] sm:$0xff] %v2566
  %v2576 = vadd.f32 %v2558, %v2559
  %v2577 = vadd.f32 %v2576, %v2560
  %v2578 = vadd.f32 %v2577, %v2561
  %v2579 = vadd.f32 %v2578, %v2562
  %v2580 = vadd.f32 %v2579, %v2563
  %v2581 = vadd.f32 %v2580, %v2564
  %v2582 = vadd.f32 %v2581, %v2565
  %v2583 = vadd.f32 %v2582, %v2566
  %v2584 = vrot.slane %v2583, 4
  %v2585 = vadd.f32 %v2583, %v2584
  %v2586 = vrot.slane %v2585, 2
  %v2587 = vadd.f32 %v2585, %v2586
  %v2588 = vrot.slane %v2587, 1
  %v2589 = vadd.f32 %v2587, %v2588
  %v2590 = vadd.f32 %v2589, 0.0
  %v2591 = vmul.f32 %v2558, %v2558
  %v2592 = vmul.f32 %v2559, %v2559
  %v2593 = vmul.f32 %v2560, %v2560
  %v2594 = vmul.f32 %v2561, %v2561
  %v2595 = vmul.f32 %v2562, %v2562
  %v2596 = vmul.f32 %v2563, %v2563
  %v2597 = vmul.f32 %v2564, %v2564
  %v2598 = vmul.f32 %v2565, %v2565
  %v2599 = vmul.f32 %v2566, %v2566
  %v2600 = vadd.f32 %v2591, %v2592
  %v2601 = vadd.f32 %v2600, %v2593
  %v2602 = vadd.f32 %v2601, %v2594
  %v2603 = vadd.f32 %v2602, %v2595
  %v2604 = vadd.f32 %v2603, %v2596
  %v2605 = vadd.f32 %v2604, %v2597
  %v2606 = vadd.f32 %v2605, %v2598
  %v2607 = vadd.f32 %v2606, %v2599
  %v2608 = vrot.slane %v2607, 4
  %v2609 = vadd.f32 %v2607, %v2608
  %v2610 = vrot.slane %v2609, 2
  %v2611 = vadd.f32 %v2609, %v2610
  %v2612 = vrot.slane %v2611, 1
  %v2613 = vadd.f32 %v2611, %v2612
  %v2614 = vadd.f32 %v2613, 0.0
  %v2615 = vld [vmem:[#allocation2 + $0xa0] sm:$0xff]
  %v2616 = vld [vmem:[#allocation2 + $0xa8] sm:$0xff]
  %v2617 = vld [vmem:[#allocation2 + $0xb0] sm:$0xff]
  %v2618 = vld [vmem:[#allocation2 + $0xb8] sm:$0xff]
  %v2619 = vld [vmem:[#allocation2 + $0xc0] sm:$0xff]
  %v2620 = vld [vmem:[#allocation2 + $0xc8] sm:$0xff]
  %v2621 = vld [vmem:[#allocation2 + $0xd0] sm:$0xff]
  %v2622 = vld [vmem:[#allocation2 + $0xd8] sm:$0xff]
  %v2623 = vld [vmem:[#allocation2 + $0xe0] sm:$0xff]
  %v2624 = vld [vmem:[#allocation2 + $0xe8] sm:$0xff]
  %v2625 = vld [vmem:[#allocation2 + $0xf0] sm:$0xff]
  %v2626 = vld [vmem:[#allocation2 + $0xf8] sm:$0xff]
  %v2627 = vld [vmem:[#allocation2 + $0x100] sm:$0xff]
  %v2628 = vld [vmem:[#allocation2 + $0x108] sm:$0xff]
  %v2629 = vld [vmem:[#allocation2 + $0x110] sm:$0xff]
  %v2630 = vld [vmem:[#allocation2 + $0x118] sm:$0xff]
  %v2631 = vld [vmem:[#allocation2 + $0x120] sm:$0xff]
  %v2632 = vld [vmem:[#allocation2 + $0x128] sm:$0xff]
  %v2633 = vld [vmem:[#allocation2 + $0x130] sm:$0xff]
  %v2634 = vld [vmem:[%s2] sm:$0xff]
  %v2635 = vld [vmem:[%s2 + $0x8] sm:$0xff]
  %v2636 = vld [vmem:[%s2 + $0x10] sm:$0xff]
  %v2637 = vld [vmem:[%s2 + $0x18] sm:$0xff]
  %v2638 = vld [vmem:[%s2 + $0x20] sm:$0xff]
  %v2639 = vld [vmem:[%s2 + $0x28] sm:$0xff]
  %v2640 = vld [vmem:[%s2 + $0x30] sm:$0xff]
  %v2641 = vld [vmem:[%s2 + $0x38] sm:$0xff]
  %v2642 = vld [vmem:[%s2 + $0x40] sm:$0xff]
  %v2643 = vld [vmem:[%s2 + $0x48] sm:$0xff]
  %v2644 = vld [vmem:[%s2 + $0x50] sm:$0xff]
  %v2645 = vld [vmem:[%s2 + $0x58] sm:$0xff]
  %v2646 = vld [vmem:[%s2 + $0x60] sm:$0xff]
  %v2647 = vld [vmem:[%s2 + $0x68] sm:$0xff]
  %v2648 = vld [vmem:[%s2 + $0x70] sm:$0xff]
  %v2649 = vld [vmem:[%s2 + $0x78] sm:$0xff]
  %v2650 = vld [vmem:[%s2140] sm:$0xff]
  %v2651 = vld [vmem:[%s2140 + $0x8] sm:$0xff]
  %v2652 = vld [vmem:[%s2140 + $0x10] sm:$0xff]
  %v2653 = vld [vmem:[%s2140 + $0x18] sm:$0xff]
  %v2654 = vld [vmem:[%s2140 + $0x20] sm:$0xff]
  %v2655 = vld [vmem:[%s2140 + $0x28] sm:$0xff]
  %v2656 = vld [vmem:[%s2140 + $0x30] sm:$0xff]
  %v2657 = vld [vmem:[%s2140 + $0x38] sm:$0xff]
  %v2658 = vld [vmem:[%s2140 + $0x40] sm:$0xff]
  %v2659 = vld [vmem:[%s2140 + $0x48] sm:$0xff]
  %v2660 = vld [vmem:[%s2140 + $0x50] sm:$0xff]
  %v2661 = vld [vmem:[%s2140 + $0x58] sm:$0xff]
  %v2662 = vld [vmem:[%s2140 + $0x60] sm:$0xff]
  %v2663 = vld [vmem:[%s2140 + $0x68] sm:$0xff]
  %v2664 = vld [vmem:[%s2140 + $0x70] sm:$0xff]
  %v2665 = vld [vmem:[%s2140 + $0x78] sm:$0xff]
  %2666 = vmatprep.subr.mxu0 0.0
  %2667 = vmatpush1.msra.mxu0 %v2650
  %2668 = vmatprep.subr.mxu0 0.0
  %2669 = vmatpush1.msra.mxu0 %v2651
  %2670 = vmatprep.subr.mxu0 0.0
  %2671 = vmatpush1.msra.mxu0 %v2652
  %2672 = vmatprep.subr.mxu0 0.0
  %2673 = vmatpush1.msra.mxu0 %v2653
  %2674 = vmatprep.subr.mxu0 0.0
  %2675 = vmatpush1.msra.mxu0 %v2654
  %2676 = vmatprep.subr.mxu0 0.0
  %2677 = vmatpush1.msra.mxu0 %v2655
  %2678 = vmatprep.subr.mxu0 0.0
  %2679 = vmatpush1.msra.mxu0 %v2656
  %2680 = vmatprep.subr.mxu0 0.0
  %2681 = vmatpush1.msra.mxu0 %v2657
  %2682 = vmatprep.subr.mxu0 0.0
  %2683 = vmatpush1.msra.mxu0 %v2658
  %2684 = vmatprep.subr.mxu0 0.0
  %2685 = vmatpush1.msra.mxu0 %v2659
  %2686 = vmatprep.subr.mxu0 0.0
  %2687 = vmatpush1.msra.mxu0 %v2660
  %2688 = vmatprep.subr.mxu0 0.0
  %2689 = vmatpush1.msra.mxu0 %v2661
  %2690 = vmatprep.subr.mxu0 0.0
  %2691 = vmatpush1.msra.mxu0 %v2662
  %2692 = vmatprep.subr.mxu0 0.0
  %2693 = vmatpush1.msra.mxu0 %v2663
  %2694 = vmatprep.subr.mxu0 0.0
  %2695 = vmatpush1.msra.mxu0 %v2664
  %2696 = vmatprep.subr.mxu0 0.0
  %2697 = vmatpush1.msra.mxu0 %v2665
  %2698 = vmatprep.subr.mxu0 0.0
  %2699 = vmatpush1.msra.mxu0 0.0
  %2700 = vmatprep.subr.mxu0 0.0
  %2701 = vmatpush1.msra.mxu0 0.0
  %2702 = vmatprep.subr.mxu0 0.0
  %2703 = vmatpush1.msra.mxu0 0.0
  %2704 = vmatprep.subr.mxu0 0.0
  %2705 = vmatpush1.msra.mxu0 0.0
  %2706 = vmatprep.subr.mxu0 0.0
  %2707 = vmatpush1.msra.mxu0 0.0
  %2708 = vmatprep.subr.mxu0 0.0
  %2709 = vmatpush1.msra.mxu0 0.0
  %2710 = vmatprep.subr.mxu0 0.0
  %2711 = vmatpush1.msra.mxu0 0.0
  %2712 = vmatprep.subr.mxu0 0.0
  %2713 = vmatpush1.msra.mxu0 0.0
  %2714 = vmatprep.subr.mxu0 0.0
  %2715 = vmatpush1.msra.mxu0 0.0
  %2716 = vmatprep.subr.mxu0 0.0
  %2717 = vmatpush1.msra.mxu0 0.0
  %2718 = vmatprep.subr.mxu0 0.0
  %2719 = vmatpush1.msra.mxu0 0.0
  %2720 = vmatprep.subr.mxu0 0.0
  %2721 = vmatpush1.msra.mxu0 0.0
  %2722 = vmatprep.subr.mxu0 0.0
  %2723 = vmatpush1.msra.mxu0 0.0
  %2724 = vmatprep.subr.mxu0 0.0
  %2725 = vmatpush1.msra.mxu0 0.0
  %2726 = vmatprep.subr.mxu0 0.0
  %2727 = vmatpush1.msra.mxu0 0.0
  %2728 = vmatprep.subr.mxu0 0.0
  %2729 = vmatpush1.msra.mxu0 0.0
  %2730 = vmatprep.mubr.f32.mxu0 0.0
  %2731 = vmatmul.mubr.f32.gmra.mrb[0].mxu0 %v2625
  %v2732 = vpop.f32.mrb[0].mxu0
  %v2733 = vadd.f32 0.0, %v2732
  %v2734 = vpop.f32.mrb[0].mxu0
  %2735 = vmatprep.mubr.f32.mxu0 0.0
  %2736 = vmatmul.mubr.f32.gmra.mrb[0].mxu0 %v2626
  %v2737 = vpop.f32.mrb[0].mxu0
  %v2738 = vadd.f32 0.0, %v2737
  %v2739 = vpop.f32.mrb[0].mxu0
  %2740 = vmatprep.mubr.f32.mxu0 0.0
  %2741 = vmatmul.mubr.f32.gmra.mrb[0].mxu0 %v2627
  %v2742 = vpop.f32.mrb[0].mxu0
  %v2743 = vadd.f32 0.0, %v2742
  %v2744 = vpop.f32.mrb[0].mxu0
  %2745 = vmatprep.mubr.f32.mxu0 0.0
  %2746 = vmatmul.mubr.f32.gmra.mrb[0].mxu0 %v2628
  %v2747 = vpop.f32.mrb[0].mxu0
  %v2748 = vadd.f32 0.0, %v2747
  %v2749 = vpop.f32.mrb[0].mxu0
  %2750 = vmatprep.mubr.f32.mxu0 0.0
  %2751 = vmatmul.mubr.f32.gmra.mrb[0].mxu0 %v2629
  %v2752 = vpop.f32.mrb[0].mxu0
  %v2753 = vadd.f32 0.0, %v2752
  %v2754 = vpop.f32.mrb[0].mxu0
  %2755 = vmatprep.mubr.f32.mxu0 0.0
  %2756 = vmatmul.mubr.f32.gmra.mrb[0].mxu0 %v2630
  %v2757 = vpop.f32.mrb[0].mxu0
  %v2758 = vadd.f32 0.0, %v2757
  %v2759 = vpop.f32.mrb[0].mxu0
  %2760 = vmatprep.mubr.f32.mxu0 0.0
  %2761 = vmatmul.mubr.f32.gmra.mrb[0].mxu0 %v2631
  %v2762 = vpop.f32.mrb[0].mxu0
  %v2763 = vadd.f32 0.0, %v2762
  %v2764 = vpop.f32.mrb[0].mxu0
  %2765 = vmatprep.mubr.f32.mxu0 0.0
  %2766 = vmatmul.mubr.f32.gmra.mrb[0].mxu0 %v2632
  %v2767 = vpop.f32.mrb[0].mxu0
  %v2768 = vadd.f32 0.0, %v2767
  %v2769 = vpop.f32.mrb[0].mxu0
  %2770 = vmatprep.mubr.f32.mxu0 0.0
  %2771 = vmatmul.mubr.f32.gmra.mrb[0].mxu0 %v2633
  %v2772 = vpop.f32.mrb[0].mxu0
  %v2773 = vadd.f32 0.0, %v2772
  %v2774 = vpop.f32.mrb[0].mxu0
  %2775 = vdwg.mxu0
  %2776 = vmatprep.subr.mxu0 0.0
  %2777 = vmatpush1.msra.mxu0 %v2634
  %2778 = vmatprep.subr.mxu0 0.0
  %2779 = vmatpush1.msra.mxu0 %v2635
  %2780 = vmatprep.subr.mxu0 0.0
  %2781 = vmatpush1.msra.mxu0 %v2636
  %2782 = vmatprep.subr.mxu0 0.0
  %2783 = vmatpush1.msra.mxu0 %v2637
  %2784 = vmatprep.subr.mxu0 0.0
  %2785 = vmatpush1.msra.mxu0 %v2638
  %2786 = vmatprep.subr.mxu0 0.0
  %2787 = vmatpush1.msra.mxu0 %v2639
  %2788 = vmatprep.subr.mxu0 0.0
  %2789 = vmatpush1.msra.mxu0 %v2640
  %2790 = vmatprep.subr.mxu0 0.0
  %2791 = vmatpush1.msra.mxu0 %v2641
  %2792 = vmatprep.subr.mxu0 0.0
  %2793 = vmatpush1.msra.mxu0 %v2642
  %2794 = vmatprep.subr.mxu0 0.0
  %2795 = vmatpush1.msra.mxu0 %v2643
  %2796 = vmatprep.subr.mxu0 0.0
  %2797 = vmatpush1.msra.mxu0 %v2644
  %2798 = vmatprep.subr.mxu0 0.0
  %2799 = vmatpush1.msra.mxu0 %v2645
  %2800 = vmatprep.subr.mxu0 0.0
  %2801 = vmatpush1.msra.mxu0 %v2646
  %2802 = vmatprep.subr.mxu0 0.0
  %2803 = vmatpush1.msra.mxu0 %v2647
  %2804 = vmatprep.subr.mxu0 0.0
  %2805 = vmatpush1.msra.mxu0 %v2648
  %2806 = vmatprep.subr.mxu0 0.0
  %2807 = vmatpush1.msra.mxu0 %v2649
  %2808 = vmatprep.subr.mxu0 0.0
  %2809 = vmatpush1.msra.mxu0 0.0
  %2810 = vmatprep.subr.mxu0 0.0
  %2811 = vmatpush1.msra.mxu0 0.0
  %2812 = vmatprep.subr.mxu0 0.0
  %2813 = vmatpush1.msra.mxu0 0.0
  %2814 = vmatprep.subr.mxu0 0.0
  %2815 = vmatpush1.msra.mxu0 0.0
  %2816 = vmatprep.subr.mxu0 0.0
  %2817 = vmatpush1.msra.mxu0 0.0
  %2818 = vmatprep.subr.mxu0 0.0
  %2819 = vmatpush1.msra.mxu0 0.0
  %2820 = vmatprep.subr.mxu0 0.0
  %2821 = vmatpush1.msra.mxu0 0.0
  %2822 = vmatprep.subr.mxu0 0.0
  %2823 = vmatpush1.msra.mxu0 0.0
  %2824 = vmatprep.subr.mxu0 0.0
  %2825 = vmatpush1.msra.mxu0 0.0
  %2826 = vmatprep.subr.mxu0 0.0
  %2827 = vmatpush1.msra.mxu0 0.0
  %2828 = vmatprep.subr.mxu0 0.0
  %2829 = vmatpush1.msra.mxu0 0.0
  %2830 = vmatprep.subr.mxu0 0.0
  %2831 = vmatpush1.msra.mxu0 0.0
  %2832 = vmatprep.subr.mxu0 0.0
  %2833 = vmatpush1.msra.mxu0 0.0
  %2834 = vmatprep.subr.mxu0 0.0
  %2835 = vmatpush1.msra.mxu0 0.0
  %2836 = vmatprep.subr.mxu0 0.0
  %2837 = vmatpush1.msra.mxu0 0.0
  %2838 = vmatprep.subr.mxu0 0.0
  %2839 = vmatpush1.msra.mxu0 0.0
  %2840 = vmatprep.mubr.f32.mxu0 0.0
  %2841 = vmatmul.mubr.f32.gmra.mrb[0].mxu0 %v2615
  %v2842 = vpop.f32.mrb[0].mxu0
  %v2843 = vadd.f32 %v2733, %v2842
  %v2844 = vpop.f32.mrb[0].mxu0
  %2845 = vmatprep.mubr.f32.mxu0 0.0
  %2846 = vmatmul.mubr.f32.gmra.mrb[0].mxu0 %v2616
  %v2847 = vpop.f32.mrb[0].mxu0
  %v2848 = vadd.f32 %v2738, %v2847
  %v2849 = vpop.f32.mrb[0].mxu0
  %2850 = vmatprep.mubr.f32.mxu0 0.0
  %2851 = vmatmul.mubr.f32.gmra.mrb[0].mxu0 %v2617
  %v2852 = vpop.f32.mrb[0].mxu0
  %v2853 = vadd.f32 %v2743, %v2852
  %v2854 = vpop.f32.mrb[0].mxu0
  %2855 = vmatprep.mubr.f32.mxu0 0.0
  %2856 = vmatmul.mubr.f32.gmra.mrb[0].mxu0 %v2618
  %v2857 = vpop.f32.mrb[0].mxu0
  %v2858 = vadd.f32 %v2748, %v2857
  %v2859 = vpop.f32.mrb[0].mxu0
  %2860 = vmatprep.mubr.f32.mxu0 0.0
  %2861 = vmatmul.mubr.f32.gmra.mrb[0].mxu0 %v2619
  %v2862 = vpop.f32.mrb[0].mxu0
  %v2863 = vadd.f32 %v2753, %v2862
  %v2864 = vpop.f32.mrb[0].mxu0
  %2865 = vmatprep.mubr.f32.mxu0 0.0
  %2866 = vmatmul.mubr.f32.gmra.mrb[0].mxu0 %v2620
  %v2867 = vpop.f32.mrb[0].mxu0
  %v2868 = vadd.f32 %v2758, %v2867
  %v2869 = vpop.f32.mrb[0].mxu0
  %2870 = vmatprep.mubr.f32.mxu0 0.0
  %2871 = vmatmul.mubr.f32.gmra.mrb[0].mxu0 %v2621
  %v2872 = vpop.f32.mrb[0].mxu0
  %v2873 = vadd.f32 %v2763, %v2872
  %v2874 = vpop.f32.mrb[0].mxu0
  %2875 = vmatprep.mubr.f32.mxu0 0.0
  %2876 = vmatmul.mubr.f32.gmra.mrb[0].mxu0 %v2622
  %v2877 = vpop.f32.mrb[0].mxu0
  %v2878 = vadd.f32 %v2768, %v2877
  %v2879 = vpop.f32.mrb[0].mxu0
  %2880 = vmatprep.mubr.f32.mxu0 0.0
  %2881 = vmatmul.mubr.f32.gmra.mrb[0].mxu0 %v2623
  %v2882 = vpop.f32.mrb[0].mxu0
  %v2883 = vadd.f32 %v2773, %v2882
  %v2884 = vpop.f32.mrb[0].mxu0
  %2885 = vdwg.mxu0
  %v2886 = vld [vmem:[%s2377] sm:$0xff]
  %v2887 = vld [vmem:[%s2377 + $0x8] sm:$0xff]
  %v2888 = vld [vmem:[%s2377 + $0x10] sm:$0xff]
  %v2889 = vld [vmem:[%s2377 + $0x18] sm:$0xff]
  %v2890 = vld [vmem:[%s2377 + $0x20] sm:$0xff]
  %v2891 = vld [vmem:[%s2377 + $0x28] sm:$0xff]
  %v2892 = vld [vmem:[%s2377 + $0x30] sm:$0xff]
  %v2893 = vld [vmem:[%s2377 + $0x38] sm:$0xff]
  %v2894 = vld [vmem:[%s2377 + $0x40] sm:$0xff]
  %v2895 = vld [vmem:[%s2377 + $0x48] sm:$0xff]
  %v2896 = vld [vmem:[%s2377 + $0x50] sm:$0xff]
  %v2897 = vld [vmem:[%s2377 + $0x58] sm:$0xff]
  %v2898 = vld [vmem:[%s2377 + $0x60] sm:$0xff]
  %v2899 = vld [vmem:[%s2377 + $0x68] sm:$0xff]
  %v2900 = vld [vmem:[%s2377 + $0x70] sm:$0xff]
  %v2901 = vld [vmem:[%s2377 + $0x78] sm:$0xff]
  %v2912 = vrot.slane %v2615, 1
  %v2913 = vrot.slane %v2616, 1
  %v2914 = vsel %vm2404, %v2912, %v2913
  %v2915 = vrot.slane %v2617, 1
  %v2916 = vsel %vm2404, %v2913, %v2915
  %v2917 = vrot.slane %v2618, 1
  %v2918 = vsel %vm2404, %v2915, %v2917
  %v2919 = vrot.slane %v2619, 1
  %v2920 = vsel %vm2404, %v2917, %v2919
  %v2921 = vrot.slane %v2620, 1
  %v2922 = vsel %vm2404, %v2919, %v2921
  %v2923 = vrot.slane %v2621, 1
  %v2924 = vsel %vm2404, %v2921, %v2923
  %v2925 = vrot.slane %v2622, 1
  %v2926 = vsel %vm2404, %v2923, %v2925
  %v2927 = vrot.slane %v2623, 1
  %v2928 = vsel %vm2404, %v2925, %v2927
  %v2929 = vrot.slane %v2624, 1
  %v2930 = vsel %vm2404, %v2927, %v2929
  %2940 = vmatprep.subr.mxu0 0.0
  %2941 = vmatpush1.msra.mxu0 %v2886
  %2942 = vmatprep.subr.mxu0 0.0
  %2943 = vmatpush1.msra.mxu0 %v2887
  %2944 = vmatprep.subr.mxu0 0.0
  %2945 = vmatpush1.msra.mxu0 %v2888
  %2946 = vmatprep.subr.mxu0 0.0
  %2947 = vmatpush1.msra.mxu0 %v2889
  %2948 = vmatprep.subr.mxu0 0.0
  %2949 = vmatpush1.msra.mxu0 %v2890
  %2950 = vmatprep.subr.mxu0 0.0
  %2951 = vmatpush1.msra.mxu0 %v2891
  %2952 = vmatprep.subr.mxu0 0.0
  %2953 = vmatpush1.msra.mxu0 %v2892
  %2954 = vmatprep.subr.mxu0 0.0
  %2955 = vmatpush1.msra.mxu0 %v2893
  %2956 = vmatprep.subr.mxu0 0.0
  %2957 = vmatpush1.msra.mxu0 %v2894
  %2958 = vmatprep.subr.mxu0 0.0
  %2959 = vmatpush1.msra.mxu0 %v2895
  %2960 = vmatprep.subr.mxu0 0.0
  %2961 = vmatpush1.msra.mxu0 %v2896
  %2962 = vmatprep.subr.mxu0 0.0
  %2963 = vmatpush1.msra.mxu0 %v2897
  %2964 = vmatprep.subr.mxu0 0.0
  %2965 = vmatpush1.msra.mxu0 %v2898
  %2966 = vmatprep.subr.mxu0 0.0
  %2967 = vmatpush1.msra.mxu0 %v2899
  %2968 = vmatprep.subr.mxu0 0.0
  %2969 = vmatpush1.msra.mxu0 %v2900
  %2970 = vmatprep.subr.mxu0 0.0
  %2971 = vmatpush1.msra.mxu0 %v2901
  %2972 = vmatprep.subr.mxu0 0.0
  %2973 = vmatpush1.msra.mxu0 0.0
  %2974 = vmatprep.subr.mxu0 0.0
  %2975 = vmatpush1.msra.mxu0 0.0
  %2976 = vmatprep.subr.mxu0 0.0
  %2977 = vmatpush1.msra.mxu0 0.0
  %2978 = vmatprep.subr.mxu0 0.0
  %2979 = vmatpush1.msra.mxu0 0.0
  %2980 = vmatprep.subr.mxu0 0.0
  %2981 = vmatpush1.msra.mxu0 0.0
  %2982 = vmatprep.subr.mxu0 0.0
  %2983 = vmatpush1.msra.mxu0 0.0
  %2984 = vmatprep.subr.mxu0 0.0
  %2985 = vmatpush1.msra.mxu0 0.0
  %2986 = vmatprep.subr.mxu0 0.0
  %2987 = vmatpush1.msra.mxu0 0.0
  %2988 = vmatprep.subr.mxu0 0.0
  %2989 = vmatpush1.msra.mxu0 0.0
  %2990 = vmatprep.subr.mxu0 0.0
  %2991 = vmatpush1.msra.mxu0 0.0
  %2992 = vmatprep.subr.mxu0 0.0
  %2993 = vmatpush1.msra.mxu0 0.0
  %2994 = vmatprep.subr.mxu0 0.0
  %2995 = vmatpush1.msra.mxu0 0.0
  %2996 = vmatprep.subr.mxu0 0.0
  %2997 = vmatpush1.msra.mxu0 0.0
  %2998 = vmatprep.subr.mxu0 0.0
  %2999 = vmatpush1.msra.mxu0 0.0
  %3000 = vmatprep.subr.mxu0 0.0
  %3001 = vmatpush1.msra.mxu0 0.0
  %3002 = vmatprep.subr.mxu0 0.0
  %3003 = vmatpush1.msra.mxu0 0.0
  %3004 = vmatprep.mubr.f32.mxu0 0.0
  %3005 = vmatmul.mubr.f32.gmra.mrb[0].mxu0 %v2914
  %v3006 = vpop.f32.mrb[0].mxu0
  %v3007 = vadd.f32 0.0, %v3006
  %v3008 = vpop.f32.mrb[0].mxu0
  %3009 = vmatprep.mubr.f32.mxu0 0.0
  %3010 = vmatmul.mubr.f32.gmra.mrb[0].mxu0 %v2916
  %v3011 = vpop.f32.mrb[0].mxu0
  %v3012 = vadd.f32 0.0, %v3011
  %v3013 = vpop.f32.mrb[0].mxu0
  %3014 = vmatprep.mubr.f32.mxu0 0.0
  %3015 = vmatmul.mubr.f32.gmra.mrb[0].mxu0 %v2918
  %v3016 = vpop.f32.mrb[0].mxu0
  %v3017 = vadd.f32 0.0, %v3016
  %v3018 = vpop.f32.mrb[0].mxu0
  %3019 = vmatprep.mubr.f32.mxu0 0.0
  %3020 = vmatmul.mubr.f32.gmra.mrb[0].mxu0 %v2920
  %v3021 = vpop.f32.mrb[0].mxu0
  %v3022 = vadd.f32 0.0, %v3021
  %v3023 = vpop.f32.mrb[0].mxu0
  %3024 = vmatprep.mubr.f32.mxu0 0.0
  %3025 = vmatmul.mubr.f32.gmra.mrb[0].mxu0 %v2922
  %v3026 = vpop.f32.mrb[0].mxu0
  %v3027 = vadd.f32 0.0, %v3026
  %v3028 = vpop.f32.mrb[0].mxu0
  %3029 = vmatprep.mubr.f32.mxu0 0.0
  %3030 = vmatmul.mubr.f32.gmra.mrb[0].mxu0 %v2924
  %v3031 = vpop.f32.mrb[0].mxu0
  %v3032 = vadd.f32 0.0, %v3031
  %v3033 = vpop.f32.mrb[0].mxu0
  %3034 = vmatprep.mubr.f32.mxu0 0.0
  %3035 = vmatmul.mubr.f32.gmra.mrb[0].mxu0 %v2926
  %v3036 = vpop.f32.mrb[0].mxu0
  %v3037 = vadd.f32 0.0, %v3036
  %v3038 = vpop.f32.mrb[0].mxu0
  %3039 = vmatprep.mubr.f32.mxu0 0.0
  %3040 = vmatmul.mubr.f32.gmra.mrb[0].mxu0 %v2928
  %v3041 = vpop.f32.mrb[0].mxu0
  %v3042 = vadd.f32 0.0, %v3041
  %v3043 = vpop.f32.mrb[0].mxu0
  %3044 = vmatprep.mubr.f32.mxu0 0.0
  %3045 = vmatmul.mubr.f32.gmra.mrb[0].mxu0 %v2930
  %v3046 = vpop.f32.mrb[0].mxu0
  %v3047 = vadd.f32 0.0, %v3046
  %v3048 = vpop.f32.mrb[0].mxu0
  %3049 = vdwg.mxu0
  %v3050 = vadd.f32 %v2843, %v3007
  %v3051 = vadd.f32 %v2848, %v3012
  %v3052 = vadd.f32 %v2853, %v3017
  %v3053 = vadd.f32 %v2858, %v3022
  %v3054 = vadd.f32 %v2863, %v3027
  %v3055 = vadd.f32 %v2868, %v3032
  %v3056 = vadd.f32 %v2873, %v3037
  %v3057 = vadd.f32 %v2878, %v3042
  %v3058 = vadd.f32 %v2883, %v3047
  %v3059 = vadd.f32 %v3050, %v2556
  %v3060 = vadd.f32 %v3051, %v2556
  %v3061 = vadd.f32 %v3052, %v2556
  %v3062 = vadd.f32 %v3053, %v2556
  %v3063 = vadd.f32 %v3054, %v2556
  %v3064 = vadd.f32 %v3055, %v2556
  %v3065 = vadd.f32 %v3056, %v2556
  %v3066 = vadd.f32 %v3057, %v2556
  %v3067 = vadd.f32 %v3058, %v2556
  %3068 = vst [vmem:[%s9 + $0x48] sm:$0xff] %v3059
  %3069 = vst [vmem:[%s9 + $0x50] sm:$0xff] %v3060
  %3070 = vst [vmem:[%s9 + $0x58] sm:$0xff] %v3061
  %3071 = vst [vmem:[%s9 + $0x60] sm:$0xff] %v3062
  %3072 = vst [vmem:[%s9 + $0x68] sm:$0xff] %v3063
  %3073 = vst [vmem:[%s9 + $0x70] sm:$0xff] %v3064
  %3074 = vst [vmem:[%s9 + $0x78] sm:$0xff] %v3065
  %3075 = vst [vmem:[%s9 + $0x80] sm:$0xff] %v3066
  %3076 = vst [vmem:[%s9 + $0x88] sm:$0xff] %v3067
  %v3077 = vadd.f32 %v3059, %v3060
  %v3078 = vadd.f32 %v3077, %v3061
  %v3079 = vadd.f32 %v3078, %v3062
  %v3080 = vadd.f32 %v3079, %v3063
  %v3081 = vadd.f32 %v3080, %v3064
  %v3082 = vadd.f32 %v3081, %v3065
  %v3083 = vadd.f32 %v3082, %v3066
  %v3084 = vadd.f32 %v3083, %v3067
  %v3085 = vrot.slane %v3084, 4
  %v3086 = vadd.f32 %v3084, %v3085
  %v3087 = vrot.slane %v3086, 2
  %v3088 = vadd.f32 %v3086, %v3087
  %v3089 = vrot.slane %v3088, 1
  %v3090 = vadd.f32 %v3088, %v3089
  %v3091 = vadd.f32 %v2590, %v3090
  %v3092 = vmul.f32 %v3059, %v3059
  %v3093 = vmul.f32 %v3060, %v3060
  %v3094 = vmul.f32 %v3061, %v3061
  %v3095 = vmul.f32 %v3062, %v3062
  %v3096 = vmul.f32 %v3063, %v3063
  %v3097 = vmul.f32 %v3064, %v3064
  %v3098 = vmul.f32 %v3065, %v3065
  %v3099 = vmul.f32 %v3066, %v3066
  %v3100 = vmul.f32 %v3067, %v3067
  %v3101 = vadd.f32 %v3092, %v3093
  %v3102 = vadd.f32 %v3101, %v3094
  %v3103 = vadd.f32 %v3102, %v3095
  %v3104 = vadd.f32 %v3103, %v3096
  %v3105 = vadd.f32 %v3104, %v3097
  %v3106 = vadd.f32 %v3105, %v3098
  %v3107 = vadd.f32 %v3106, %v3099
  %v3108 = vadd.f32 %v3107, %v3100
  %v3109 = vrot.slane %v3108, 4
  %v3110 = vadd.f32 %v3108, %v3109
  %v3111 = vrot.slane %v3110, 2
  %v3112 = vadd.f32 %v3110, %v3111
  %v3113 = vrot.slane %v3112, 1
  %v3114 = vadd.f32 %v3112, %v3113
  %v3115 = vadd.f32 %v2614, %v3114
  %v3116 = vrcp.pop 144.0
  %v3117 = vmul.f32 %v3091, %v3116
  %v3118 = vmul.f32 %v3115, %v3116
  %v3119 = vmul.f32 %v3117, %v3117
  %v3120 = vsub.f32 %v3118, %v3119
  %v3121 = vadd.f32 %v3120, 1e-05
  %v3122 = vrsqrt.pop %v3121
  %v3123 = vld [vmem:[%s9] sm:$0xff]
  %v3124 = vld [vmem:[%s9 + $0x8] sm:$0xff]
  %v3125 = vld [vmem:[%s9 + $0x10] sm:$0xff]
  %v3126 = vld [vmem:[%s9 + $0x18] sm:$0xff]
  %v3127 = vld [vmem:[%s9 + $0x20] sm:$0xff]
  %v3128 = vld [vmem:[%s9 + $0x28] sm:$0xff]
  %v3129 = vld [vmem:[%s9 + $0x30] sm:$0xff]
  %v3130 = vld [vmem:[%s9 + $0x38] sm:$0xff]
  %v3131 = vld [vmem:[%s9 + $0x40] sm:$0xff]
  %v3132 = vsub.f32 %v3123, %v3117
  %v3133 = vsub.f32 %v3124, %v3117
  %v3134 = vsub.f32 %v3125, %v3117
  %v3135 = vsub.f32 %v3126, %v3117
  %v3136 = vsub.f32 %v3127, %v3117
  %v3137 = vsub.f32 %v3128, %v3117
  %v3138 = vsub.f32 %v3129, %v3117
  %v3139 = vsub.f32 %v3130, %v3117
  %v3140 = vsub.f32 %v3131, %v3117
  %v3141 = vmul.f32 %v3132, %v3122
  %v3142 = vmul.f32 %v3133, %v3122
  %v3143 = vmul.f32 %v3134, %v3122
  %v3144 = vmul.f32 %v3135, %v3122
  %v3145 = vmul.f32 %v3136, %v3122
  %v3146 = vmul.f32 %v3137, %v3122
  %v3147 = vmul.f32 %v3138, %v3122
  %v3148 = vmul.f32 %v3139, %v3122
  %v3149 = vmul.f32 %v3140, %v3122
  %v3150 = vmax.f32 %v3141, 0.0
  %v3151 = vmax.f32 %v3142, 0.0
  %v3152 = vmax.f32 %v3143, 0.0
  %v3153 = vmax.f32 %v3144, 0.0
  %v3154 = vmax.f32 %v3145, 0.0
  %v3155 = vmax.f32 %v3146, 0.0
  %v3156 = vmax.f32 %v3147, 0.0
  %v3157 = vmax.f32 %v3148, 0.0
  %v3158 = vmax.f32 %v3149, 0.0
  %3159 = vst [vmem:[%s9] sm:$0xff] %v3150
  %3160 = vst [vmem:[%s9 + $0x8] sm:$0xff] %v3151
  %3161 = vst [vmem:[%s9 + $0x10] sm:$0xff] %v3152
  %3162 = vst [vmem:[%s9 + $0x18] sm:$0xff] %v3153
  %3163 = vst [vmem:[%s9 + $0x20] sm:$0xff] %v3154
  %3164 = vst [vmem:[%s9 + $0x28] sm:$0xff] %v3155
  %3165 = vst [vmem:[%s9 + $0x30] sm:$0xff] %v3156
  %3166 = vst [vmem:[%s9 + $0x38] sm:$0xff] %v3157
  %3167 = vst [vmem:[%s9 + $0x40] sm:$0xff] %v3158
  %v3168 = vld [vmem:[%s9 + $0x48] sm:$0xff]
  %v3169 = vld [vmem:[%s9 + $0x50] sm:$0xff]
  %v3170 = vld [vmem:[%s9 + $0x58] sm:$0xff]
  %v3171 = vld [vmem:[%s9 + $0x60] sm:$0xff]
  %v3172 = vld [vmem:[%s9 + $0x68] sm:$0xff]
  %v3173 = vld [vmem:[%s9 + $0x70] sm:$0xff]
  %v3174 = vld [vmem:[%s9 + $0x78] sm:$0xff]
  %v3175 = vld [vmem:[%s9 + $0x80] sm:$0xff]
  %v3176 = vld [vmem:[%s9 + $0x88] sm:$0xff]
  %v3177 = vsub.f32 %v3168, %v3117
  %v3178 = vsub.f32 %v3169, %v3117
  %v3179 = vsub.f32 %v3170, %v3117
  %v3180 = vsub.f32 %v3171, %v3117
  %v3181 = vsub.f32 %v3172, %v3117
  %v3182 = vsub.f32 %v3173, %v3117
  %v3183 = vsub.f32 %v3174, %v3117
  %v3184 = vsub.f32 %v3175, %v3117
  %v3185 = vsub.f32 %v3176, %v3117
  %v3186 = vmul.f32 %v3177, %v3122
  %v3187 = vmul.f32 %v3178, %v3122
  %v3188 = vmul.f32 %v3179, %v3122
  %v3189 = vmul.f32 %v3180, %v3122
  %v3190 = vmul.f32 %v3181, %v3122
  %v3191 = vmul.f32 %v3182, %v3122
  %v3192 = vmul.f32 %v3183, %v3122
  %v3193 = vmul.f32 %v3184, %v3122
  %v3194 = vmul.f32 %v3185, %v3122
  %v3195 = vmax.f32 %v3186, 0.0
  %v3196 = vmax.f32 %v3187, 0.0
  %v3197 = vmax.f32 %v3188, 0.0
  %v3198 = vmax.f32 %v3189, 0.0
  %v3199 = vmax.f32 %v3190, 0.0
  %v3200 = vmax.f32 %v3191, 0.0
  %v3201 = vmax.f32 %v3192, 0.0
  %v3202 = vmax.f32 %v3193, 0.0
  %v3203 = vmax.f32 %v3194, 0.0
  %3204 = vst [vmem:[%s9 + $0x48] sm:$0xff] %v3195
  %3205 = vst [vmem:[%s9 + $0x50] sm:$0xff] %v3196
  %3206 = vst [vmem:[%s9 + $0x58] sm:$0xff] %v3197
  %3207 = vst [vmem:[%s9 + $0x60] sm:$0xff] %v3198
  %3208 = vst [vmem:[%s9 + $0x68] sm:$0xff] %v3199
  %3209 = vst [vmem:[%s9 + $0x70] sm:$0xff] %v3200
  %3210 = vst [vmem:[%s9 + $0x78] sm:$0xff] %v3201
  %3211 = vst [vmem:[%s9 + $0x80] sm:$0xff] %v3202
  %3212 = vst [vmem:[%s9 + $0x88] sm:$0xff] %v3203
  %v3213 = vld [vmem:[%s8] sm:$0x7]
  loop: start=0, step=1, limit=18
  $region38: #{gru_block_forward.1} parent=0 // loop_pre_header
    _
  $region39: #{gru_block_forward.1} parent=0 // loop_header
    %s3215 = sphi 0, %s3219
    %p3216 = scmp.ge.s32.totalorder %s3215, 18
    %v3220 = vphi 0.0, %v4674
  $region40: #{gru_block_forward.1} parent=0 // loop_header_branch
    %3218 = sbr.rel (%p3216) target = $region44
  $region41: #{gru_block_forward.1} parent=0 // loop_body
    %s3221 = smul.u32 %s3215, 16
    %s3222 = sshra.s32 %s3221, 3
    %s3223 = sand.u32 %s3221, 7
    %s3224 = smul.u32 %s3222, 3
    %s3225 = smul.addr %s3224, 8
    %s3226 = scalar_lea.vmem [#allocation3], %s3225
    %v3227 = vld [vmem:[%s3226] sm:$0xff]
    %v3228 = vld [vmem:[%s3226 + $0x8] sm:$0xff]
    %v3229 = vld [vmem:[%s3226 + $0x10] sm:$0xff]
    %v3230 = vld [vmem:[%s3226 + $0x18] sm:$0xff]
    %v3231 = vld [vmem:[%s3226 + $0x20] sm:$0xff]
    %v3232 = vld [vmem:[%s3226 + $0x28] sm:$0xff]
    %v3233 = vld [vmem:[%s7] sm:$0xff]
    %v3234 = vld [vmem:[%s7 + $0x8] sm:$0xff]
    %v3235 = vld [vmem:[%s7 + $0x10] sm:$0xff]
    %v3236 = vld [vmem:[%s7 + $0x18] sm:$0xff]
    %v3237 = vld [vmem:[%s7 + $0x20] sm:$0xff]
    %v3238 = vld [vmem:[%s7 + $0x28] sm:$0xff]
    %v3239 = vld [vmem:[%s7 + $0x30] sm:$0xff]
    %v3240 = vld [vmem:[%s7 + $0x38] sm:$0xff]
    %v3241 = vld [vmem:[%s7 + $0x40] sm:$0xff]
    %v3242 = vld [vmem:[%s7 + $0x48] sm:$0xff]
    %v3243 = vld [vmem:[%s7 + $0x50] sm:$0xff]
    %v3244 = vld [vmem:[%s7 + $0x58] sm:$0xff]
    %v3245 = vld [vmem:[%s7 + $0x60] sm:$0xff]
    %v3246 = vld [vmem:[%s7 + $0x68] sm:$0xff]
    %v3247 = vld [vmem:[%s7 + $0x70] sm:$0xff]
    %v3248 = vld [vmem:[%s7 + $0x78] sm:$0xff]
    %v3249 = vld [vmem:[%s7 + $0x80] sm:$0xff]
    %v3250 = vld [vmem:[%s7 + $0x88] sm:$0xff]
    %v3251 = vld [vmem:[%s7 + $0x90] sm:$0xff]
    %v3252 = vld [vmem:[%s7 + $0x98] sm:$0xff]
    %v3253 = vld [vmem:[%s7 + $0xa0] sm:$0xff]
    %v3254 = vld [vmem:[%s7 + $0xa8] sm:$0xff]
    %v3255 = vld [vmem:[%s7 + $0xb0] sm:$0xff]
    %v3256 = vld [vmem:[%s7 + $0xb8] sm:$0xff]
    %v3258 = vlaneseq
    %v3259 = vshrl.u32 %v3258, 7
    %v3260 = vsub.s32 0, %v3259
    %v3261 = vrot.slane %v3213, %v3260
    %v3262 = vlaneseq
    %v3263 = vshrl.u32 %v3262, 7
    %v3264 = vsub.s32 1, %v3263
    %v3265 = vrot.slane %v3213, %v3264
    %v3266 = vlaneseq
    %v3267 = vshrl.u32 %v3266, 7
    %v3268 = vsub.s32 2, %v3267
    %v3269 = vrot.slane %v3213, %v3268
    %v3274 = vrot.slane %v3220, 6
    %vm3275 = vcmask 523264
    %v3276 = vsel %vm3275, %v3274, 0
    %3278 = vmatprep.subr.mxu0 %v3234
    %3279 = vmatpush1.msra.mxu0 %v3233
    %3280 = vmatprep.subr.mxu0 %v3237
    %3281 = vmatpush1.msra.mxu0 %v3236
    %3282 = vmatprep.subr.mxu0 %v3240
    %3283 = vmatpush1.msra.mxu0 %v3239
    %3284 = vmatprep.subr.mxu0 %v3243
    %3285 = vmatpush1.msra.mxu0 %v3242
    %3286 = vmatprep.subr.mxu0 %v3246
    %3287 = vmatpush1.msra.mxu0 %v3245
    %3288 = vmatprep.subr.mxu0 %v3249
    %3289 = vmatpush1.msra.mxu0 %v3248
    %3290 = vmatprep.subr.mxu0 %v3252
    %3291 = vmatpush1.msra.mxu0 %v3251
    %3292 = vmatprep.subr.mxu0 %v3255
    %3293 = vmatpush1.msra.mxu0 %v3254
    %3294 = vmatprep.subr.mxu0 0.0
    %3295 = vmatpush1.msra.mxu0 0.0
    %3296 = vmatprep.subr.mxu0 0.0
    %3297 = vmatpush1.msra.mxu0 0.0
    %3298 = vmatprep.subr.mxu0 0.0
    %3299 = vmatpush1.msra.mxu0 0.0
    %3300 = vmatprep.subr.mxu0 0.0
    %3301 = vmatpush1.msra.mxu0 0.0
    %3302 = vmatprep.subr.mxu0 0.0
    %3303 = vmatpush1.msra.mxu0 0.0
    %3304 = vmatprep.subr.mxu0 0.0
    %3305 = vmatpush1.msra.mxu0 0.0
    %3306 = vmatprep.subr.mxu0 0.0
    %3307 = vmatpush1.msra.mxu0 0.0
    %3308 = vmatprep.subr.mxu0 0.0
    %3309 = vmatpush1.msra.mxu0 0.0
    %3310 = vmatprep.subr.mxu0 0.0
    %3311 = vmatpush1.msra.mxu0 0.0
    %3312 = vmatprep.subr.mxu0 0.0
    %3313 = vmatpush1.msra.mxu0 0.0
    %3314 = vmatprep.subr.mxu0 0.0
    %3315 = vmatpush1.msra.mxu0 0.0
    %3316 = vmatprep.subr.mxu0 0.0
    %3317 = vmatpush1.msra.mxu0 0.0
    %3318 = vmatprep.subr.mxu0 0.0
    %3319 = vmatpush1.msra.mxu0 0.0
    %3320 = vmatprep.subr.mxu0 0.0
    %3321 = vmatpush1.msra.mxu0 0.0
    %3322 = vmatprep.subr.mxu0 0.0
    %3323 = vmatpush1.msra.mxu0 0.0
    %3324 = vmatprep.subr.mxu0 0.0
    %3325 = vmatpush1.msra.mxu0 0.0
    %3326 = vmatprep.subr.mxu0 0.0
    %3327 = vmatpush1.msra.mxu0 0.0
    %3328 = vmatprep.subr.mxu0 0.0
    %3329 = vmatpush1.msra.mxu0 0.0
    %3330 = vmatprep.subr.mxu0 0.0
    %3331 = vmatpush1.msra.mxu0 0.0
    %3332 = vmatprep.subr.mxu0 0.0
    %3333 = vmatpush1.msra.mxu0 0.0
    %3334 = vmatprep.subr.mxu0 0.0
    %3335 = vmatpush1.msra.mxu0 0.0
    %3336 = vmatprep.subr.mxu0 0.0
    %3337 = vmatpush1.msra.mxu0 0.0
    %3338 = vmatprep.subr.mxu0 0.0
    %3339 = vmatpush1.msra.mxu0 0.0
    %3340 = vmatprep.subr.mxu0 0.0
    %3341 = vmatpush1.msra.mxu0 0.0
    %3342 = vmatprep.mubr.f32.mxu0 0.0
    %3343 = vmatmul.mubr.f32.gmra.mrb[0].mxu0 %v3276
    %v3344 = vpop.f32.mrb[0].mxu0
    %v3345 = vadd.f32 %v3261, %v3344
    %v3346 = vpop.f32.mrb[0].mxu0
    %v3347 = vadd.f32 %v3265, %v3346
    %3348 = vdwg.mxu0
    %3349 = vmatprep.subr.mxu0 0.0
    %3350 = vmatpush1.msra.mxu0 %v3235
    %3351 = vmatprep.subr.mxu0 0.0
    %3352 = vmatpush1.msra.mxu0 %v3238
    %3353 = vmatprep.subr.mxu0 0.0
    %3354 = vmatpush1.msra.mxu0 %v3241
    %3355 = vmatprep.subr.mxu0 0.0
    %3356 = vmatpush1.msra.mxu0 %v3244
    %3357 = vmatprep.subr.mxu0 0.0
    %3358 = vmatpush1.msra.mxu0 %v3247
    %3359 = vmatprep.subr.mxu0 0.0
    %3360 = vmatpush1.msra.mxu0 %v3250
    %3361 = vmatprep.subr.mxu0 0.0
    %3362 = vmatpush1.msra.mxu0 %v3253
    %3363 = vmatprep.subr.mxu0 0.0
    %3364 = vmatpush1.msra.mxu0 %v3256
    %3365 = vmatprep.subr.mxu0 0.0
    %3366 = vmatpush1.msra.mxu0 0.0
    %3367 = vmatprep.subr.mxu0 0.0
    %3368 = vmatpush1.msra.mxu0 0.0
    %3369 = vmatprep.subr.mxu0 0.0
    %3370 = vmatpush1.msra.mxu0 0.0
    %3371 = vmatprep.subr.mxu0 0.0
    %3372 = vmatpush1.msra.mxu0 0.0
    %3373 = vmatprep.subr.mxu0 0.0
    %3374 = vmatpush1.msra.mxu0 0.0
    %3375 = vmatprep.subr.mxu0 0.0
    %3376 = vmatpush1.msra.mxu0 0.0
    %3377 = vmatprep.subr.mxu0 0.0
    %3378 = vmatpush1.msra.mxu0 0.0
    %3379 = vmatprep.subr.mxu0 0.0
    %3380 = vmatpush1.msra.mxu0 0.0
    %3381 = vmatprep.subr.mxu0 0.0
    %3382 = vmatpush1.msra.mxu0 0.0
    %3383 = vmatprep.subr.mxu0 0.0
    %3384 = vmatpush1.msra.mxu0 0.0
    %3385 = vmatprep.subr.mxu0 0.0
    %3386 = vmatpush1.msra.mxu0 0.0
    %3387 = vmatprep.subr.mxu0 0.0
    %3388 = vmatpush1.msra.mxu0 0.0
    %3389 = vmatprep.subr.mxu0 0.0
    %3390 = vmatpush1.msra.mxu0 0.0
    %3391 = vmatprep.subr.mxu0 0.0
    %3392 = vmatpush1.msra.mxu0 0.0
    %3393 = vmatprep.subr.mxu0 0.0
    %3394 = vmatpush1.msra.mxu0 0.0
    %3395 = vmatprep.subr.mxu0 0.0
    %3396 = vmatpush1.msra.mxu0 0.0
    %3397 = vmatprep.subr.mxu0 0.0
    %3398 = vmatpush1.msra.mxu0 0.0
    %3399 = vmatprep.subr.mxu0 0.0
    %3400 = vmatpush1.msra.mxu0 0.0
    %3401 = vmatprep.subr.mxu0 0.0
    %3402 = vmatpush1.msra.mxu0 0.0
    %3403 = vmatprep.subr.mxu0 0.0
    %3404 = vmatpush1.msra.mxu0 0.0
    %3405 = vmatprep.subr.mxu0 0.0
    %3406 = vmatpush1.msra.mxu0 0.0
    %3407 = vmatprep.subr.mxu0 0.0
    %3408 = vmatpush1.msra.mxu0 0.0
    %3409 = vmatprep.subr.mxu0 0.0
    %3410 = vmatpush1.msra.mxu0 0.0
    %3411 = vmatprep.subr.mxu0 0.0
    %3412 = vmatpush1.msra.mxu0 0.0
    %3413 = vmatprep.mubr.f32.mxu0 0.0
    %3414 = vmatmul.mubr.f32.gmra.mrb[0].mxu0 %v3276
    %v3415 = vpop.f32.mrb[0].mxu0
    %v3416 = vadd.f32 %v3269, %v3415
    %v3417 = vpop.f32.mrb[0].mxu0
    %3418 = vdwg.mxu0
    %v3419 = vadd.f32 %v3227, %v3345
    %v3420 = vxor.u32 %v3419, 2147483648
    %v3421 = vmul.f32 %v3420, 1.442695
    %v3422 = vpow.pop %v3421
    %v3423 = vadd.f32 %v3422, 1.0
    %v3424 = vrcp.pop %v3423
    %v3425 = vmul.f32 1.0, %v3424
    %v3426 = vadd.f32 %v3228, %v3347
    %v3427 = vxor.u32 %v3426, 2147483648
    %v3428 = vmul.f32 %v3427, 1.442695
    %v3429 = vpow.pop %v3428
    %v3430 = vadd.f32 %v3429, 1.0
    %v3431 = vrcp.pop %v3430
    %v3432 = vmul.f32 1.0, %v3431
    %v3433 = vmul.f32 %v3425, %v3416
    %v3434 = vadd.f32 %v3229, %v3433
    %v3435 = vtanh.pop %v3434
    %v3436 = vsub.f32 1.0, %v3432
    %v3437 = vmul.f32 %v3436, %v3435
    %v3439 = vmul.f32 %v3432, %v3274
    %v3440 = vadd.f32 %v3437, %v3439
    %v3442 = vsel %vm3275, %v3440, 0
    %3444 = vmatprep.subr.mxu0 %v3234
    %3445 = vmatpush1.msra.mxu0 %v3233
    %3446 = vmatprep.subr.mxu0 %v3237
    %3447 = vmatpush1.msra.mxu0 %v3236
    %3448 = vmatprep.subr.mxu0 %v3240
    %3449 = vmatpush1.msra.mxu0 %v3239
    %3450 = vmatprep.subr.mxu0 %v3243
    %3451 = vmatpush1.msra.mxu0 %v3242
    %3452 = vmatprep.subr.mxu0 %v3246
    %3453 = vmatpush1.msra.mxu0 %v3245
    %3454 = vmatprep.subr.mxu0 %v3249
    %3455 = vmatpush1.msra.mxu0 %v3248
    %3456 = vmatprep.subr.mxu0 %v3252
    %3457 = vmatpush1.msra.mxu0 %v3251
    %3458 = vmatprep.subr.mxu0 %v3255
    %3459 = vmatpush1.msra.mxu0 %v3254
    %3460 = vmatprep.subr.mxu0 0.0
    %3461 = vmatpush1.msra.mxu0 0.0
    %3462 = vmatprep.subr.mxu0 0.0
    %3463 = vmatpush1.msra.mxu0 0.0
    %3464 = vmatprep.subr.mxu0 0.0
    %3465 = vmatpush1.msra.mxu0 0.0
    %3466 = vmatprep.subr.mxu0 0.0
    %3467 = vmatpush1.msra.mxu0 0.0
    %3468 = vmatprep.subr.mxu0 0.0
    %3469 = vmatpush1.msra.mxu0 0.0
    %3470 = vmatprep.subr.mxu0 0.0
    %3471 = vmatpush1.msra.mxu0 0.0
    %3472 = vmatprep.subr.mxu0 0.0
    %3473 = vmatpush1.msra.mxu0 0.0
    %3474 = vmatprep.subr.mxu0 0.0
    %3475 = vmatpush1.msra.mxu0 0.0
    %3476 = vmatprep.subr.mxu0 0.0
    %3477 = vmatpush1.msra.mxu0 0.0
    %3478 = vmatprep.subr.mxu0 0.0
    %3479 = vmatpush1.msra.mxu0 0.0
    %3480 = vmatprep.subr.mxu0 0.0
    %3481 = vmatpush1.msra.mxu0 0.0
    %3482 = vmatprep.subr.mxu0 0.0
    %3483 = vmatpush1.msra.mxu0 0.0
    %3484 = vmatprep.subr.mxu0 0.0
    %3485 = vmatpush1.msra.mxu0 0.0
    %3486 = vmatprep.subr.mxu0 0.0
    %3487 = vmatpush1.msra.mxu0 0.0
    %3488 = vmatprep.subr.mxu0 0.0
    %3489 = vmatpush1.msra.mxu0 0.0
    %3490 = vmatprep.subr.mxu0 0.0
    %3491 = vmatpush1.msra.mxu0 0.0
    %3492 = vmatprep.subr.mxu0 0.0
    %3493 = vmatpush1.msra.mxu0 0.0
    %3494 = vmatprep.subr.mxu0 0.0
    %3495 = vmatpush1.msra.mxu0 0.0
    %3496 = vmatprep.subr.mxu0 0.0
    %3497 = vmatpush1.msra.mxu0 0.0
    %3498 = vmatprep.subr.mxu0 0.0
    %3499 = vmatpush1.msra.mxu0 0.0
    %3500 = vmatprep.subr.mxu0 0.0
    %3501 = vmatpush1.msra.mxu0 0.0
    %3502 = vmatprep.subr.mxu0 0.0
    %3503 = vmatpush1.msra.mxu0 0.0
    %3504 = vmatprep.subr.mxu0 0.0
    %3505 = vmatpush1.msra.mxu0 0.0
    %3506 = vmatprep.subr.mxu0 0.0
    %3507 = vmatpush1.msra.mxu0 0.0
    %3508 = vmatprep.mubr.f32.mxu0 0.0
    %3509 = vmatmul.mubr.f32.gmra.mrb[0].mxu0 %v3442
    %v3510 = vpop.f32.mrb[0].mxu0
    %v3511 = vadd.f32 %v3261, %v3510
    %v3512 = vpop.f32.mrb[0].mxu0
    %v3513 = vadd.f32 %v3265, %v3512
    %3514 = vdwg.mxu0
    %3515 = vmatprep.subr.mxu0 0.0
    %3516 = vmatpush1.msra.mxu0 %v3235
    %3517 = vmatprep.subr.mxu0 0.0
    %3518 = vmatpush1.msra.mxu0 %v3238
    %3519 = vmatprep.subr.mxu0 0.0
    %3520 = vmatpush1.msra.mxu0 %v3241
    %3521 = vmatprep.subr.mxu0 0.0
    %3522 = vmatpush1.msra.mxu0 %v3244
    %3523 = vmatprep.subr.mxu0 0.0
    %3524 = vmatpush1.msra.mxu0 %v3247
    %3525 = vmatprep.subr.mxu0 0.0
    %3526 = vmatpush1.msra.mxu0 %v3250
    %3527 = vmatprep.subr.mxu0 0.0
    %3528 = vmatpush1.msra.mxu0 %v3253
    %3529 = vmatprep.subr.mxu0 0.0
    %3530 = vmatpush1.msra.mxu0 %v3256
    %3531 = vmatprep.subr.mxu0 0.0
    %3532 = vmatpush1.msra.mxu0 0.0
    %3533 = vmatprep.subr.mxu0 0.0
    %3534 = vmatpush1.msra.mxu0 0.0
    %3535 = vmatprep.subr.mxu0 0.0
    %3536 = vmatpush1.msra.mxu0 0.0
    %3537 = vmatprep.subr.mxu0 0.0
    %3538 = vmatpush1.msra.mxu0 0.0
    %3539 = vmatprep.subr.mxu0 0.0
    %3540 = vmatpush1.msra.mxu0 0.0
    %3541 = vmatprep.subr.mxu0 0.0
    %3542 = vmatpush1.msra.mxu0 0.0
    %3543 = vmatprep.subr.mxu0 0.0
    %3544 = vmatpush1.msra.mxu0 0.0
    %3545 = vmatprep.subr.mxu0 0.0
    %3546 = vmatpush1.msra.mxu0 0.0
    %3547 = vmatprep.subr.mxu0 0.0
    %3548 = vmatpush1.msra.mxu0 0.0
    %3549 = vmatprep.subr.mxu0 0.0
    %3550 = vmatpush1.msra.mxu0 0.0
    %3551 = vmatprep.subr.mxu0 0.0
    %3552 = vmatpush1.msra.mxu0 0.0
    %3553 = vmatprep.subr.mxu0 0.0
    %3554 = vmatpush1.msra.mxu0 0.0
    %3555 = vmatprep.subr.mxu0 0.0
    %3556 = vmatpush1.msra.mxu0 0.0
    %3557 = vmatprep.subr.mxu0 0.0
    %3558 = vmatpush1.msra.mxu0 0.0
    %3559 = vmatprep.subr.mxu0 0.0
    %3560 = vmatpush1.msra.mxu0 0.0
    %3561 = vmatprep.subr.mxu0 0.0
    %3562 = vmatpush1.msra.mxu0 0.0
    %3563 = vmatprep.subr.mxu0 0.0
    %3564 = vmatpush1.msra.mxu0 0.0
    %3565 = vmatprep.subr.mxu0 0.0
    %3566 = vmatpush1.msra.mxu0 0.0
    %3567 = vmatprep.subr.mxu0 0.0
    %3568 = vmatpush1.msra.mxu0 0.0
    %3569 = vmatprep.subr.mxu0 0.0
    %3570 = vmatpush1.msra.mxu0 0.0
    %3571 = vmatprep.subr.mxu0 0.0
    %3572 = vmatpush1.msra.mxu0 0.0
    %3573 = vmatprep.subr.mxu0 0.0
    %3574 = vmatpush1.msra.mxu0 0.0
    %3575 = vmatprep.subr.mxu0 0.0
    %3576 = vmatpush1.msra.mxu0 0.0
    %3577 = vmatprep.subr.mxu0 0.0
    %3578 = vmatpush1.msra.mxu0 0.0
    %3579 = vmatprep.mubr.f32.mxu0 0.0
    %3580 = vmatmul.mubr.f32.gmra.mrb[0].mxu0 %v3442
    %v3581 = vpop.f32.mrb[0].mxu0
    %v3582 = vadd.f32 %v3269, %v3581
    %v3583 = vpop.f32.mrb[0].mxu0
    %3584 = vdwg.mxu0
    %v3586 = vrot.slane %v3511, 6
    %v3588 = vadd.f32 %v3227, %v3586
    %v3589 = vxor.u32 %v3588, 2147483648
    %v3590 = vmul.f32 %v3589, 1.442695
    %v3591 = vpow.pop %v3590
    %v3592 = vadd.f32 %v3591, 1.0
    %v3593 = vrcp.pop %v3592
    %v3594 = vmul.f32 1.0, %v3593
    %v3596 = vrot.slane %v3513, 6
    %v3598 = vadd.f32 %v3228, %v3596
    %v3599 = vxor.u32 %v3598, 2147483648
    %v3600 = vmul.f32 %v3599, 1.442695
    %v3601 = vpow.pop %v3600
    %v3602 = vadd.f32 %v3601, 1.0
    %v3603 = vrcp.pop %v3602
    %v3604 = vmul.f32 1.0, %v3603
    %v3606 = vrot.slane %v3582, 6
    %v3608 = vmul.f32 %v3594, %v3606
    %v3609 = vadd.f32 %v3229, %v3608
    %v3610 = vtanh.pop %v3609
    %v3611 = vsub.f32 1.0, %v3604
    %v3612 = vmul.f32 %v3611, %v3610
    %v3613 = vrot.slane %v3440, 6
    %v3615 = vmul.f32 %v3604, %v3613
    %v3616 = vadd.f32 %v3612, %v3615
    %v3618 = vrot.slane %v3616, 2
    %v3620 = vadd.f32 %v3440, %v3618
    %v3621 = vsel %vm3275, %v3618, 0
    %3623 = vmatprep.subr.mxu0 %v3234
    %3624 = vmatpush1.msra.mxu0 %v3233
    %3625 = vmatprep.subr.mxu0 %v3237
    %3626 = vmatpush1.msra.mxu0 %v3236
    %3627 = vmatprep.subr.mxu0 %v3240
    %3628 = vmatpush1.msra.mxu0 %v3239
    %3629 = vmatprep.subr.mxu0 %v3243
    %3630 = vmatpush1.msra.mxu0 %v3242
    %3631 = vmatprep.subr.mxu0 %v3246
    %3632 = vmatpush1.msra.mxu0 %v3245
    %3633 = vmatprep.subr.mxu0 %v3249
    %3634 = vmatpush1.msra.mxu0 %v3248
    %3635 = vmatprep.subr.mxu0 %v3252
    %3636 = vmatpush1.msra.mxu0 %v3251
    %3637 = vmatprep.subr.mxu0 %v3255
    %3638 = vmatpush1.msra.mxu0 %v3254
    %3639 = vmatprep.subr.mxu0 0.0
    %3640 = vmatpush1.msra.mxu0 0.0
    %3641 = vmatprep.subr.mxu0 0.0
    %3642 = vmatpush1.msra.mxu0 0.0
    %3643 = vmatprep.subr.mxu0 0.0
    %3644 = vmatpush1.msra.mxu0 0.0
    %3645 = vmatprep.subr.mxu0 0.0
    %3646 = vmatpush1.msra.mxu0 0.0
    %3647 = vmatprep.subr.mxu0 0.0
    %3648 = vmatpush1.msra.mxu0 0.0
    %3649 = vmatprep.subr.mxu0 0.0
    %3650 = vmatpush1.msra.mxu0 0.0
    %3651 = vmatprep.subr.mxu0 0.0
    %3652 = vmatpush1.msra.mxu0 0.0
    %3653 = vmatprep.subr.mxu0 0.0
    %3654 = vmatpush1.msra.mxu0 0.0
    %3655 = vmatprep.subr.mxu0 0.0
    %3656 = vmatpush1.msra.mxu0 0.0
    %3657 = vmatprep.subr.mxu0 0.0
    %3658 = vmatpush1.msra.mxu0 0.0
    %3659 = vmatprep.subr.mxu0 0.0
    %3660 = vmatpush1.msra.mxu0 0.0
    %3661 = vmatprep.subr.mxu0 0.0
    %3662 = vmatpush1.msra.mxu0 0.0
    %3663 = vmatprep.subr.mxu0 0.0
    %3664 = vmatpush1.msra.mxu0 0.0
    %3665 = vmatprep.subr.mxu0 0.0
    %3666 = vmatpush1.msra.mxu0 0.0
    %3667 = vmatprep.subr.mxu0 0.0
    %3668 = vmatpush1.msra.mxu0 0.0
    %3669 = vmatprep.subr.mxu0 0.0
    %3670 = vmatpush1.msra.mxu0 0.0
    %3671 = vmatprep.subr.mxu0 0.0
    %3672 = vmatpush1.msra.mxu0 0.0
    %3673 = vmatprep.subr.mxu0 0.0
    %3674 = vmatpush1.msra.mxu0 0.0
    %3675 = vmatprep.subr.mxu0 0.0
    %3676 = vmatpush1.msra.mxu0 0.0
    %3677 = vmatprep.subr.mxu0 0.0
    %3678 = vmatpush1.msra.mxu0 0.0
    %3679 = vmatprep.subr.mxu0 0.0
    %3680 = vmatpush1.msra.mxu0 0.0
    %3681 = vmatprep.subr.mxu0 0.0
    %3682 = vmatpush1.msra.mxu0 0.0
    %3683 = vmatprep.subr.mxu0 0.0
    %3684 = vmatpush1.msra.mxu0 0.0
    %3685 = vmatprep.subr.mxu0 0.0
    %3686 = vmatpush1.msra.mxu0 0.0
    %3687 = vmatprep.mubr.f32.mxu0 0.0
    %3688 = vmatmul.mubr.f32.gmra.mrb[0].mxu0 %v3621
    %v3689 = vpop.f32.mrb[0].mxu0
    %v3690 = vadd.f32 %v3261, %v3689
    %v3691 = vpop.f32.mrb[0].mxu0
    %v3692 = vadd.f32 %v3265, %v3691
    %3693 = vdwg.mxu0
    %3694 = vmatprep.subr.mxu0 0.0
    %3695 = vmatpush1.msra.mxu0 %v3235
    %3696 = vmatprep.subr.mxu0 0.0
    %3697 = vmatpush1.msra.mxu0 %v3238
    %3698 = vmatprep.subr.mxu0 0.0
    %3699 = vmatpush1.msra.mxu0 %v3241
    %3700 = vmatprep.subr.mxu0 0.0
    %3701 = vmatpush1.msra.mxu0 %v3244
    %3702 = vmatprep.subr.mxu0 0.0
    %3703 = vmatpush1.msra.mxu0 %v3247
    %3704 = vmatprep.subr.mxu0 0.0
    %3705 = vmatpush1.msra.mxu0 %v3250
    %3706 = vmatprep.subr.mxu0 0.0
    %3707 = vmatpush1.msra.mxu0 %v3253
    %3708 = vmatprep.subr.mxu0 0.0
    %3709 = vmatpush1.msra.mxu0 %v3256
    %3710 = vmatprep.subr.mxu0 0.0
    %3711 = vmatpush1.msra.mxu0 0.0
    %3712 = vmatprep.subr.mxu0 0.0
    %3713 = vmatpush1.msra.mxu0 0.0
    %3714 = vmatprep.subr.mxu0 0.0
    %3715 = vmatpush1.msra.mxu0 0.0
    %3716 = vmatprep.subr.mxu0 0.0
    %3717 = vmatpush1.msra.mxu0 0.0
    %3718 = vmatprep.subr.mxu0 0.0
    %3719 = vmatpush1.msra.mxu0 0.0
    %3720 = vmatprep.subr.mxu0 0.0
    %3721 = vmatpush1.msra.mxu0 0.0
    %3722 = vmatprep.subr.mxu0 0.0
    %3723 = vmatpush1.msra.mxu0 0.0
    %3724 = vmatprep.subr.mxu0 0.0
    %3725 = vmatpush1.msra.mxu0 0.0
    %3726 = vmatprep.subr.mxu0 0.0
    %3727 = vmatpush1.msra.mxu0 0.0
    %3728 = vmatprep.subr.mxu0 0.0
    %3729 = vmatpush1.msra.mxu0 0.0
    %3730 = vmatprep.subr.mxu0 0.0
    %3731 = vmatpush1.msra.mxu0 0.0
    %3732 = vmatprep.subr.mxu0 0.0
    %3733 = vmatpush1.msra.mxu0 0.0
    %3734 = vmatprep.subr.mxu0 0.0
    %3735 = vmatpush1.msra.mxu0 0.0
    %3736 = vmatprep.subr.mxu0 0.0
    %3737 = vmatpush1.msra.mxu0 0.0
    %3738 = vmatprep.subr.mxu0 0.0
    %3739 = vmatpush1.msra.mxu0 0.0
    %3740 = vmatprep.subr.mxu0 0.0
    %3741 = vmatpush1.msra.mxu0 0.0
    %3742 = vmatprep.subr.mxu0 0.0
    %3743 = vmatpush1.msra.mxu0 0.0
    %3744 = vmatprep.subr.mxu0 0.0
    %3745 = vmatpush1.msra.mxu0 0.0
    %3746 = vmatprep.subr.mxu0 0.0
    %3747 = vmatpush1.msra.mxu0 0.0
    %3748 = vmatprep.subr.mxu0 0.0
    %3749 = vmatpush1.msra.mxu0 0.0
    %3750 = vmatprep.subr.mxu0 0.0
    %3751 = vmatpush1.msra.mxu0 0.0
    %3752 = vmatprep.subr.mxu0 0.0
    %3753 = vmatpush1.msra.mxu0 0.0
    %3754 = vmatprep.subr.mxu0 0.0
    %3755 = vmatpush1.msra.mxu0 0.0
    %3756 = vmatprep.subr.mxu0 0.0
    %3757 = vmatpush1.msra.mxu0 0.0
    %3758 = vmatprep.mubr.f32.mxu0 0.0
    %3759 = vmatmul.mubr.f32.gmra.mrb[0].mxu0 %v3621
    %v3760 = vpop.f32.mrb[0].mxu0
    %v3761 = vadd.f32 %v3269, %v3760
    %v3762 = vpop.f32.mrb[0].mxu0
    %3763 = vdwg.mxu0
    %v3765 = vrot.slane %v3690, 4
    %v3767 = vadd.f32 %v3227, %v3765
    %v3768 = vxor.u32 %v3767, 2147483648
    %v3769 = vmul.f32 %v3768, 1.442695
    %v3770 = vpow.pop %v3769
    %v3771 = vadd.f32 %v3770, 1.0
    %v3772 = vrcp.pop %v3771
    %v3773 = vmul.f32 1.0, %v3772
    %v3775 = vrot.slane %v3692, 4
    %v3777 = vadd.f32 %v3228, %v3775
    %v3778 = vxor.u32 %v3777, 2147483648
    %v3779 = vmul.f32 %v3778, 1.442695
    %v3780 = vpow.pop %v3779
    %v3781 = vadd.f32 %v3780, 1.0
    %v3782 = vrcp.pop %v3781
    %v3783 = vmul.f32 1.0, %v3782
    %v3785 = vrot.slane %v3761, 4
    %v3787 = vmul.f32 %v3773, %v3785
    %v3788 = vadd.f32 %v3229, %v3787
    %v3789 = vtanh.pop %v3788
    %v3790 = vsub.f32 1.0, %v3783
    %v3791 = vmul.f32 %v3790, %v3789
    %v3792 = vrot.slane %v3616, 6
    %v3794 = vmul.f32 %v3783, %v3792
    %v3795 = vadd.f32 %v3791, %v3794
    %v3797 = vrot.slane %v3795, 4
    %v3798 = vsel %vm3275, %v3797, 0
    %3800 = vmatprep.subr.mxu0 %v3234
    %3801 = vmatpush1.msra.mxu0 %v3233
    %3802 = vmatprep.subr.mxu0 %v3237
    %3803 = vmatpush1.msra.mxu0 %v3236
    %3804 = vmatprep.subr.mxu0 %v3240
    %3805 = vmatpush1.msra.mxu0 %v3239
    %3806 = vmatprep.subr.mxu0 %v3243
    %3807 = vmatpush1.msra.mxu0 %v3242
    %3808 = vmatprep.subr.mxu0 %v3246
    %3809 = vmatpush1.msra.mxu0 %v3245
    %3810 = vmatprep.subr.mxu0 %v3249
    %3811 = vmatpush1.msra.mxu0 %v3248
    %3812 = vmatprep.subr.mxu0 %v3252
    %3813 = vmatpush1.msra.mxu0 %v3251
    %3814 = vmatprep.subr.mxu0 %v3255
    %3815 = vmatpush1.msra.mxu0 %v3254
    %3816 = vmatprep.subr.mxu0 0.0
    %3817 = vmatpush1.msra.mxu0 0.0
    %3818 = vmatprep.subr.mxu0 0.0
    %3819 = vmatpush1.msra.mxu0 0.0
    %3820 = vmatprep.subr.mxu0 0.0
    %3821 = vmatpush1.msra.mxu0 0.0
    %3822 = vmatprep.subr.mxu0 0.0
    %3823 = vmatpush1.msra.mxu0 0.0
    %3824 = vmatprep.subr.mxu0 0.0
    %3825 = vmatpush1.msra.mxu0 0.0
    %3826 = vmatprep.subr.mxu0 0.0
    %3827 = vmatpush1.msra.mxu0 0.0
    %3828 = vmatprep.subr.mxu0 0.0
    %3829 = vmatpush1.msra.mxu0 0.0
    %3830 = vmatprep.subr.mxu0 0.0
    %3831 = vmatpush1.msra.mxu0 0.0
    %3832 = vmatprep.subr.mxu0 0.0
    %3833 = vmatpush1.msra.mxu0 0.0
    %3834 = vmatprep.subr.mxu0 0.0
    %3835 = vmatpush1.msra.mxu0 0.0
    %3836 = vmatprep.subr.mxu0 0.0
    %3837 = vmatpush1.msra.mxu0 0.0
    %3838 = vmatprep.subr.mxu0 0.0
    %3839 = vmatpush1.msra.mxu0 0.0
    %3840 = vmatprep.subr.mxu0 0.0
    %3841 = vmatpush1.msra.mxu0 0.0
    %3842 = vmatprep.subr.mxu0 0.0
    %3843 = vmatpush1.msra.mxu0 0.0
    %3844 = vmatprep.subr.mxu0 0.0
    %3845 = vmatpush1.msra.mxu0 0.0
    %3846 = vmatprep.subr.mxu0 0.0
    %3847 = vmatpush1.msra.mxu0 0.0
    %3848 = vmatprep.subr.mxu0 0.0
    %3849 = vmatpush1.msra.mxu0 0.0
    %3850 = vmatprep.subr.mxu0 0.0
    %3851 = vmatpush1.msra.mxu0 0.0
    %3852 = vmatprep.subr.mxu0 0.0
    %3853 = vmatpush1.msra.mxu0 0.0
    %3854 = vmatprep.subr.mxu0 0.0
    %3855 = vmatpush1.msra.mxu0 0.0
    %3856 = vmatprep.subr.mxu0 0.0
    %3857 = vmatpush1.msra.mxu0 0.0
    %3858 = vmatprep.subr.mxu0 0.0
    %3859 = vmatpush1.msra.mxu0 0.0
    %3860 = vmatprep.subr.mxu0 0.0
    %3861 = vmatpush1.msra.mxu0 0.0
    %3862 = vmatprep.subr.mxu0 0.0
    %3863 = vmatpush1.msra.mxu0 0.0
    %3864 = vmatprep.mubr.f32.mxu0 0.0
    %3865 = vmatmul.mubr.f32.gmra.mrb[0].mxu0 %v3798
    %v3866 = vpop.f32.mrb[0].mxu0
    %v3867 = vadd.f32 %v3261, %v3866
    %v3868 = vpop.f32.mrb[0].mxu0
    %v3869 = vadd.f32 %v3265, %v3868
    %3870 = vdwg.mxu0
    %3871 = vmatprep.subr.mxu0 0.0
    %3872 = vmatpush1.msra.mxu0 %v3235
    %3873 = vmatprep.subr.mxu0 0.0
    %3874 = vmatpush1.msra.mxu0 %v3238
    %3875 = vmatprep.subr.mxu0 0.0
    %3876 = vmatpush1.msra.mxu0 %v3241
    %3877 = vmatprep.subr.mxu0 0.0
    %3878 = vmatpush1.msra.mxu0 %v3244
    %3879 = vmatprep.subr.mxu0 0.0
    %3880 = vmatpush1.msra.mxu0 %v3247
    %3881 = vmatprep.subr.mxu0 0.0
    %3882 = vmatpush1.msra.mxu0 %v3250
    %3883 = vmatprep.subr.mxu0 0.0
    %3884 = vmatpush1.msra.mxu0 %v3253
    %3885 = vmatprep.subr.mxu0 0.0
    %3886 = vmatpush1.msra.mxu0 %v3256
    %3887 = vmatprep.subr.mxu0 0.0
    %3888 = vmatpush1.msra.mxu0 0.0
    %3889 = vmatprep.subr.mxu0 0.0
    %3890 = vmatpush1.msra.mxu0 0.0
    %3891 = vmatprep.subr.mxu0 0.0
    %3892 = vmatpush1.msra.mxu0 0.0
    %3893 = vmatprep.subr.mxu0 0.0
    %3894 = vmatpush1.msra.mxu0 0.0
    %3895 = vmatprep.subr.mxu0 0.0
    %3896 = vmatpush1.msra.mxu0 0.0
    %3897 = vmatprep.subr.mxu0 0.0
    %3898 = vmatpush1.msra.mxu0 0.0
    %3899 = vmatprep.subr.mxu0 0.0
    %3900 = vmatpush1.msra.mxu0 0.0
    %3901 = vmatprep.subr.mxu0 0.0
    %3902 = vmatpush1.msra.mxu0 0.0
    %3903 = vmatprep.subr.mxu0 0.0
    %3904 = vmatpush1.msra.mxu0 0.0
    %3905 = vmatprep.subr.mxu0 0.0
    %3906 = vmatpush1.msra.mxu0 0.0
    %3907 = vmatprep.subr.mxu0 0.0
    %3908 = vmatpush1.msra.mxu0 0.0
    %3909 = vmatprep.subr.mxu0 0.0
    %3910 = vmatpush1.msra.mxu0 0.0
    %3911 = vmatprep.subr.mxu0 0.0
    %3912 = vmatpush1.msra.mxu0 0.0
    %3913 = vmatprep.subr.mxu0 0.0
    %3914 = vmatpush1.msra.mxu0 0.0
    %3915 = vmatprep.subr.mxu0 0.0
    %3916 = vmatpush1.msra.mxu0 0.0
    %3917 = vmatprep.subr.mxu0 0.0
    %3918 = vmatpush1.msra.mxu0 0.0
    %3919 = vmatprep.subr.mxu0 0.0
    %3920 = vmatpush1.msra.mxu0 0.0
    %3921 = vmatprep.subr.mxu0 0.0
    %3922 = vmatpush1.msra.mxu0 0.0
    %3923 = vmatprep.subr.mxu0 0.0
    %3924 = vmatpush1.msra.mxu0 0.0
    %3925 = vmatprep.subr.mxu0 0.0
    %3926 = vmatpush1.msra.mxu0 0.0
    %3927 = vmatprep.subr.mxu0 0.0
    %3928 = vmatpush1.msra.mxu0 0.0
    %3929 = vmatprep.subr.mxu0 0.0
    %3930 = vmatpush1.msra.mxu0 0.0
    %3931 = vmatprep.subr.mxu0 0.0
    %3932 = vmatpush1.msra.mxu0 0.0
    %3933 = vmatprep.subr.mxu0 0.0
    %3934 = vmatpush1.msra.mxu0 0.0
    %3935 = vmatprep.mubr.f32.mxu0 0.0
    %3936 = vmatmul.mubr.f32.gmra.mrb[0].mxu0 %v3798
    %v3937 = vpop.f32.mrb[0].mxu0
    %v3938 = vadd.f32 %v3269, %v3937
    %v3939 = vpop.f32.mrb[0].mxu0
    %3940 = vdwg.mxu0
    %v3942 = vrot.slane %v3867, 2
    %v3944 = vadd.f32 %v3227, %v3942
    %v3945 = vxor.u32 %v3944, 2147483648
    %v3946 = vmul.f32 %v3945, 1.442695
    %v3947 = vpow.pop %v3946
    %v3948 = vadd.f32 %v3947, 1.0
    %v3949 = vrcp.pop %v3948
    %v3950 = vmul.f32 1.0, %v3949
    %v3952 = vrot.slane %v3869, 2
    %v3954 = vadd.f32 %v3228, %v3952
    %v3955 = vxor.u32 %v3954, 2147483648
    %v3956 = vmul.f32 %v3955, 1.442695
    %v3957 = vpow.pop %v3956
    %v3958 = vadd.f32 %v3957, 1.0
    %v3959 = vrcp.pop %v3958
    %v3960 = vmul.f32 1.0, %v3959
    %v3962 = vrot.slane %v3938, 2
    %v3964 = vmul.f32 %v3950, %v3962
    %v3965 = vadd.f32 %v3229, %v3964
    %v3966 = vtanh.pop %v3965
    %v3967 = vsub.f32 1.0, %v3960
    %v3968 = vmul.f32 %v3967, %v3966
    %v3969 = vrot.slane %v3795, 6
    %v3971 = vmul.f32 %v3960, %v3969
    %v3972 = vadd.f32 %v3968, %v3971
    %v3974 = vrot.slane %v3972, 2
    %v3976 = vadd.f32 %v3795, %v3974
    %v3977 = vrot.slane %v3972, 6
    %v3978 = vsel %vm3275, %v3977, 0
    %3980 = vmatprep.subr.mxu0 %v3234
    %3981 = vmatpush1.msra.mxu0 %v3233
    %3982 = vmatprep.subr.mxu0 %v3237
    %3983 = vmatpush1.msra.mxu0 %v3236
    %3984 = vmatprep.subr.mxu0 %v3240
    %3985 = vmatpush1.msra.mxu0 %v3239
    %3986 = vmatprep.subr.mxu0 %v3243
    %3987 = vmatpush1.msra.mxu0 %v3242
    %3988 = vmatprep.subr.mxu0 %v3246
    %3989 = vmatpush1.msra.mxu0 %v3245
    %3990 = vmatprep.subr.mxu0 %v3249
    %3991 = vmatpush1.msra.mxu0 %v3248
    %3992 = vmatprep.subr.mxu0 %v3252
    %3993 = vmatpush1.msra.mxu0 %v3251
    %3994 = vmatprep.subr.mxu0 %v3255
    %3995 = vmatpush1.msra.mxu0 %v3254
    %3996 = vmatprep.subr.mxu0 0.0
    %3997 = vmatpush1.msra.mxu0 0.0
    %3998 = vmatprep.subr.mxu0 0.0
    %3999 = vmatpush1.msra.mxu0 0.0
    %4000 = vmatprep.subr.mxu0 0.0
    %4001 = vmatpush1.msra.mxu0 0.0
    %4002 = vmatprep.subr.mxu0 0.0
    %4003 = vmatpush1.msra.mxu0 0.0
    %4004 = vmatprep.subr.mxu0 0.0
    %4005 = vmatpush1.msra.mxu0 0.0
    %4006 = vmatprep.subr.mxu0 0.0
    %4007 = vmatpush1.msra.mxu0 0.0
    %4008 = vmatprep.subr.mxu0 0.0
    %4009 = vmatpush1.msra.mxu0 0.0
    %4010 = vmatprep.subr.mxu0 0.0
    %4011 = vmatpush1.msra.mxu0 0.0
    %4012 = vmatprep.subr.mxu0 0.0
    %4013 = vmatpush1.msra.mxu0 0.0
    %4014 = vmatprep.subr.mxu0 0.0
    %4015 = vmatpush1.msra.mxu0 0.0
    %4016 = vmatprep.subr.mxu0 0.0
    %4017 = vmatpush1.msra.mxu0 0.0
    %4018 = vmatprep.subr.mxu0 0.0
    %4019 = vmatpush1.msra.mxu0 0.0
    %4020 = vmatprep.subr.mxu0 0.0
    %4021 = vmatpush1.msra.mxu0 0.0
    %4022 = vmatprep.subr.mxu0 0.0
    %4023 = vmatpush1.msra.mxu0 0.0
    %4024 = vmatprep.subr.mxu0 0.0
    %4025 = vmatpush1.msra.mxu0 0.0
    %4026 = vmatprep.subr.mxu0 0.0
    %4027 = vmatpush1.msra.mxu0 0.0
    %4028 = vmatprep.subr.mxu0 0.0
    %4029 = vmatpush1.msra.mxu0 0.0
    %4030 = vmatprep.subr.mxu0 0.0
    %4031 = vmatpush1.msra.mxu0 0.0
    %4032 = vmatprep.subr.mxu0 0.0
    %4033 = vmatpush1.msra.mxu0 0.0
    %4034 = vmatprep.subr.mxu0 0.0
    %4035 = vmatpush1.msra.mxu0 0.0
    %4036 = vmatprep.subr.mxu0 0.0
    %4037 = vmatpush1.msra.mxu0 0.0
    %4038 = vmatprep.subr.mxu0 0.0
    %4039 = vmatpush1.msra.mxu0 0.0
    %4040 = vmatprep.subr.mxu0 0.0
    %4041 = vmatpush1.msra.mxu0 0.0
    %4042 = vmatprep.subr.mxu0 0.0
    %4043 = vmatpush1.msra.mxu0 0.0
    %4044 = vmatprep.mubr.f32.mxu0 0.0
    %4045 = vmatmul.mubr.f32.gmra.mrb[0].mxu0 %v3978
    %v4046 = vpop.f32.mrb[0].mxu0
    %v4047 = vadd.f32 %v3261, %v4046
    %v4048 = vpop.f32.mrb[0].mxu0
    %v4049 = vadd.f32 %v3265, %v4048
    %4050 = vdwg.mxu0
    %4051 = vmatprep.subr.mxu0 0.0
    %4052 = vmatpush1.msra.mxu0 %v3235
    %4053 = vmatprep.subr.mxu0 0.0
    %4054 = vmatpush1.msra.mxu0 %v3238
    %4055 = vmatprep.subr.mxu0 0.0
    %4056 = vmatpush1.msra.mxu0 %v3241
    %4057 = vmatprep.subr.mxu0 0.0
    %4058 = vmatpush1.msra.mxu0 %v3244
    %4059 = vmatprep.subr.mxu0 0.0
    %4060 = vmatpush1.msra.mxu0 %v3247
    %4061 = vmatprep.subr.mxu0 0.0
    %4062 = vmatpush1.msra.mxu0 %v3250
    %4063 = vmatprep.subr.mxu0 0.0
    %4064 = vmatpush1.msra.mxu0 %v3253
    %4065 = vmatprep.subr.mxu0 0.0
    %4066 = vmatpush1.msra.mxu0 %v3256
    %4067 = vmatprep.subr.mxu0 0.0
    %4068 = vmatpush1.msra.mxu0 0.0
    %4069 = vmatprep.subr.mxu0 0.0
    %4070 = vmatpush1.msra.mxu0 0.0
    %4071 = vmatprep.subr.mxu0 0.0
    %4072 = vmatpush1.msra.mxu0 0.0
    %4073 = vmatprep.subr.mxu0 0.0
    %4074 = vmatpush1.msra.mxu0 0.0
    %4075 = vmatprep.subr.mxu0 0.0
    %4076 = vmatpush1.msra.mxu0 0.0
    %4077 = vmatprep.subr.mxu0 0.0
    %4078 = vmatpush1.msra.mxu0 0.0
    %4079 = vmatprep.subr.mxu0 0.0
    %4080 = vmatpush1.msra.mxu0 0.0
    %4081 = vmatprep.subr.mxu0 0.0
    %4082 = vmatpush1.msra.mxu0 0.0
    %4083 = vmatprep.subr.mxu0 0.0
    %4084 = vmatpush1.msra.mxu0 0.0
    %4085 = vmatprep.subr.mxu0 0.0
    %4086 = vmatpush1.msra.mxu0 0.0
    %4087 = vmatprep.subr.mxu0 0.0
    %4088 = vmatpush1.msra.mxu0 0.0
    %4089 = vmatprep.subr.mxu0 0.0
    %4090 = vmatpush1.msra.mxu0 0.0
    %4091 = vmatprep.subr.mxu0 0.0
    %4092 = vmatpush1.msra.mxu0 0.0
    %4093 = vmatprep.subr.mxu0 0.0
    %4094 = vmatpush1.msra.mxu0 0.0
    %4095 = vmatprep.subr.mxu0 0.0
    %4096 = vmatpush1.msra.mxu0 0.0
    %4097 = vmatprep.subr.mxu0 0.0
    %4098 = vmatpush1.msra.mxu0 0.0
    %4099 = vmatprep.subr.mxu0 0.0
    %4100 = vmatpush1.msra.mxu0 0.0
    %4101 = vmatprep.subr.mxu0 0.0
    %4102 = vmatpush1.msra.mxu0 0.0
    %4103 = vmatprep.subr.mxu0 0.0
    %4104 = vmatpush1.msra.mxu0 0.0
    %4105 = vmatprep.subr.mxu0 0.0
    %4106 = vmatpush1.msra.mxu0 0.0
    %4107 = vmatprep.subr.mxu0 0.0
    %4108 = vmatpush1.msra.mxu0 0.0
    %4109 = vmatprep.subr.mxu0 0.0
    %4110 = vmatpush1.msra.mxu0 0.0
    %4111 = vmatprep.subr.mxu0 0.0
    %4112 = vmatpush1.msra.mxu0 0.0
    %4113 = vmatprep.subr.mxu0 0.0
    %4114 = vmatpush1.msra.mxu0 0.0
    %4115 = vmatprep.mubr.f32.mxu0 0.0
    %4116 = vmatmul.mubr.f32.gmra.mrb[0].mxu0 %v3978
    %v4117 = vpop.f32.mrb[0].mxu0
    %v4118 = vadd.f32 %v3269, %v4117
    %v4119 = vpop.f32.mrb[0].mxu0
    %4120 = vdwg.mxu0
    %v4121 = vadd.f32 %v3230, %v4047
    %v4122 = vxor.u32 %v4121, 2147483648
    %v4123 = vmul.f32 %v4122, 1.442695
    %v4124 = vpow.pop %v4123
    %v4125 = vadd.f32 %v4124, 1.0
    %v4126 = vrcp.pop %v4125
    %v4127 = vmul.f32 1.0, %v4126
    %v4128 = vadd.f32 %v3231, %v4049
    %v4129 = vxor.u32 %v4128, 2147483648
    %v4130 = vmul.f32 %v4129, 1.442695
    %v4131 = vpow.pop %v4130
    %v4132 = vadd.f32 %v4131, 1.0
    %v4133 = vrcp.pop %v4132
    %v4134 = vmul.f32 1.0, %v4133
    %v4135 = vmul.f32 %v4127, %v4118
    %v4136 = vadd.f32 %v3232, %v4135
    %v4137 = vtanh.pop %v4136
    %v4138 = vsub.f32 1.0, %v4134
    %v4139 = vmul.f32 %v4138, %v4137
    %v4141 = vmul.f32 %v4134, %v3977
    %v4142 = vadd.f32 %v4139, %v4141
    %v4144 = vsel %vm3275, %v4142, 0
    %4146 = vmatprep.subr.mxu0 %v3234
    %4147 = vmatpush1.msra.mxu0 %v3233
    %4148 = vmatprep.subr.mxu0 %v3237
    %4149 = vmatpush1.msra.mxu0 %v3236
    %4150 = vmatprep.subr.mxu0 %v3240
    %4151 = vmatpush1.msra.mxu0 %v3239
    %4152 = vmatprep.subr.mxu0 %v3243
    %4153 = vmatpush1.msra.mxu0 %v3242
    %4154 = vmatprep.subr.mxu0 %v3246
    %4155 = vmatpush1.msra.mxu0 %v3245
    %4156 = vmatprep.subr.mxu0 %v3249
    %4157 = vmatpush1.msra.mxu0 %v3248
    %4158 = vmatprep.subr.mxu0 %v3252
    %4159 = vmatpush1.msra.mxu0 %v3251
    %4160 = vmatprep.subr.mxu0 %v3255
    %4161 = vmatpush1.msra.mxu0 %v3254
    %4162 = vmatprep.subr.mxu0 0.0
    %4163 = vmatpush1.msra.mxu0 0.0
    %4164 = vmatprep.subr.mxu0 0.0
    %4165 = vmatpush1.msra.mxu0 0.0
    %4166 = vmatprep.subr.mxu0 0.0
    %4167 = vmatpush1.msra.mxu0 0.0
    %4168 = vmatprep.subr.mxu0 0.0
    %4169 = vmatpush1.msra.mxu0 0.0
    %4170 = vmatprep.subr.mxu0 0.0
    %4171 = vmatpush1.msra.mxu0 0.0
    %4172 = vmatprep.subr.mxu0 0.0
    %4173 = vmatpush1.msra.mxu0 0.0
    %4174 = vmatprep.subr.mxu0 0.0
    %4175 = vmatpush1.msra.mxu0 0.0
    %4176 = vmatprep.subr.mxu0 0.0
    %4177 = vmatpush1.msra.mxu0 0.0
    %4178 = vmatprep.subr.mxu0 0.0
    %4179 = vmatpush1.msra.mxu0 0.0
    %4180 = vmatprep.subr.mxu0 0.0
    %4181 = vmatpush1.msra.mxu0 0.0
    %4182 = vmatprep.subr.mxu0 0.0
    %4183 = vmatpush1.msra.mxu0 0.0
    %4184 = vmatprep.subr.mxu0 0.0
    %4185 = vmatpush1.msra.mxu0 0.0
    %4186 = vmatprep.subr.mxu0 0.0
    %4187 = vmatpush1.msra.mxu0 0.0
    %4188 = vmatprep.subr.mxu0 0.0
    %4189 = vmatpush1.msra.mxu0 0.0
    %4190 = vmatprep.subr.mxu0 0.0
    %4191 = vmatpush1.msra.mxu0 0.0
    %4192 = vmatprep.subr.mxu0 0.0
    %4193 = vmatpush1.msra.mxu0 0.0
    %4194 = vmatprep.subr.mxu0 0.0
    %4195 = vmatpush1.msra.mxu0 0.0
    %4196 = vmatprep.subr.mxu0 0.0
    %4197 = vmatpush1.msra.mxu0 0.0
    %4198 = vmatprep.subr.mxu0 0.0
    %4199 = vmatpush1.msra.mxu0 0.0
    %4200 = vmatprep.subr.mxu0 0.0
    %4201 = vmatpush1.msra.mxu0 0.0
    %4202 = vmatprep.subr.mxu0 0.0
    %4203 = vmatpush1.msra.mxu0 0.0
    %4204 = vmatprep.subr.mxu0 0.0
    %4205 = vmatpush1.msra.mxu0 0.0
    %4206 = vmatprep.subr.mxu0 0.0
    %4207 = vmatpush1.msra.mxu0 0.0
    %4208 = vmatprep.subr.mxu0 0.0
    %4209 = vmatpush1.msra.mxu0 0.0
    %4210 = vmatprep.mubr.f32.mxu0 0.0
    %4211 = vmatmul.mubr.f32.gmra.mrb[0].mxu0 %v4144
    %v4212 = vpop.f32.mrb[0].mxu0
    %v4213 = vadd.f32 %v3261, %v4212
    %v4214 = vpop.f32.mrb[0].mxu0
    %v4215 = vadd.f32 %v3265, %v4214
    %4216 = vdwg.mxu0
    %4217 = vmatprep.subr.mxu0 0.0
    %4218 = vmatpush1.msra.mxu0 %v3235
    %4219 = vmatprep.subr.mxu0 0.0
    %4220 = vmatpush1.msra.mxu0 %v3238
    %4221 = vmatprep.subr.mxu0 0.0
    %4222 = vmatpush1.msra.mxu0 %v3241
    %4223 = vmatprep.subr.mxu0 0.0
    %4224 = vmatpush1.msra.mxu0 %v3244
    %4225 = vmatprep.subr.mxu0 0.0
    %4226 = vmatpush1.msra.mxu0 %v3247
    %4227 = vmatprep.subr.mxu0 0.0
    %4228 = vmatpush1.msra.mxu0 %v3250
    %4229 = vmatprep.subr.mxu0 0.0
    %4230 = vmatpush1.msra.mxu0 %v3253
    %4231 = vmatprep.subr.mxu0 0.0
    %4232 = vmatpush1.msra.mxu0 %v3256
    %4233 = vmatprep.subr.mxu0 0.0
    %4234 = vmatpush1.msra.mxu0 0.0
    %4235 = vmatprep.subr.mxu0 0.0
    %4236 = vmatpush1.msra.mxu0 0.0
    %4237 = vmatprep.subr.mxu0 0.0
    %4238 = vmatpush1.msra.mxu0 0.0
    %4239 = vmatprep.subr.mxu0 0.0
    %4240 = vmatpush1.msra.mxu0 0.0
    %4241 = vmatprep.subr.mxu0 0.0
    %4242 = vmatpush1.msra.mxu0 0.0
    %4243 = vmatprep.subr.mxu0 0.0
    %4244 = vmatpush1.msra.mxu0 0.0
    %4245 = vmatprep.subr.mxu0 0.0
    %4246 = vmatpush1.msra.mxu0 0.0
    %4247 = vmatprep.subr.mxu0 0.0
    %4248 = vmatpush1.msra.mxu0 0.0
    %4249 = vmatprep.subr.mxu0 0.0
    %4250 = vmatpush1.msra.mxu0 0.0
    %4251 = vmatprep.subr.mxu0 0.0
    %4252 = vmatpush1.msra.mxu0 0.0
    %4253 = vmatprep.subr.mxu0 0.0
    %4254 = vmatpush1.msra.mxu0 0.0
    %4255 = vmatprep.subr.mxu0 0.0
    %4256 = vmatpush1.msra.mxu0 0.0
    %4257 = vmatprep.subr.mxu0 0.0
    %4258 = vmatpush1.msra.mxu0 0.0
    %4259 = vmatprep.subr.mxu0 0.0
    %4260 = vmatpush1.msra.mxu0 0.0
    %4261 = vmatprep.subr.mxu0 0.0
    %4262 = vmatpush1.msra.mxu0 0.0
    %4263 = vmatprep.subr.mxu0 0.0
    %4264 = vmatpush1.msra.mxu0 0.0
    %4265 = vmatprep.subr.mxu0 0.0
    %4266 = vmatpush1.msra.mxu0 0.0
    %4267 = vmatprep.subr.mxu0 0.0
    %4268 = vmatpush1.msra.mxu0 0.0
    %4269 = vmatprep.subr.mxu0 0.0
    %4270 = vmatpush1.msra.mxu0 0.0
    %4271 = vmatprep.subr.mxu0 0.0
    %4272 = vmatpush1.msra.mxu0 0.0
    %4273 = vmatprep.subr.mxu0 0.0
    %4274 = vmatpush1.msra.mxu0 0.0
    %4275 = vmatprep.subr.mxu0 0.0
    %4276 = vmatpush1.msra.mxu0 0.0
    %4277 = vmatprep.subr.mxu0 0.0
    %4278 = vmatpush1.msra.mxu0 0.0
    %4279 = vmatprep.subr.mxu0 0.0
    %4280 = vmatpush1.msra.mxu0 0.0
    %4281 = vmatprep.mubr.f32.mxu0 0.0
    %4282 = vmatmul.mubr.f32.gmra.mrb[0].mxu0 %v4144
    %v4283 = vpop.f32.mrb[0].mxu0
    %v4284 = vadd.f32 %v3269, %v4283
    %v4285 = vpop.f32.mrb[0].mxu0
    %4286 = vdwg.mxu0
    %v4288 = vrot.slane %v4213, 6
    %v4290 = vadd.f32 %v3230, %v4288
    %v4291 = vxor.u32 %v4290, 2147483648
    %v4292 = vmul.f32 %v4291, 1.442695
    %v4293 = vpow.pop %v4292
    %v4294 = vadd.f32 %v4293, 1.0
    %v4295 = vrcp.pop %v4294
    %v4296 = vmul.f32 1.0, %v4295
    %v4298 = vrot.slane %v4215, 6
    %v4300 = vadd.f32 %v3231, %v4298
    %v4301 = vxor.u32 %v4300, 2147483648
    %v4302 = vmul.f32 %v4301, 1.442695
    %v4303 = vpow.pop %v4302
    %v4304 = vadd.f32 %v4303, 1.0
    %v4305 = vrcp.pop %v4304
    %v4306 = vmul.f32 1.0, %v4305
    %v4308 = vrot.slane %v4284, 6
    %v4310 = vmul.f32 %v4296, %v4308
    %v4311 = vadd.f32 %v3232, %v4310
    %v4312 = vtanh.pop %v4311
    %v4313 = vsub.f32 1.0, %v4306
    %v4314 = vmul.f32 %v4313, %v4312
    %v4315 = vrot.slane %v4142, 6
    %v4317 = vmul.f32 %v4306, %v4315
    %v4318 = vadd.f32 %v4314, %v4317
    %v4320 = vrot.slane %v4318, 2
    %v4322 = vadd.f32 %v4142, %v4320
    %v4323 = vsel %vm3275, %v4320, 0
    %4325 = vmatprep.subr.mxu0 %v3234
    %4326 = vmatpush1.msra.mxu0 %v3233
    %4327 = vmatprep.subr.mxu0 %v3237
    %4328 = vmatpush1.msra.mxu0 %v3236
    %4329 = vmatprep.subr.mxu0 %v3240
    %4330 = vmatpush1.msra.mxu0 %v3239
    %4331 = vmatprep.subr.mxu0 %v3243
    %4332 = vmatpush1.msra.mxu0 %v3242
    %4333 = vmatprep.subr.mxu0 %v3246
    %4334 = vmatpush1.msra.mxu0 %v3245
    %4335 = vmatprep.subr.mxu0 %v3249
    %4336 = vmatpush1.msra.mxu0 %v3248
    %4337 = vmatprep.subr.mxu0 %v3252
    %4338 = vmatpush1.msra.mxu0 %v3251
    %4339 = vmatprep.subr.mxu0 %v3255
    %4340 = vmatpush1.msra.mxu0 %v3254
    %4341 = vmatprep.subr.mxu0 0.0
    %4342 = vmatpush1.msra.mxu0 0.0
    %4343 = vmatprep.subr.mxu0 0.0
    %4344 = vmatpush1.msra.mxu0 0.0
    %4345 = vmatprep.subr.mxu0 0.0
    %4346 = vmatpush1.msra.mxu0 0.0
    %4347 = vmatprep.subr.mxu0 0.0
    %4348 = vmatpush1.msra.mxu0 0.0
    %4349 = vmatprep.subr.mxu0 0.0
    %4350 = vmatpush1.msra.mxu0 0.0
    %4351 = vmatprep.subr.mxu0 0.0
    %4352 = vmatpush1.msra.mxu0 0.0
    %4353 = vmatprep.subr.mxu0 0.0
    %4354 = vmatpush1.msra.mxu0 0.0
    %4355 = vmatprep.subr.mxu0 0.0
    %4356 = vmatpush1.msra.mxu0 0.0
    %4357 = vmatprep.subr.mxu0 0.0
    %4358 = vmatpush1.msra.mxu0 0.0
    %4359 = vmatprep.subr.mxu0 0.0
    %4360 = vmatpush1.msra.mxu0 0.0
    %4361 = vmatprep.subr.mxu0 0.0
    %4362 = vmatpush1.msra.mxu0 0.0
    %4363 = vmatprep.subr.mxu0 0.0
    %4364 = vmatpush1.msra.mxu0 0.0
    %4365 = vmatprep.subr.mxu0 0.0
    %4366 = vmatpush1.msra.mxu0 0.0
    %4367 = vmatprep.subr.mxu0 0.0
    %4368 = vmatpush1.msra.mxu0 0.0
    %4369 = vmatprep.subr.mxu0 0.0
    %4370 = vmatpush1.msra.mxu0 0.0
    %4371 = vmatprep.subr.mxu0 0.0
    %4372 = vmatpush1.msra.mxu0 0.0
    %4373 = vmatprep.subr.mxu0 0.0
    %4374 = vmatpush1.msra.mxu0 0.0
    %4375 = vmatprep.subr.mxu0 0.0
    %4376 = vmatpush1.msra.mxu0 0.0
    %4377 = vmatprep.subr.mxu0 0.0
    %4378 = vmatpush1.msra.mxu0 0.0
    %4379 = vmatprep.subr.mxu0 0.0
    %4380 = vmatpush1.msra.mxu0 0.0
    %4381 = vmatprep.subr.mxu0 0.0
    %4382 = vmatpush1.msra.mxu0 0.0
    %4383 = vmatprep.subr.mxu0 0.0
    %4384 = vmatpush1.msra.mxu0 0.0
    %4385 = vmatprep.subr.mxu0 0.0
    %4386 = vmatpush1.msra.mxu0 0.0
    %4387 = vmatprep.subr.mxu0 0.0
    %4388 = vmatpush1.msra.mxu0 0.0
    %4389 = vmatprep.mubr.f32.mxu0 0.0
    %4390 = vmatmul.mubr.f32.gmra.mrb[0].mxu0 %v4323
    %v4391 = vpop.f32.mrb[0].mxu0
    %v4392 = vadd.f32 %v3261, %v4391
    %v4393 = vpop.f32.mrb[0].mxu0
    %v4394 = vadd.f32 %v3265, %v4393
    %4395 = vdwg.mxu0
    %4396 = vmatprep.subr.mxu0 0.0
    %4397 = vmatpush1.msra.mxu0 %v3235
    %4398 = vmatprep.subr.mxu0 0.0
    %4399 = vmatpush1.msra.mxu0 %v3238
    %4400 = vmatprep.subr.mxu0 0.0
    %4401 = vmatpush1.msra.mxu0 %v3241
    %4402 = vmatprep.subr.mxu0 0.0
    %4403 = vmatpush1.msra.mxu0 %v3244
    %4404 = vmatprep.subr.mxu0 0.0
    %4405 = vmatpush1.msra.mxu0 %v3247
    %4406 = vmatprep.subr.mxu0 0.0
    %4407 = vmatpush1.msra.mxu0 %v3250
    %4408 = vmatprep.subr.mxu0 0.0
    %4409 = vmatpush1.msra.mxu0 %v3253
    %4410 = vmatprep.subr.mxu0 0.0
    %4411 = vmatpush1.msra.mxu0 %v3256
    %4412 = vmatprep.subr.mxu0 0.0
    %4413 = vmatpush1.msra.mxu0 0.0
    %4414 = vmatprep.subr.mxu0 0.0
    %4415 = vmatpush1.msra.mxu0 0.0
    %4416 = vmatprep.subr.mxu0 0.0
    %4417 = vmatpush1.msra.mxu0 0.0
    %4418 = vmatprep.subr.mxu0 0.0
    %4419 = vmatpush1.msra.mxu0 0.0
    %4420 = vmatprep.subr.mxu0 0.0
    %4421 = vmatpush1.msra.mxu0 0.0
    %4422 = vmatprep.subr.mxu0 0.0
    %4423 = vmatpush1.msra.mxu0 0.0
    %4424 = vmatprep.subr.mxu0 0.0
    %4425 = vmatpush1.msra.mxu0 0.0
    %4426 = vmatprep.subr.mxu0 0.0
    %4427 = vmatpush1.msra.mxu0 0.0
    %4428 = vmatprep.subr.mxu0 0.0
    %4429 = vmatpush1.msra.mxu0 0.0
    %4430 = vmatprep.subr.mxu0 0.0
    %4431 = vmatpush1.msra.mxu0 0.0
    %4432 = vmatprep.subr.mxu0 0.0
    %4433 = vmatpush1.msra.mxu0 0.0
    %4434 = vmatprep.subr.mxu0 0.0
    %4435 = vmatpush1.msra.mxu0 0.0
    %4436 = vmatprep.subr.mxu0 0.0
    %4437 = vmatpush1.msra.mxu0 0.0
    %4438 = vmatprep.subr.mxu0 0.0
    %4439 = vmatpush1.msra.mxu0 0.0
    %4440 = vmatprep.subr.mxu0 0.0
    %4441 = vmatpush1.msra.mxu0 0.0
    %4442 = vmatprep.subr.mxu0 0.0
    %4443 = vmatpush1.msra.mxu0 0.0
    %4444 = vmatprep.subr.mxu0 0.0
    %4445 = vmatpush1.msra.mxu0 0.0
    %4446 = vmatprep.subr.mxu0 0.0
    %4447 = vmatpush1.msra.mxu0 0.0
    %4448 = vmatprep.subr.mxu0 0.0
    %4449 = vmatpush1.msra.mxu0 0.0
    %4450 = vmatprep.subr.mxu0 0.0
    %4451 = vmatpush1.msra.mxu0 0.0
    %4452 = vmatprep.subr.mxu0 0.0
    %4453 = vmatpush1.msra.mxu0 0.0
    %4454 = vmatprep.subr.mxu0 0.0
    %4455 = vmatpush1.msra.mxu0 0.0
    %4456 = vmatprep.subr.mxu0 0.0
    %4457 = vmatpush1.msra.mxu0 0.0
    %4458 = vmatprep.subr.mxu0 0.0
    %4459 = vmatpush1.msra.mxu0 0.0
    %4460 = vmatprep.mubr.f32.mxu0 0.0
    %4461 = vmatmul.mubr.f32.gmra.mrb[0].mxu0 %v4323
    %v4462 = vpop.f32.mrb[0].mxu0
    %v4463 = vadd.f32 %v3269, %v4462
    %v4464 = vpop.f32.mrb[0].mxu0
    %4465 = vdwg.mxu0
    %v4467 = vrot.slane %v4392, 4
    %v4469 = vadd.f32 %v3230, %v4467
    %v4470 = vxor.u32 %v4469, 2147483648
    %v4471 = vmul.f32 %v4470, 1.442695
    %v4472 = vpow.pop %v4471
    %v4473 = vadd.f32 %v4472, 1.0
    %v4474 = vrcp.pop %v4473
    %v4475 = vmul.f32 1.0, %v4474
    %v4477 = vrot.slane %v4394, 4
    %v4479 = vadd.f32 %v3231, %v4477
    %v4480 = vxor.u32 %v4479, 2147483648
    %v4481 = vmul.f32 %v4480, 1.442695
    %v4482 = vpow.pop %v4481
    %v4483 = vadd.f32 %v4482, 1.0
    %v4484 = vrcp.pop %v4483
    %v4485 = vmul.f32 1.0, %v4484
    %v4487 = vrot.slane %v4463, 4
    %v4489 = vmul.f32 %v4475, %v4487
    %v4490 = vadd.f32 %v3232, %v4489
    %v4491 = vtanh.pop %v4490
    %v4492 = vsub.f32 1.0, %v4485
    %v4493 = vmul.f32 %v4492, %v4491
    %v4494 = vrot.slane %v4318, 6
    %v4496 = vmul.f32 %v4485, %v4494
    %v4497 = vadd.f32 %v4493, %v4496
    %v4499 = vrot.slane %v4497, 4
    %v4500 = vsel %vm3275, %v4499, 0
    %4502 = vmatprep.subr.mxu0 %v3234
    %4503 = vmatpush1.msra.mxu0 %v3233
    %4504 = vmatprep.subr.mxu0 %v3237
    %4505 = vmatpush1.msra.mxu0 %v3236
    %4506 = vmatprep.subr.mxu0 %v3240
    %4507 = vmatpush1.msra.mxu0 %v3239
    %4508 = vmatprep.subr.mxu0 %v3243
    %4509 = vmatpush1.msra.mxu0 %v3242
    %4510 = vmatprep.subr.mxu0 %v3246
    %4511 = vmatpush1.msra.mxu0 %v3245
    %4512 = vmatprep.subr.mxu0 %v3249
    %4513 = vmatpush1.msra.mxu0 %v3248
    %4514 = vmatprep.subr.mxu0 %v3252
    %4515 = vmatpush1.msra.mxu0 %v3251
    %4516 = vmatprep.subr.mxu0 %v3255
    %4517 = vmatpush1.msra.mxu0 %v3254
    %4518 = vmatprep.subr.mxu0 0.0
    %4519 = vmatpush1.msra.mxu0 0.0
    %4520 = vmatprep.subr.mxu0 0.0
    %4521 = vmatpush1.msra.mxu0 0.0
    %4522 = vmatprep.subr.mxu0 0.0
    %4523 = vmatpush1.msra.mxu0 0.0
    %4524 = vmatprep.subr.mxu0 0.0
    %4525 = vmatpush1.msra.mxu0 0.0
    %4526 = vmatprep.subr.mxu0 0.0
    %4527 = vmatpush1.msra.mxu0 0.0
    %4528 = vmatprep.subr.mxu0 0.0
    %4529 = vmatpush1.msra.mxu0 0.0
    %4530 = vmatprep.subr.mxu0 0.0
    %4531 = vmatpush1.msra.mxu0 0.0
    %4532 = vmatprep.subr.mxu0 0.0
    %4533 = vmatpush1.msra.mxu0 0.0
    %4534 = vmatprep.subr.mxu0 0.0
    %4535 = vmatpush1.msra.mxu0 0.0
    %4536 = vmatprep.subr.mxu0 0.0
    %4537 = vmatpush1.msra.mxu0 0.0
    %4538 = vmatprep.subr.mxu0 0.0
    %4539 = vmatpush1.msra.mxu0 0.0
    %4540 = vmatprep.subr.mxu0 0.0
    %4541 = vmatpush1.msra.mxu0 0.0
    %4542 = vmatprep.subr.mxu0 0.0
    %4543 = vmatpush1.msra.mxu0 0.0
    %4544 = vmatprep.subr.mxu0 0.0
    %4545 = vmatpush1.msra.mxu0 0.0
    %4546 = vmatprep.subr.mxu0 0.0
    %4547 = vmatpush1.msra.mxu0 0.0
    %4548 = vmatprep.subr.mxu0 0.0
    %4549 = vmatpush1.msra.mxu0 0.0
    %4550 = vmatprep.subr.mxu0 0.0
    %4551 = vmatpush1.msra.mxu0 0.0
    %4552 = vmatprep.subr.mxu0 0.0
    %4553 = vmatpush1.msra.mxu0 0.0
    %4554 = vmatprep.subr.mxu0 0.0
    %4555 = vmatpush1.msra.mxu0 0.0
    %4556 = vmatprep.subr.mxu0 0.0
    %4557 = vmatpush1.msra.mxu0 0.0
    %4558 = vmatprep.subr.mxu0 0.0
    %4559 = vmatpush1.msra.mxu0 0.0
    %4560 = vmatprep.subr.mxu0 0.0
    %4561 = vmatpush1.msra.mxu0 0.0
    %4562 = vmatprep.subr.mxu0 0.0
    %4563 = vmatpush1.msra.mxu0 0.0
    %4564 = vmatprep.subr.mxu0 0.0
    %4565 = vmatpush1.msra.mxu0 0.0
    %4566 = vmatprep.mubr.f32.mxu0 0.0
    %4567 = vmatmul.mubr.f32.gmra.mrb[0].mxu0 %v4500
    %v4568 = vpop.f32.mrb[0].mxu0
    %v4569 = vadd.f32 %v3261, %v4568
    %v4570 = vpop.f32.mrb[0].mxu0
    %v4571 = vadd.f32 %v3265, %v4570
    %4572 = vdwg.mxu0
    %4573 = vmatprep.subr.mxu0 0.0
    %4574 = vmatpush1.msra.mxu0 %v3235
    %4575 = vmatprep.subr.mxu0 0.0
    %4576 = vmatpush1.msra.mxu0 %v3238
    %4577 = vmatprep.subr.mxu0 0.0
    %4578 = vmatpush1.msra.mxu0 %v3241
    %4579 = vmatprep.subr.mxu0 0.0
    %4580 = vmatpush1.msra.mxu0 %v3244
    %4581 = vmatprep.subr.mxu0 0.0
    %4582 = vmatpush1.msra.mxu0 %v3247
    %4583 = vmatprep.subr.mxu0 0.0
    %4584 = vmatpush1.msra.mxu0 %v3250
    %4585 = vmatprep.subr.mxu0 0.0
    %4586 = vmatpush1.msra.mxu0 %v3253
    %4587 = vmatprep.subr.mxu0 0.0
    %4588 = vmatpush1.msra.mxu0 %v3256
    %4589 = vmatprep.subr.mxu0 0.0
    %4590 = vmatpush1.msra.mxu0 0.0
    %4591 = vmatprep.subr.mxu0 0.0
    %4592 = vmatpush1.msra.mxu0 0.0
    %4593 = vmatprep.subr.mxu0 0.0
    %4594 = vmatpush1.msra.mxu0 0.0
    %4595 = vmatprep.subr.mxu0 0.0
    %4596 = vmatpush1.msra.mxu0 0.0
    %4597 = vmatprep.subr.mxu0 0.0
    %4598 = vmatpush1.msra.mxu0 0.0
    %4599 = vmatprep.subr.mxu0 0.0
    %4600 = vmatpush1.msra.mxu0 0.0
    %4601 = vmatprep.subr.mxu0 0.0
    %4602 = vmatpush1.msra.mxu0 0.0
    %4603 = vmatprep.subr.mxu0 0.0
    %4604 = vmatpush1.msra.mxu0 0.0
    %4605 = vmatprep.subr.mxu0 0.0
    %4606 = vmatpush1.msra.mxu0 0.0
    %4607 = vmatprep.subr.mxu0 0.0
    %4608 = vmatpush1.msra.mxu0 0.0
    %4609 = vmatprep.subr.mxu0 0.0
    %4610 = vmatpush1.msra.mxu0 0.0
    %4611 = vmatprep.subr.mxu0 0.0
    %4612 = vmatpush1.msra.mxu0 0.0
    %4613 = vmatprep.subr.mxu0 0.0
    %4614 = vmatpush1.msra.mxu0 0.0
    %4615 = vmatprep.subr.mxu0 0.0
    %4616 = vmatpush1.msra.mxu0 0.0
    %4617 = vmatprep.subr.mxu0 0.0
    %4618 = vmatpush1.msra.mxu0 0.0
    %4619 = vmatprep.subr.mxu0 0.0
    %4620 = vmatpush1.msra.mxu0 0.0
    %4621 = vmatprep.subr.mxu0 0.0
    %4622 = vmatpush1.msra.mxu0 0.0
    %4623 = vmatprep.subr.mxu0 0.0
    %4624 = vmatpush1.msra.mxu0 0.0
    %4625 = vmatprep.subr.mxu0 0.0
    %4626 = vmatpush1.msra.mxu0 0.0
    %4627 = vmatprep.subr.mxu0 0.0
    %4628 = vmatpush1.msra.mxu0 0.0
    %4629 = vmatprep.subr.mxu0 0.0
    %4630 = vmatpush1.msra.mxu0 0.0
    %4631 = vmatprep.subr.mxu0 0.0
    %4632 = vmatpush1.msra.mxu0 0.0
    %4633 = vmatprep.subr.mxu0 0.0
    %4634 = vmatpush1.msra.mxu0 0.0
    %4635 = vmatprep.subr.mxu0 0.0
    %4636 = vmatpush1.msra.mxu0 0.0
    %4637 = vmatprep.mubr.f32.mxu0 0.0
    %4638 = vmatmul.mubr.f32.gmra.mrb[0].mxu0 %v4500
    %v4639 = vpop.f32.mrb[0].mxu0
    %v4640 = vadd.f32 %v3269, %v4639
    %v4641 = vpop.f32.mrb[0].mxu0
    %4642 = vdwg.mxu0
    %v4644 = vrot.slane %v4569, 2
    %v4646 = vadd.f32 %v3230, %v4644
    %v4647 = vxor.u32 %v4646, 2147483648
    %v4648 = vmul.f32 %v4647, 1.442695
    %v4649 = vpow.pop %v4648
    %v4650 = vadd.f32 %v4649, 1.0
    %v4651 = vrcp.pop %v4650
    %v4652 = vmul.f32 1.0, %v4651
    %v4654 = vrot.slane %v4571, 2
    %v4656 = vadd.f32 %v3231, %v4654
    %v4657 = vxor.u32 %v4656, 2147483648
    %v4658 = vmul.f32 %v4657, 1.442695
    %v4659 = vpow.pop %v4658
    %v4660 = vadd.f32 %v4659, 1.0
    %v4661 = vrcp.pop %v4660
    %v4662 = vmul.f32 1.0, %v4661
    %v4664 = vrot.slane %v4640, 2
    %v4666 = vmul.f32 %v4652, %v4664
    %v4667 = vadd.f32 %v3232, %v4666
    %v4668 = vtanh.pop %v4667
    %v4669 = vsub.f32 1.0, %v4662
    %v4670 = vmul.f32 %v4669, %v4668
    %v4671 = vrot.slane %v4497, 6
    %v4673 = vmul.f32 %v4662, %v4671
    %v4674 = vadd.f32 %v4670, %v4673
    %v4676 = vrot.slane %v4674, 2
    %v4678 = vadd.f32 %v4497, %v4676
    %s4679 = smul.u32 %s3215, 8
    %v4681 = vrot.slane %v3976, 2
    %v4684 = vrot.slane %v4322, 4
    %v4687 = vrot.slane %v4678, 6
    %vm4689 = vcmask 1041408
    %v4690 = vsel %vm4689, %v3620, %v4681
    %vm4691 = vcmask 1043456
    %v4692 = vsel %vm4691, %v4690, %v4684
    %vm4693 = vcmask 1045504
    %v4694 = vsel %vm4693, %v4692, %v4687
    %s4695 = scalar_lea.vmem %s10, %s4679
    %4696 = vst [vmem:[%s4695] sm:$0xff] %v4694
  $region42: #{gru_block_forward.1} parent=0 // loop_footer
    %s3219 = sadd.s32 1, %s3215
  $region43: #{gru_block_forward.1} parent=0 // loop_footer_branch
    %3214 = sbr.rel target = $region39
  $region44: #{gru_block_forward.1} parent=0 // loop_exit
    _
  // Predicated region
  $region45: #{gru_block_forward.1} parent=0 // pred_check
    _
  $region46: #{gru_block_forward.1} parent=0 // pred_check_branch
    %4698 = sbr.rel (0) target = $region48
  $region47: #{gru_block_forward.1} parent=0 // pred_region
    _
  $region48: #{gru_block_forward.1} parent=0 // pred_fallthru
    _
  // Predicated region
  $region49: #{gru_block_forward.1} parent=0 // pred_check
    _
  $region50: #{gru_block_forward.1} parent=0 // pred_check_branch
    %4700 = sbr.rel (0) target = $region52
  $region51: #{gru_block_forward.1} parent=0 // pred_region
    _
  $region52: #{gru_block_forward.1} parent=0 // pred_fallthru
    _
  // Predicated region
  $region53: #{gru_block_forward.1} parent=0 // pred_check
    _
  $region54: #{gru_block_forward.1} parent=0 // pred_check_branch
    %4702 = sbr.rel (0) target = $region56
  $region55: #{gru_block_forward.1} parent=0 // pred_region
    _
  $region56: #{gru_block_forward.1} parent=0 // pred_fallthru
    _
  // Predicated region
  $region57: #{gru_block_forward.1} parent=0 // pred_check
    _
  $region58: #{gru_block_forward.1} parent=0 // pred_check_branch
    %4704 = sbr.rel (0) target = $region60
  $region59: #{gru_block_forward.1} parent=0 // pred_region
    _
  $region60: #{gru_block_forward.1} parent=0 // pred_fallthru
    _

</llo_original>
